<compile_context>
chip_gen: v5e
topology: v5e:2x2
jax: 0.10.0
libtpu: 0.0.40
codegen_flags: <defaults>
</compile_context>

<pallas_src>
import functools

import jax
import jax.numpy as jnp
import numpy as np
from jax.experimental import pallas as pl
from jax.experimental.pallas import tpu as pltpu


# ----------------------------------------------------------------------------
# The single fused Pallas kernel
# ----------------------------------------------------------------------------
def _fused_kernel(x_ref,
                  stem_R, stem_M, stem_b,
                  c1_W, c1_b,
                  c2_R, c2_M, c2_b,
                  sc_R, sc_M, sc_b,
                  c3_W, c3_b,
                  pj_W, pj_b,
                  s1_sc, s1_sh, s1_W1, s1_b1, s1_W2, s1_b2,
                  d2_R, d2_M, d2_b,
                  s2_sc, s2_sh, s2_W1, s2_b1, s2_W2, s2_b2,
                  d3_R, d3_M, d3_b,
                  s3_sc, s3_sh, s3_W1, s3_b1, s3_W2, s3_b2,
                  cl_W, cl_b,
                  o_ref):
    bf16 = jnp.bfloat16
    f32 = jnp.float32

    def mm(a, w):
        # f32 activation -> bf16 MXU operand, f32 accumulation.
        return jnp.dot(a.astype(bf16), w, preferred_element_type=f32)

    def conv3x3_s2(a, r_ref, m_ref, b_ref):
        """3x3 stride-2 pad-1 conv (+folded BN, +ReLU) on an (H, W*Cin) slab.

        R_ki (Ho, Hin) selects/zero-pads input rows; M_ki (Win*Cin, Wo*Cout)
        is the column-selection x weight fold (sum over kj).  6 dots total.
        """
        ab = a.astype(bf16)
        acc = b_ref[...]                                     # (1, Wo*Cout)
        for ki in range(3):
            z = jnp.dot(r_ref[ki], ab, preferred_element_type=f32)
            acc = acc + mm(z, m_ref[ki])
        return jnp.maximum(acc, 0.0)

    def mlp_block(a, sc, sh, w1, b1, w2, b2):
        """EfficientViM stage body: BN affine -> fc1+ReLU -> fc2 -> +residual."""
        h = a * sc[...] + sh[...]
        h1 = jnp.maximum(mm(h, w1[...]) + b1[...], 0.0)
        return mm(h1, w2[...]) + b2[...] + a

    # ---- input slab for this batch element: (H, W*Cin) ----
    a0 = x_ref[0]                                            # (32, 96)

    # ---- ResNet stem: fused 3x3 s2 conv + BN + ReLU ----
    x0 = conv3x3_s2(a0, stem_R, stem_M, stem_b)              # (16, 16*16)

    # ---- bottleneck residual block ----
    y = jnp.maximum(mm(x0, c1_W[...]) + c1_b[...], 0.0)      # 1x1 16->8  (16, 16*8)
    y = conv3x3_s2(y, c2_R, c2_M, c2_b)                      # 3x3 s2 8->8 (8, 8*8)
    sc = mm(jnp.dot(sc_R[...], x0.astype(bf16),              # 1x1 s2 16->32 shortcut
                    preferred_element_type=f32), sc_M[...]) + sc_b[...]   # (8, 8*32)
    x1 = jnp.maximum(mm(y, c3_W[...]) + c3_b[...] + sc, 0.0)  # (8, 8*32)

    # ---- projection 1x1 conv (resnet channels -> EfficientViM stem dim) ----
    p = mm(x1, pj_W[...]) + pj_b[...]                        # (8, 8*16)

    # ---- EfficientViM stages 1-3 ----
    s1 = mlp_block(p, s1_sc, s1_sh, s1_W1, s1_b1, s1_W2, s1_b2)      # (8, 128)
    t2 = conv3x3_s2(s1, d2_R, d2_M, d2_b)                            # (4, 4*24)
    s2 = mlp_block(t2, s2_sc, s2_sh, s2_W1, s2_b1, s2_W2, s2_b2)     # (4, 96)
    t3 = conv3x3_s2(s2, d3_R, d3_M, d3_b)                            # (2, 2*32)
    s3 = mlp_block(t3, s3_sc, s3_sh, s3_W1, s3_b1, s3_W2, s3_b2)     # (2, 64)

    # ---- final norm + global mean pool + classifier (folded into cl_W/cl_b) ----
    t = mm(s3, cl_W[...])                                    # (2, 128)
    row = t[0:1, :] + t[1:2, :] + cl_b[...]                  # (1, 128) logits
    o_ref[0] = jnp.zeros(o_ref.shape[1:], f32) + row         # lane-dense store


# ----------------------------------------------------------------------------
# Wrapper: one pallas_call for the whole network
# ----------------------------------------------------------------------------
def fused_model_forward(x_nchw, p):
    N, C, H, W = x_nchw.shape
    # Only input glue: NCHW -> (N, H, W*C) channels-fastest-on-lanes slab.
    x = jnp.transpose(x_nchw, (0, 2, 3, 1)).reshape(N, H, W * C).astype(jnp.float32)
    weights = p["weights"]

    def _wspec(a):
        r = a.ndim
        return pl.BlockSpec(a.shape, lambda n, _r=r: (0,) * _r)   # grid-invariant

    in_specs = [pl.BlockSpec((1, H, W * C), lambda n: (n, 0, 0))]
    in_specs += [_wspec(a) for a in weights]

    out = pl.pallas_call(
        _fused_kernel,
        out_shape=jax.ShapeDtypeStruct((N, 8, p["nc_pad"]), jnp.float32),
        grid=(N,),
        in_specs=in_specs,
        out_specs=pl.BlockSpec((1, 8, p["nc_pad"]), lambda n: (n, 0, 0)),
        compiler_params=pltpu.CompilerParams(
            dimension_semantics=("parallel",)),     # v7x: one sample per core
    )(x, *weights)
    # Only output glue: drop the broadcast rows / lane padding.
    return out[:, 0, :p["num_classes"]]


# ----------------------------------------------------------------------------
# Parameter init (synthetic, deterministic)
# ----------------------------------------------------------------------------
def init_params(key, num_classes=102):
    ks = iter(jax.random.split(key, 100))

    def conv(kh, kw, cin, cout):
        fan = float(kh * kw * cin)
        return {
            "w": jax.random.normal(next(ks), (kh, kw, cin, cout), jnp.float32) / jnp.sqrt(fan),
            "b": jnp.zeros((cout,), jnp.float32),
        }

    def bn(c):
        return {
            "gamma": 1.0 + 0.1 * jax.random.normal(next(ks), (c,), jnp.float32),
            "beta": 0.1 * jax.random.normal(next(ks), (c,), jnp.float32),
            "mean": 0.1 * jax.random.normal(next(ks), (c,), jnp.float32),
            "var": jnp.abs(1.0 + 0.1 * jax.random.normal(next(ks), (c,), jnp.float32)),
        }

    def linear(cin, cout):
        return {
            "w": jax.random.normal(next(ks), (cin, cout), jnp.float32) / jnp.sqrt(float(cin)),
            "b": jnp.zeros((cout,), jnp.float32),
        }

    C_RES, D1, D2, D3 = 32, 16, 24, 32  # scaled-down channel plan
    return {
        "stem": {"conv": conv(3, 3, 3, 16), "bn": bn(16)},
        "block": {
            "conv1": conv(1, 1, 16, 8), "bn1": bn(8),
            "conv2": conv(3, 3, 8, 8), "bn2": bn(8),
            "conv3": conv(1, 1, 8, C_RES), "bn3": bn(C_RES),
            "down": conv(1, 1, 16, C_RES), "bn_down": bn(C_RES),
        },
        "projection": conv(1, 1, C_RES, D1),
        "stage1": {"bn": bn(D1), "fc1": linear(D1, 2 * D1), "fc2": linear(2 * D1, D1)},
        "stage2": {"down": conv(3, 3, D1, D2), "bn_down": bn(D2),
                   "bn": bn(D2), "fc1": linear(D2, 2 * D2), "fc2": linear(2 * D2, D2)},
        "stage3": {"down": conv(3, 3, D2, D3), "bn_down": bn(D3),
                   "bn": bn(D3), "fc1": linear(D3, 2 * D3), "fc2": linear(2 * D3, D3)},
        "norm": bn(D3),
        "classifier": linear(D3, num_classes),
    }


# ----------------------------------------------------------------------------
# Offline parameter preparation: BN folding + selection/block-diag matrices
# ----------------------------------------------------------------------------
def _bn_affine_np(bn, eps=1e-5):
    g = np.asarray(bn["gamma"], np.float32)
    b = np.asarray(bn["beta"], np.float32)
    m = np.asarray(bn["mean"], np.float32)
    v = np.asarray(bn["var"], np.float32)
    s = g / np.sqrt(v + eps)
    return s, b - m * s


def _fold_conv_bn(conv, bn):
    w = np.asarray(conv["w"], np.float32)      # (kh, kw, cin, cout)
    b = np.asarray(conv["b"], np.float32)
    if bn is not None:
        s, sh = _bn_affine_np(bn)
        w = w * s
        b = b * s + sh
    return w, b


def _conv3x3s2_mats(w, b, Hin, Win):
    """3x3 stride-2 pad-1 conv -> (R (3,Ho,Hin), M (3,Win*Cin,Wo*Cout), bias)."""
    cin, cout = w.shape[2], w.shape[3]
    Ho, Wo = Hin // 2, Win // 2
    R = np.zeros((3, Ho, Hin), np.float32)
    for ki in range(3):
        for a in range(Ho):
            r = 2 * a + ki - 1
            if 0 <= r < Hin:
                R[ki, a, r] = 1.0
    M = np.zeros((3, Win * cin, Wo * cout), np.float32)
    for ki in range(3):
        for kj in range(3):
            for bb in range(Wo):
                wc = 2 * bb + kj - 1
                if 0 <= wc < Win:
                    M[ki, wc * cin:(wc + 1) * cin,
                      bb * cout:(bb + 1) * cout] += w[ki, kj]
    bt = np.tile(np.asarray(b, np.float32), Wo).reshape(1, Wo * cout)
    return R, M, bt


def _blockdiag_1x1(w, b, W):
    """1x1 conv / per-pixel linear on an (H, W*Cin) slab -> block-diag matrix."""
    w2 = np.asarray(w, np.float32).reshape(w.shape[-2], w.shape[-1])
    cin, cout = w2.shape
    BD = np.zeros((W * cin, W * cout), np.float32)
    for ww in range(W):
        BD[ww * cin:(ww + 1) * cin, ww * cout:(ww + 1) * cout] = w2
    bt = np.tile(np.asarray(b, np.float32), W).reshape(1, W * cout)
    return BD, bt


def _conv1x1s2_mats(w, b, Hin, Win):
    """1x1 stride-2 conv (shortcut): even-row selector + even-col/weight fold."""
    w2 = np.asarray(w, np.float32).reshape(w.shape[-2], w.shape[-1])
    cin, cout = w2.shape
    Ho, Wo = Hin // 2, Win // 2
    R = np.zeros((Ho, Hin), np.float32)
    for a in range(Ho):
        R[a, 2 * a] = 1.0
    M = np.zeros((Win * cin, Wo * cout), np.float32)
    for bb in range(Wo):
        M[2 * bb * cin:(2 * bb + 1) * cin, bb * cout:(bb + 1) * cout] = w2
    bt = np.tile(np.asarray(b, np.float32), Wo).reshape(1, Wo * cout)
    return R, M, bt


def _stage_mats(sp, W, B, F):
    """Stage = BN affine -> fc1+ReLU -> fc2 -> residual, on a W-wide slab."""
    s, sh = _bn_affine_np(sp["bn"])
    scale_t = np.tile(s, W).reshape(1, -1)
    shift_t = np.tile(sh, W).reshape(1, -1)
    BD1, b1t = _blockdiag_1x1(sp["fc1"]["w"], sp["fc1"]["b"], W)
    BD2, b2t = _blockdiag_1x1(sp["fc2"]["w"], sp["fc2"]["b"], W)
    return [F(scale_t), F(shift_t), B(BD1), F(b1t), B(BD2), F(b2t)]


def prepare_params(p, num_classes, in_hw=(32, 32)):
    """Fold BN, build selection / block-diagonal matrices, cast weights bf16."""
    H, W = in_hw
    assert H % 16 == 0 and W % 16 == 0, "need 4 stride-2 halvings"
    assert num_classes <= 128

    def B(a):
        return jnp.asarray(a, jnp.bfloat16)

    def F(a):
        return jnp.asarray(a, jnp.float32)

    weights = []

    # stem: 3x3 s2 conv 3->16 + BN
    w, b = _fold_conv_bn(p["stem"]["conv"], p["stem"]["bn"])
    R, M, bt = _conv3x3s2_mats(w, b, H, W)
    weights += [B(R), B(M), F(bt)]
    H1, W1 = H // 2, W // 2

    blk = p["block"]
    # bottleneck conv1: 1x1 16->8 + BN
    w, b = _fold_conv_bn(blk["conv1"], blk["bn1"])
    BD, bt = _blockdiag_1x1(w, b, W1)
    weights += [B(BD), F(bt)]
    # bottleneck conv2: 3x3 s2 8->8 + BN
    w, b = _fold_conv_bn(blk["conv2"], blk["bn2"])
    R, M, bt = _conv3x3s2_mats(w, b, H1, W1)
    weights += [B(R), B(M), F(bt)]
    H2, W2 = H1 // 2, W1 // 2
    # shortcut: 1x1 s2 16->32 + BN
    w, b = _fold_conv_bn(blk["down"], blk["bn_down"])
    R, M, bt = _conv1x1s2_mats(w, b, H1, W1)
    weights += [B(R), B(M), F(bt)]
    # bottleneck conv3: 1x1 8->32 + BN
    w, b = _fold_conv_bn(blk["conv3"], blk["bn3"])
    BD, bt = _blockdiag_1x1(w, b, W2)
    weights += [B(BD), F(bt)]

    # projection: 1x1 conv (no BN)
    w, b = _fold_conv_bn(p["projection"], None)
    BD, bt = _blockdiag_1x1(w, b, W2)
    weights += [B(BD), F(bt)]

    # stage 1 (spatial W2 x W2)
    weights += _stage_mats(p["stage1"], W2, B, F)
    # stage 2 downsample + block
    w, b = _fold_conv_bn(p["stage2"]["down"], p["stage2"]["bn_down"])
    R, M, bt = _conv3x3s2_mats(w, b, H2, W2)
    weights += [B(R), B(M), F(bt)]
    H3, W3 = H2 // 2, W2 // 2
    weights += _stage_mats(p["stage2"], W3, B, F)
    # stage 3 downsample + block
    w, b = _fold_conv_bn(p["stage3"]["down"], p["stage3"]["bn_down"])
    R, M, bt = _conv3x3s2_mats(w, b, H3, W3)
    weights += [B(R), B(M), F(bt)]
    H4, W4 = H3 // 2, W3 // 2
    weights += _stage_mats(p["stage3"], W4, B, F)

    # final norm + mean pool + classifier folded into one matrix, padded to 128
    ns, nsh = _bn_affine_np(p["norm"])
    Wc = np.asarray(p["classifier"]["w"], np.float32)    # (C3, num_classes)
    bc = np.asarray(p["classifier"]["b"], np.float32)
    C3 = Wc.shape[0]
    NCP = 128
    Wc_pad = np.zeros((C3, NCP), np.float32)
    Wc_pad[:, :num_classes] = Wc
    bc_pad = np.zeros((NCP,), np.float32)
    bc_pad[:num_classes] = bc
    Wfold = (ns[:, None] * Wc_pad) / float(H4 * W4)       # norm scale + 1/(H*W)
    WcT = np.zeros((W4 * C3, NCP), np.float32)
    for wv in range(W4):
        WcT[wv * C3:(wv + 1) * C3] = Wfold
    bias_f = (nsh @ Wc_pad + bc_pad).reshape(1, NCP)      # norm shift folded
    weights += [B(WcT), F(bias_f)]

    return {"weights": weights, "num_classes": num_classes, "nc_pad": NCP}


# ----------------------------------------------------------------------------
# Main
# ----------------------------------------------------------------------------
# TODO(synk): full torchvision ResNet-50 (pretrained, maxpool, 16 bottlenecks)
# is not reproduced; a representative stem + one bottleneck residual block is kept.
# TODO(synk): the HSM-SSD state-space token mixer of EfficientViM blocks is not
# reproduced (EfficientViM_M3 source unavailable); BN -> MLP residual block used.
if __name__ == "__main__":
    num_classes = 102
    x = jax.random.normal(jax.random.PRNGKey(0), (2, 3, 32, 32), jnp.float32)  # NCHW
    params = init_params(jax.random.PRNGKey(42), num_classes=num_classes)
    prep = prepare_params(params, num_classes=num_classes, in_hw=(32, 32))

    fwd = jax.jit(functools.partial(fused_model_forward, p=prep))
    out = fwd(x)
    jax.block_until_ready(out)
    assert out.shape == (2, num_classes), out.shape
    assert bool(jnp.all(jnp.isfinite(out)))
    print("KERNEL_OK")
</pallas_src>

<mosaic_0001>
module attributes {stable_mosaic.version = 11 : i64} {
  func.func @_fused_kernel(%arg0: i32, %arg1: memref<1x32x96xf32, #tpu.memory_space<vmem>>, %arg2: memref<3x16x32xbf16, #tpu.memory_space<vmem>>, %arg3: memref<3x96x256xbf16, #tpu.memory_space<vmem>>, %arg4: memref<1x256xf32, #tpu.memory_space<vmem>>, %arg5: memref<256x128xbf16, #tpu.memory_space<vmem>>, %arg6: memref<1x128xf32, #tpu.memory_space<vmem>>, %arg7: memref<3x8x16xbf16, #tpu.memory_space<vmem>>, %arg8: memref<3x128x64xbf16, #tpu.memory_space<vmem>>, %arg9: memref<1x64xf32, #tpu.memory_space<vmem>>, %arg10: memref<8x16xbf16, #tpu.memory_space<vmem>>, %arg11: memref<256x256xbf16, #tpu.memory_space<vmem>>, %arg12: memref<1x256xf32, #tpu.memory_space<vmem>>, %arg13: memref<64x256xbf16, #tpu.memory_space<vmem>>, %arg14: memref<1x256xf32, #tpu.memory_space<vmem>>, %arg15: memref<256x128xbf16, #tpu.memory_space<vmem>>, %arg16: memref<1x128xf32, #tpu.memory_space<vmem>>, %arg17: memref<1x128xf32, #tpu.memory_space<vmem>>, %arg18: memref<1x128xf32, #tpu.memory_space<vmem>>, %arg19: memref<128x256xbf16, #tpu.memory_space<vmem>>, %arg20: memref<1x256xf32, #tpu.memory_space<vmem>>, %arg21: memref<256x128xbf16, #tpu.memory_space<vmem>>, %arg22: memref<1x128xf32, #tpu.memory_space<vmem>>, %arg23: memref<3x4x8xbf16, #tpu.memory_space<vmem>>, %arg24: memref<3x128x96xbf16, #tpu.memory_space<vmem>>, %arg25: memref<1x96xf32, #tpu.memory_space<vmem>>, %arg26: memref<1x96xf32, #tpu.memory_space<vmem>>, %arg27: memref<1x96xf32, #tpu.memory_space<vmem>>, %arg28: memref<96x192xbf16, #tpu.memory_space<vmem>>, %arg29: memref<1x192xf32, #tpu.memory_space<vmem>>, %arg30: memref<192x96xbf16, #tpu.memory_space<vmem>>, %arg31: memref<1x96xf32, #tpu.memory_space<vmem>>, %arg32: memref<3x2x4xbf16, #tpu.memory_space<vmem>>, %arg33: memref<3x96x64xbf16, #tpu.memory_space<vmem>>, %arg34: memref<1x64xf32, #tpu.memory_space<vmem>>, %arg35: memref<1x64xf32, #tpu.memory_space<vmem>>, %arg36: memref<1x64xf32, #tpu.memory_space<vmem>>, %arg37: memref<64x128xbf16, #tpu.memory_space<vmem>>, %arg38: memref<1x128xf32, #tpu.memory_space<vmem>>, %arg39: memref<128x64xbf16, #tpu.memory_space<vmem>>, %arg40: memref<1x64xf32, #tpu.memory_space<vmem>>, %arg41: memref<64x128xbf16, #tpu.memory_space<vmem>>, %arg42: memref<1x128xf32, #tpu.memory_space<vmem>>, %arg43: memref<1x8x128xf32, #tpu.memory_space<vmem>>) attributes {dimension_semantics = [#tpu.dimension_semantics<parallel>], iteration_bounds = array<i64: 2>, scalar_prefetch = 0 : i64, scratch_operands = 0 : i64, tpu.core_type = #tpu.core_type<tc>, window_params = [{transform_indices = @transform_0, window_bounds = array<i64: 1, 32, 96>}, {pipeline_mode = #tpu.pipeline_mode<synchronous>, transform_indices = @transform_1, window_bounds = array<i64: 3, 16, 32>}, {pipeline_mode = #tpu.pipeline_mode<synchronous>, transform_indices = @transform_2, window_bounds = array<i64: 3, 96, 256>}, {pipeline_mode = #tpu.pipeline_mode<synchronous>, transform_indices = @transform_3, window_bounds = array<i64: 1, 256>}, {pipeline_mode = #tpu.pipeline_mode<synchronous>, transform_indices = @transform_4, window_bounds = array<i64: 256, 128>}, {pipeline_mode = #tpu.pipeline_mode<synchronous>, transform_indices = @transform_5, window_bounds = array<i64: 1, 128>}, {pipeline_mode = #tpu.pipeline_mode<synchronous>, transform_indices = @transform_6, window_bounds = array<i64: 3, 8, 16>}, {pipeline_mode = #tpu.pipeline_mode<synchronous>, transform_indices = @transform_7, window_bounds = array<i64: 3, 128, 64>}, {pipeline_mode = #tpu.pipeline_mode<synchronous>, transform_indices = @transform_8, window_bounds = array<i64: 1, 64>}, {pipeline_mode = #tpu.pipeline_mode<synchronous>, transform_indices = @transform_9, window_bounds = array<i64: 8, 16>}, {pipeline_mode = #tpu.pipeline_mode<synchronous>, transform_indices = @transform_10, window_bounds = array<i64: 256, 256>}, {pipeline_mode = #tpu.pipeline_mode<synchronous>, transform_indices = @transform_11, window_bounds = array<i64: 1, 256>}, {pipeline_mode = #tpu.pipeline_mode<synchronous>, transform_indices = @transform_12, window_bounds = array<i64: 64, 256>}, {pipeline_mode = #tpu.pipeline_mode<synchronous>, transform_indices = @transform_13, window_bounds = array<i64: 1, 256>}, {pipeline_mode = #tpu.pipeline_mode<synchronous>, transform_indices = @transform_14, window_bounds = array<i64: 256, 128>}, {pipeline_mode = #tpu.pipeline_mode<synchronous>, transform_indices = @transform_15, window_bounds = array<i64: 1, 128>}, {pipeline_mode = #tpu.pipeline_mode<synchronous>, transform_indices = @transform_16, window_bounds = array<i64: 1, 128>}, {pipeline_mode = #tpu.pipeline_mode<synchronous>, transform_indices = @transform_17, window_bounds = array<i64: 1, 128>}, {pipeline_mode = #tpu.pipeline_mode<synchronous>, transform_indices = @transform_18, window_bounds = array<i64: 128, 256>}, {pipeline_mode = #tpu.pipeline_mode<synchronous>, transform_indices = @transform_19, window_bounds = array<i64: 1, 256>}, {pipeline_mode = #tpu.pipeline_mode<synchronous>, transform_indices = @transform_20, window_bounds = array<i64: 256, 128>}, {pipeline_mode = #tpu.pipeline_mode<synchronous>, transform_indices = @transform_21, window_bounds = array<i64: 1, 128>}, {pipeline_mode = #tpu.pipeline_mode<synchronous>, transform_indices = @transform_22, window_bounds = array<i64: 3, 4, 8>}, {pipeline_mode = #tpu.pipeline_mode<synchronous>, transform_indices = @transform_23, window_bounds = array<i64: 3, 128, 96>}, {pipeline_mode = #tpu.pipeline_mode<synchronous>, transform_indices = @transform_24, window_bounds = array<i64: 1, 96>}, {pipeline_mode = #tpu.pipeline_mode<synchronous>, transform_indices = @transform_25, window_bounds = array<i64: 1, 96>}, {pipeline_mode = #tpu.pipeline_mode<synchronous>, transform_indices = @transform_26, window_bounds = array<i64: 1, 96>}, {pipeline_mode = #tpu.pipeline_mode<synchronous>, transform_indices = @transform_27, window_bounds = array<i64: 96, 192>}, {pipeline_mode = #tpu.pipeline_mode<synchronous>, transform_indices = @transform_28, window_bounds = array<i64: 1, 192>}, {pipeline_mode = #tpu.pipeline_mode<synchronous>, transform_indices = @transform_29, window_bounds = array<i64: 192, 96>}, {pipeline_mode = #tpu.pipeline_mode<synchronous>, transform_indices = @transform_30, window_bounds = array<i64: 1, 96>}, {pipeline_mode = #tpu.pipeline_mode<synchronous>, transform_indices = @transform_31, window_bounds = array<i64: 3, 2, 4>}, {pipeline_mode = #tpu.pipeline_mode<synchronous>, transform_indices = @transform_32, window_bounds = array<i64: 3, 96, 64>}, {pipeline_mode = #tpu.pipeline_mode<synchronous>, transform_indices = @transform_33, window_bounds = array<i64: 1, 64>}, {pipeline_mode = #tpu.pipeline_mode<synchronous>, transform_indices = @transform_34, window_bounds = array<i64: 1, 64>}, {pipeline_mode = #tpu.pipeline_mode<synchronous>, transform_indices = @transform_35, window_bounds = array<i64: 1, 64>}, {pipeline_mode = #tpu.pipeline_mode<synchronous>, transform_indices = @transform_36, window_bounds = array<i64: 64, 128>}, {pipeline_mode = #tpu.pipeline_mode<synchronous>, transform_indices = @transform_37, window_bounds = array<i64: 1, 128>}, {pipeline_mode = #tpu.pipeline_mode<synchronous>, transform_indices = @transform_38, window_bounds = array<i64: 128, 64>}, {pipeline_mode = #tpu.pipeline_mode<synchronous>, transform_indices = @transform_39, window_bounds = array<i64: 1, 64>}, {pipeline_mode = #tpu.pipeline_mode<synchronous>, transform_indices = @transform_40, window_bounds = array<i64: 64, 128>}, {pipeline_mode = #tpu.pipeline_mode<synchronous>, transform_indices = @transform_41, window_bounds = array<i64: 1, 128>}, {transform_indices = @transform_42, window_bounds = array<i64: 1, 8, 128>}]} {
    %c0 = arith.constant 0 : index
    %c0_0 = arith.constant 0 : index
    %c0_1 = arith.constant 0 : index
    %0 = vector.load %arg1[%c0, %c0_0, %c0_1] : memref<1x32x96xf32, #tpu.memory_space<vmem>>, vector<1x32x96xf32>
    %1 = vector.shape_cast %0 : vector<1x32x96xf32> to vector<32x96xf32>
    %2 = arith.truncf %1 : vector<32x96xf32> to vector<32x96xbf16>
    %c0_2 = arith.constant 0 : index
    %c0_3 = arith.constant 0 : index
    %3 = vector.load %arg4[%c0_2, %c0_3] : memref<1x256xf32, #tpu.memory_space<vmem>>, vector<1x256xf32>
    %c0_4 = arith.constant 0 : index
    %c0_5 = arith.constant 0 : index
    %c0_6 = arith.constant 0 : index
    %4 = vector.load %arg2[%c0_4, %c0_5, %c0_6] : memref<3x16x32xbf16, #tpu.memory_space<vmem>>, vector<1x16x32xbf16>
    %5 = vector.shape_cast %4 : vector<1x16x32xbf16> to vector<16x32xbf16>
    %cst = arith.constant dense<0.000000e+00> : vector<16x96xf32>
    %6 = tpu.matmul %5, %2, %cst {dimension_numbers = #tpu.dot_dimension_numbers<[1], [0], [0], [1], [0, 0, 1, 1], [], []>} : vector<16x32xbf16>, vector<32x96xbf16>, vector<16x96xf32> -> vector<16x96xf32>
    %c0_7 = arith.constant 0 : index
    %c0_8 = arith.constant 0 : index
    %c0_9 = arith.constant 0 : index
    %7 = vector.load %arg3[%c0_7, %c0_8, %c0_9] : memref<3x96x256xbf16, #tpu.memory_space<vmem>>, vector<1x96x256xbf16>
    %8 = vector.shape_cast %7 : vector<1x96x256xbf16> to vector<96x256xbf16>
    %9 = arith.truncf %6 : vector<16x96xf32> to vector<16x96xbf16>
    %cst_10 = arith.constant dense<0.000000e+00> : vector<16x256xf32>
    %10 = tpu.matmul %9, %8, %cst_10 {dimension_numbers = #tpu.dot_dimension_numbers<[1], [0], [0], [1], [0, 0, 1, 1], [], []>} : vector<16x96xbf16>, vector<96x256xbf16>, vector<16x256xf32> -> vector<16x256xf32>
    %11 = vector.broadcast %3 : vector<1x256xf32> to vector<16x256xf32>
    %12 = arith.addf %11, %10 : vector<16x256xf32>
    %c1 = arith.constant 1 : index
    %c0_11 = arith.constant 0 : index
    %c0_12 = arith.constant 0 : index
    %13 = vector.load %arg2[%c1, %c0_11, %c0_12] : memref<3x16x32xbf16, #tpu.memory_space<vmem>>, vector<1x16x32xbf16>
    %14 = vector.shape_cast %13 : vector<1x16x32xbf16> to vector<16x32xbf16>
    %cst_13 = arith.constant dense<0.000000e+00> : vector<16x96xf32>
    %15 = tpu.matmul %14, %2, %cst_13 {dimension_numbers = #tpu.dot_dimension_numbers<[1], [0], [0], [1], [0, 0, 1, 1], [], []>} : vector<16x32xbf16>, vector<32x96xbf16>, vector<16x96xf32> -> vector<16x96xf32>
    %c1_14 = arith.constant 1 : index
    %c0_15 = arith.constant 0 : index
    %c0_16 = arith.constant 0 : index
    %16 = vector.load %arg3[%c1_14, %c0_15, %c0_16] : memref<3x96x256xbf16, #tpu.memory_space<vmem>>, vector<1x96x256xbf16>
    %17 = vector.shape_cast %16 : vector<1x96x256xbf16> to vector<96x256xbf16>
    %18 = arith.truncf %15 : vector<16x96xf32> to vector<16x96xbf16>
    %cst_17 = arith.constant dense<0.000000e+00> : vector<16x256xf32>
    %19 = tpu.matmul %18, %17, %cst_17 {dimension_numbers = #tpu.dot_dimension_numbers<[1], [0], [0], [1], [0, 0, 1, 1], [], []>} : vector<16x96xbf16>, vector<96x256xbf16>, vector<16x256xf32> -> vector<16x256xf32>
    %20 = arith.addf %12, %19 : vector<16x256xf32>
    %c2 = arith.constant 2 : index
    %c0_18 = arith.constant 0 : index
    %c0_19 = arith.constant 0 : index
    %21 = vector.load %arg2[%c2, %c0_18, %c0_19] : memref<3x16x32xbf16, #tpu.memory_space<vmem>>, vector<1x16x32xbf16>
    %22 = vector.shape_cast %21 : vector<1x16x32xbf16> to vector<16x32xbf16>
    %cst_20 = arith.constant dense<0.000000e+00> : vector<16x96xf32>
    %23 = tpu.matmul %22, %2, %cst_20 {dimension_numbers = #tpu.dot_dimension_numbers<[1], [0], [0], [1], [0, 0, 1, 1], [], []>} : vector<16x32xbf16>, vector<32x96xbf16>, vector<16x96xf32> -> vector<16x96xf32>
    %c2_21 = arith.constant 2 : index
    %c0_22 = arith.constant 0 : index
    %c0_23 = arith.constant 0 : index
    %24 = vector.load %arg3[%c2_21, %c0_22, %c0_23] : memref<3x96x256xbf16, #tpu.memory_space<vmem>>, vector<1x96x256xbf16>
    %25 = vector.shape_cast %24 : vector<1x96x256xbf16> to vector<96x256xbf16>
    %26 = arith.truncf %23 : vector<16x96xf32> to vector<16x96xbf16>
    %cst_24 = arith.constant dense<0.000000e+00> : vector<16x256xf32>
    %27 = tpu.matmul %26, %25, %cst_24 {dimension_numbers = #tpu.dot_dimension_numbers<[1], [0], [0], [1], [0, 0, 1, 1], [], []>} : vector<16x96xbf16>, vector<96x256xbf16>, vector<16x256xf32> -> vector<16x256xf32>
    %28 = arith.addf %20, %27 : vector<16x256xf32>
    %cst_25 = arith.constant 0.000000e+00 : f32
    %29 = vector.broadcast %cst_25 : f32 to vector<16x256xf32>
    %30 = arith.maximumf %28, %29 : vector<16x256xf32>
    %c0_26 = arith.constant 0 : index
    %c0_27 = arith.constant 0 : index
    %31 = vector.load %arg5[%c0_26, %c0_27] : memref<256x128xbf16, #tpu.memory_space<vmem>>, vector<256x128xbf16>
    %32 = arith.truncf %30 : vector<16x256xf32> to vector<16x256xbf16>
    %cst_28 = arith.constant dense<0.000000e+00> : vector<16x128xf32>
    %33 = tpu.matmul %32, %31, %cst_28 {dimension_numbers = #tpu.dot_dimension_numbers<[1], [0], [0], [1], [0, 0, 1, 1], [], []>} : vector<16x256xbf16>, vector<256x128xbf16>, vector<16x128xf32> -> vector<16x128xf32>
    %c0_29 = arith.constant 0 : index
    %c0_30 = arith.constant 0 : index
    %34 = vector.load %arg6[%c0_29, %c0_30] : memref<1x128xf32, #tpu.memory_space<vmem>>, vector<1x128xf32>
    %35 = vector.broadcast %34 : vector<1x128xf32> to vector<16x128xf32>
    %36 = arith.addf %33, %35 : vector<16x128xf32>
    %cst_31 = arith.constant 0.000000e+00 : f32
    %37 = vector.broadcast %cst_31 : f32 to vector<16x128xf32>
    %38 = arith.maximumf %36, %37 : vector<16x128xf32>
    %39 = arith.truncf %38 : vector<16x128xf32> to vector<16x128xbf16>
    %c0_32 = arith.constant 0 : index
    %c0_33 = arith.constant 0 : index
    %40 = vector.load %arg9[%c0_32, %c0_33] : memref<1x64xf32, #tpu.memory_space<vmem>>, vector<1x64xf32>
    %c0_34 = arith.constant 0 : index
    %c0_35 = arith.constant 0 : index
    %c0_36 = arith.constant 0 : index
    %41 = vector.load %arg7[%c0_34, %c0_35, %c0_36] : memref<3x8x16xbf16, #tpu.memory_space<vmem>>, vector<1x8x16xbf16>
    %42 = vector.shape_cast %41 : vector<1x8x16xbf16> to vector<8x16xbf16>
    %cst_37 = arith.constant dense<0.000000e+00> : vector<8x128xf32>
    %43 = tpu.matmul %42, %39, %cst_37 {dimension_numbers = #tpu.dot_dimension_numbers<[1], [0], [0], [1], [0, 0, 1, 1], [], []>} : vector<8x16xbf16>, vector<16x128xbf16>, vector<8x128xf32> -> vector<8x128xf32>
    %c0_38 = arith.constant 0 : index
    %c0_39 = arith.constant 0 : index
    %c0_40 = arith.constant 0 : index
    %44 = vector.load %arg8[%c0_38, %c0_39, %c0_40] : memref<3x128x64xbf16, #tpu.memory_space<vmem>>, vector<1x128x64xbf16>
    %45 = vector.shape_cast %44 : vector<1x128x64xbf16> to vector<128x64xbf16>
    %46 = arith.truncf %43 : vector<8x128xf32> to vector<8x128xbf16>
    %cst_41 = arith.constant dense<0.000000e+00> : vector<8x64xf32>
    %47 = tpu.matmul %46, %45, %cst_41 {dimension_numbers = #tpu.dot_dimension_numbers<[1], [0], [0], [1], [0, 0, 1, 1], [], []>} : vector<8x128xbf16>, vector<128x64xbf16>, vector<8x64xf32> -> vector<8x64xf32>
    %48 = vector.broadcast %40 : vector<1x64xf32> to vector<8x64xf32>
    %49 = arith.addf %48, %47 : vector<8x64xf32>
    %c1_42 = arith.constant 1 : index
    %c0_43 = arith.constant 0 : index
    %c0_44 = arith.constant 0 : index
    %50 = vector.load %arg7[%c1_42, %c0_43, %c0_44] : memref<3x8x16xbf16, #tpu.memory_space<vmem>>, vector<1x8x16xbf16>
    %51 = vector.shape_cast %50 : vector<1x8x16xbf16> to vector<8x16xbf16>
    %cst_45 = arith.constant dense<0.000000e+00> : vector<8x128xf32>
    %52 = tpu.matmul %51, %39, %cst_45 {dimension_numbers = #tpu.dot_dimension_numbers<[1], [0], [0], [1], [0, 0, 1, 1], [], []>} : vector<8x16xbf16>, vector<16x128xbf16>, vector<8x128xf32> -> vector<8x128xf32>
    %c1_46 = arith.constant 1 : index
    %c0_47 = arith.constant 0 : index
    %c0_48 = arith.constant 0 : index
    %53 = vector.load %arg8[%c1_46, %c0_47, %c0_48] : memref<3x128x64xbf16, #tpu.memory_space<vmem>>, vector<1x128x64xbf16>
    %54 = vector.shape_cast %53 : vector<1x128x64xbf16> to vector<128x64xbf16>
    %55 = arith.truncf %52 : vector<8x128xf32> to vector<8x128xbf16>
    %cst_49 = arith.constant dense<0.000000e+00> : vector<8x64xf32>
    %56 = tpu.matmul %55, %54, %cst_49 {dimension_numbers = #tpu.dot_dimension_numbers<[1], [0], [0], [1], [0, 0, 1, 1], [], []>} : vector<8x128xbf16>, vector<128x64xbf16>, vector<8x64xf32> -> vector<8x64xf32>
    %57 = arith.addf %49, %56 : vector<8x64xf32>
    %c2_50 = arith.constant 2 : index
    %c0_51 = arith.constant 0 : index
    %c0_52 = arith.constant 0 : index
    %58 = vector.load %arg7[%c2_50, %c0_51, %c0_52] : memref<3x8x16xbf16, #tpu.memory_space<vmem>>, vector<1x8x16xbf16>
    %59 = vector.shape_cast %58 : vector<1x8x16xbf16> to vector<8x16xbf16>
    %cst_53 = arith.constant dense<0.000000e+00> : vector<8x128xf32>
    %60 = tpu.matmul %59, %39, %cst_53 {dimension_numbers = #tpu.dot_dimension_numbers<[1], [0], [0], [1], [0, 0, 1, 1], [], []>} : vector<8x16xbf16>, vector<16x128xbf16>, vector<8x128xf32> -> vector<8x128xf32>
    %c2_54 = arith.constant 2 : index
    %c0_55 = arith.constant 0 : index
    %c0_56 = arith.constant 0 : index
    %61 = vector.load %arg8[%c2_54, %c0_55, %c0_56] : memref<3x128x64xbf16, #tpu.memory_space<vmem>>, vector<1x128x64xbf16>
    %62 = vector.shape_cast %61 : vector<1x128x64xbf16> to vector<128x64xbf16>
    %63 = arith.truncf %60 : vector<8x128xf32> to vector<8x128xbf16>
    %cst_57 = arith.constant dense<0.000000e+00> : vector<8x64xf32>
    %64 = tpu.matmul %63, %62, %cst_57 {dimension_numbers = #tpu.dot_dimension_numbers<[1], [0], [0], [1], [0, 0, 1, 1], [], []>} : vector<8x128xbf16>, vector<128x64xbf16>, vector<8x64xf32> -> vector<8x64xf32>
    %65 = arith.addf %57, %64 : vector<8x64xf32>
    %cst_58 = arith.constant 0.000000e+00 : f32
    %66 = vector.broadcast %cst_58 : f32 to vector<8x64xf32>
    %67 = arith.maximumf %65, %66 : vector<8x64xf32>
    %c0_59 = arith.constant 0 : index
    %c0_60 = arith.constant 0 : index
    %68 = vector.load %arg10[%c0_59, %c0_60] : memref<8x16xbf16, #tpu.memory_space<vmem>>, vector<8x16xbf16>
    %69 = arith.truncf %30 : vector<16x256xf32> to vector<16x256xbf16>
    %cst_61 = arith.constant dense<0.000000e+00> : vector<8x256xf32>
    %70 = tpu.matmul %68, %69, %cst_61 {dimension_numbers = #tpu.dot_dimension_numbers<[1], [0], [0], [1], [0, 0, 1, 1], [], []>} : vector<8x16xbf16>, vector<16x256xbf16>, vector<8x256xf32> -> vector<8x256xf32>
    %c0_62 = arith.constant 0 : index
    %c0_63 = arith.constant 0 : index
    %71 = vector.load %arg11[%c0_62, %c0_63] : memref<256x256xbf16, #tpu.memory_space<vmem>>, vector<256x256xbf16>
    %72 = arith.truncf %70 : vector<8x256xf32> to vector<8x256xbf16>
    %cst_64 = arith.constant dense<0.000000e+00> : vector<8x256xf32>
    %73 = tpu.matmul %72, %71, %cst_64 {dimension_numbers = #tpu.dot_dimension_numbers<[1], [0], [0], [1], [0, 0, 1, 1], [], []>} : vector<8x256xbf16>, vector<256x256xbf16>, vector<8x256xf32> -> vector<8x256xf32>
    %c0_65 = arith.constant 0 : index
    %c0_66 = arith.constant 0 : index
    %74 = vector.load %arg12[%c0_65, %c0_66] : memref<1x256xf32, #tpu.memory_space<vmem>>, vector<1x256xf32>
    %75 = vector.broadcast %74 : vector<1x256xf32> to vector<8x256xf32>
    %76 = arith.addf %73, %75 : vector<8x256xf32>
    %c0_67 = arith.constant 0 : index
    %c0_68 = arith.constant 0 : index
    %77 = vector.load %arg13[%c0_67, %c0_68] : memref<64x256xbf16, #tpu.memory_space<vmem>>, vector<64x256xbf16>
    %78 = arith.truncf %67 : vector<8x64xf32> to vector<8x64xbf16>
    %cst_69 = arith.constant dense<0.000000e+00> : vector<8x256xf32>
    %79 = tpu.matmul %78, %77, %cst_69 {dimension_numbers = #tpu.dot_dimension_numbers<[1], [0], [0], [1], [0, 0, 1, 1], [], []>} : vector<8x64xbf16>, vector<64x256xbf16>, vector<8x256xf32> -> vector<8x256xf32>
    %c0_70 = arith.constant 0 : index
    %c0_71 = arith.constant 0 : index
    %80 = vector.load %arg14[%c0_70, %c0_71] : memref<1x256xf32, #tpu.memory_space<vmem>>, vector<1x256xf32>
    %81 = vector.broadcast %80 : vector<1x256xf32> to vector<8x256xf32>
    %82 = arith.addf %79, %81 : vector<8x256xf32>
    %83 = arith.addf %82, %76 : vector<8x256xf32>
    %cst_72 = arith.constant 0.000000e+00 : f32
    %84 = vector.broadcast %cst_72 : f32 to vector<8x256xf32>
    %85 = arith.maximumf %83, %84 : vector<8x256xf32>
    %c0_73 = arith.constant 0 : index
    %c0_74 = arith.constant 0 : index
    %86 = vector.load %arg15[%c0_73, %c0_74] : memref<256x128xbf16, #tpu.memory_space<vmem>>, vector<256x128xbf16>
    %87 = arith.truncf %85 : vector<8x256xf32> to vector<8x256xbf16>
    %cst_75 = arith.constant dense<0.000000e+00> : vector<8x128xf32>
    %88 = tpu.matmul %87, %86, %cst_75 {dimension_numbers = #tpu.dot_dimension_numbers<[1], [0], [0], [1], [0, 0, 1, 1], [], []>} : vector<8x256xbf16>, vector<256x128xbf16>, vector<8x128xf32> -> vector<8x128xf32>
    %c0_76 = arith.constant 0 : index
    %c0_77 = arith.constant 0 : index
    %89 = vector.load %arg16[%c0_76, %c0_77] : memref<1x128xf32, #tpu.memory_space<vmem>>, vector<1x128xf32>
    %90 = vector.broadcast %89 : vector<1x128xf32> to vector<8x128xf32>
    %91 = arith.addf %88, %90 : vector<8x128xf32>
    %c0_78 = arith.constant 0 : index
    %c0_79 = arith.constant 0 : index
    %92 = vector.load %arg17[%c0_78, %c0_79] : memref<1x128xf32, #tpu.memory_space<vmem>>, vector<1x128xf32>
    %93 = vector.broadcast %92 : vector<1x128xf32> to vector<8x128xf32>
    %94 = arith.mulf %91, %93 : vector<8x128xf32>
    %c0_80 = arith.constant 0 : index
    %c0_81 = arith.constant 0 : index
    %95 = vector.load %arg18[%c0_80, %c0_81] : memref<1x128xf32, #tpu.memory_space<vmem>>, vector<1x128xf32>
    %96 = vector.broadcast %95 : vector<1x128xf32> to vector<8x128xf32>
    %97 = arith.addf %94, %96 : vector<8x128xf32>
    %c0_82 = arith.constant 0 : index
    %c0_83 = arith.constant 0 : index
    %98 = vector.load %arg19[%c0_82, %c0_83] : memref<128x256xbf16, #tpu.memory_space<vmem>>, vector<128x256xbf16>
    %99 = arith.truncf %97 : vector<8x128xf32> to vector<8x128xbf16>
    %cst_84 = arith.constant dense<0.000000e+00> : vector<8x256xf32>
    %100 = tpu.matmul %99, %98, %cst_84 {dimension_numbers = #tpu.dot_dimension_numbers<[1], [0], [0], [1], [0, 0, 1, 1], [], []>} : vector<8x128xbf16>, vector<128x256xbf16>, vector<8x256xf32> -> vector<8x256xf32>
    %c0_85 = arith.constant 0 : index
    %c0_86 = arith.constant 0 : index
    %101 = vector.load %arg20[%c0_85, %c0_86] : memref<1x256xf32, #tpu.memory_space<vmem>>, vector<1x256xf32>
    %102 = vector.broadcast %101 : vector<1x256xf32> to vector<8x256xf32>
    %103 = arith.addf %100, %102 : vector<8x256xf32>
    %cst_87 = arith.constant 0.000000e+00 : f32
    %104 = vector.broadcast %cst_87 : f32 to vector<8x256xf32>
    %105 = arith.maximumf %103, %104 : vector<8x256xf32>
    %c0_88 = arith.constant 0 : index
    %c0_89 = arith.constant 0 : index
    %106 = vector.load %arg21[%c0_88, %c0_89] : memref<256x128xbf16, #tpu.memory_space<vmem>>, vector<256x128xbf16>
    %107 = arith.truncf %105 : vector<8x256xf32> to vector<8x256xbf16>
    %cst_90 = arith.constant dense<0.000000e+00> : vector<8x128xf32>
    %108 = tpu.matmul %107, %106, %cst_90 {dimension_numbers = #tpu.dot_dimension_numbers<[1], [0], [0], [1], [0, 0, 1, 1], [], []>} : vector<8x256xbf16>, vector<256x128xbf16>, vector<8x128xf32> -> vector<8x128xf32>
    %c0_91 = arith.constant 0 : index
    %c0_92 = arith.constant 0 : index
    %109 = vector.load %arg22[%c0_91, %c0_92] : memref<1x128xf32, #tpu.memory_space<vmem>>, vector<1x128xf32>
    %110 = vector.broadcast %109 : vector<1x128xf32> to vector<8x128xf32>
    %111 = arith.addf %108, %110 : vector<8x128xf32>
    %112 = arith.addf %111, %91 : vector<8x128xf32>
    %113 = arith.truncf %112 : vector<8x128xf32> to vector<8x128xbf16>
    %c0_93 = arith.constant 0 : index
    %c0_94 = arith.constant 0 : index
    %114 = vector.load %arg25[%c0_93, %c0_94] : memref<1x96xf32, #tpu.memory_space<vmem>>, vector<1x96xf32>
    %c0_95 = arith.constant 0 : index
    %c0_96 = arith.constant 0 : index
    %c0_97 = arith.constant 0 : index
    %115 = vector.load %arg23[%c0_95, %c0_96, %c0_97] : memref<3x4x8xbf16, #tpu.memory_space<vmem>>, vector<1x4x8xbf16>
    %116 = vector.shape_cast %115 : vector<1x4x8xbf16> to vector<4x8xbf16>
    %cst_98 = arith.constant dense<0.000000e+00> : vector<4x128xf32>
    %117 = tpu.matmul %116, %113, %cst_98 {dimension_numbers = #tpu.dot_dimension_numbers<[1], [0], [0], [1], [0, 0, 1, 1], [], []>} : vector<4x8xbf16>, vector<8x128xbf16>, vector<4x128xf32> -> vector<4x128xf32>
    %c0_99 = arith.constant 0 : index
    %c0_100 = arith.constant 0 : index
    %c0_101 = arith.constant 0 : index
    %118 = vector.load %arg24[%c0_99, %c0_100, %c0_101] : memref<3x128x96xbf16, #tpu.memory_space<vmem>>, vector<1x128x96xbf16>
    %119 = vector.shape_cast %118 : vector<1x128x96xbf16> to vector<128x96xbf16>
    %120 = arith.truncf %117 : vector<4x128xf32> to vector<4x128xbf16>
    %cst_102 = arith.constant dense<0.000000e+00> : vector<4x96xf32>
    %121 = tpu.matmul %120, %119, %cst_102 {dimension_numbers = #tpu.dot_dimension_numbers<[1], [0], [0], [1], [0, 0, 1, 1], [], []>} : vector<4x128xbf16>, vector<128x96xbf16>, vector<4x96xf32> -> vector<4x96xf32>
    %122 = vector.broadcast %114 : vector<1x96xf32> to vector<4x96xf32>
    %123 = arith.addf %122, %121 : vector<4x96xf32>
    %c1_103 = arith.constant 1 : index
    %c0_104 = arith.constant 0 : index
    %c0_105 = arith.constant 0 : index
    %124 = vector.load %arg23[%c1_103, %c0_104, %c0_105] : memref<3x4x8xbf16, #tpu.memory_space<vmem>>, vector<1x4x8xbf16>
    %125 = vector.shape_cast %124 : vector<1x4x8xbf16> to vector<4x8xbf16>
    %cst_106 = arith.constant dense<0.000000e+00> : vector<4x128xf32>
    %126 = tpu.matmul %125, %113, %cst_106 {dimension_numbers = #tpu.dot_dimension_numbers<[1], [0], [0], [1], [0, 0, 1, 1], [], []>} : vector<4x8xbf16>, vector<8x128xbf16>, vector<4x128xf32> -> vector<4x128xf32>
    %c1_107 = arith.constant 1 : index
    %c0_108 = arith.constant 0 : index
    %c0_109 = arith.constant 0 : index
    %127 = vector.load %arg24[%c1_107, %c0_108, %c0_109] : memref<3x128x96xbf16, #tpu.memory_space<vmem>>, vector<1x128x96xbf16>
    %128 = vector.shape_cast %127 : vector<1x128x96xbf16> to vector<128x96xbf16>
    %129 = arith.truncf %126 : vector<4x128xf32> to vector<4x128xbf16>
    %cst_110 = arith.constant dense<0.000000e+00> : vector<4x96xf32>
    %130 = tpu.matmul %129, %128, %cst_110 {dimension_numbers = #tpu.dot_dimension_numbers<[1], [0], [0], [1], [0, 0, 1, 1], [], []>} : vector<4x128xbf16>, vector<128x96xbf16>, vector<4x96xf32> -> vector<4x96xf32>
    %131 = arith.addf %123, %130 : vector<4x96xf32>
    %c2_111 = arith.constant 2 : index
    %c0_112 = arith.constant 0 : index
    %c0_113 = arith.constant 0 : index
    %132 = vector.load %arg23[%c2_111, %c0_112, %c0_113] : memref<3x4x8xbf16, #tpu.memory_space<vmem>>, vector<1x4x8xbf16>
    %133 = vector.shape_cast %132 : vector<1x4x8xbf16> to vector<4x8xbf16>
    %cst_114 = arith.constant dense<0.000000e+00> : vector<4x128xf32>
    %134 = tpu.matmul %133, %113, %cst_114 {dimension_numbers = #tpu.dot_dimension_numbers<[1], [0], [0], [1], [0, 0, 1, 1], [], []>} : vector<4x8xbf16>, vector<8x128xbf16>, vector<4x128xf32> -> vector<4x128xf32>
    %c2_115 = arith.constant 2 : index
    %c0_116 = arith.constant 0 : index
    %c0_117 = arith.constant 0 : index
    %135 = vector.load %arg24[%c2_115, %c0_116, %c0_117] : memref<3x128x96xbf16, #tpu.memory_space<vmem>>, vector<1x128x96xbf16>
    %136 = vector.shape_cast %135 : vector<1x128x96xbf16> to vector<128x96xbf16>
    %137 = arith.truncf %134 : vector<4x128xf32> to vector<4x128xbf16>
    %cst_118 = arith.constant dense<0.000000e+00> : vector<4x96xf32>
    %138 = tpu.matmul %137, %136, %cst_118 {dimension_numbers = #tpu.dot_dimension_numbers<[1], [0], [0], [1], [0, 0, 1, 1], [], []>} : vector<4x128xbf16>, vector<128x96xbf16>, vector<4x96xf32> -> vector<4x96xf32>
    %139 = arith.addf %131, %138 : vector<4x96xf32>
    %cst_119 = arith.constant 0.000000e+00 : f32
    %140 = vector.broadcast %cst_119 : f32 to vector<4x96xf32>
    %141 = arith.maximumf %139, %140 : vector<4x96xf32>
    %c0_120 = arith.constant 0 : index
    %c0_121 = arith.constant 0 : index
    %142 = vector.load %arg26[%c0_120, %c0_121] : memref<1x96xf32, #tpu.memory_space<vmem>>, vector<1x96xf32>
    %143 = vector.broadcast %142 : vector<1x96xf32> to vector<4x96xf32>
    %144 = arith.mulf %141, %143 : vector<4x96xf32>
    %c0_122 = arith.constant 0 : index
    %c0_123 = arith.constant 0 : index
    %145 = vector.load %arg27[%c0_122, %c0_123] : memref<1x96xf32, #tpu.memory_space<vmem>>, vector<1x96xf32>
    %146 = vector.broadcast %145 : vector<1x96xf32> to vector<4x96xf32>
    %147 = arith.addf %144, %146 : vector<4x96xf32>
    %c0_124 = arith.constant 0 : index
    %c0_125 = arith.constant 0 : index
    %148 = vector.load %arg28[%c0_124, %c0_125] : memref<96x192xbf16, #tpu.memory_space<vmem>>, vector<96x192xbf16>
    %149 = arith.truncf %147 : vector<4x96xf32> to vector<4x96xbf16>
    %cst_126 = arith.constant dense<0.000000e+00> : vector<4x192xf32>
    %150 = tpu.matmul %149, %148, %cst_126 {dimension_numbers = #tpu.dot_dimension_numbers<[1], [0], [0], [1], [0, 0, 1, 1], [], []>} : vector<4x96xbf16>, vector<96x192xbf16>, vector<4x192xf32> -> vector<4x192xf32>
    %c0_127 = arith.constant 0 : index
    %c0_128 = arith.constant 0 : index
    %151 = vector.load %arg29[%c0_127, %c0_128] : memref<1x192xf32, #tpu.memory_space<vmem>>, vector<1x192xf32>
    %152 = vector.broadcast %151 : vector<1x192xf32> to vector<4x192xf32>
    %153 = arith.addf %150, %152 : vector<4x192xf32>
    %cst_129 = arith.constant 0.000000e+00 : f32
    %154 = vector.broadcast %cst_129 : f32 to vector<4x192xf32>
    %155 = arith.maximumf %153, %154 : vector<4x192xf32>
    %c0_130 = arith.constant 0 : index
    %c0_131 = arith.constant 0 : index
    %156 = vector.load %arg30[%c0_130, %c0_131] : memref<192x96xbf16, #tpu.memory_space<vmem>>, vector<192x96xbf16>
    %157 = arith.truncf %155 : vector<4x192xf32> to vector<4x192xbf16>
    %cst_132 = arith.constant dense<0.000000e+00> : vector<4x96xf32>
    %158 = tpu.matmul %157, %156, %cst_132 {dimension_numbers = #tpu.dot_dimension_numbers<[1], [0], [0], [1], [0, 0, 1, 1], [], []>} : vector<4x192xbf16>, vector<192x96xbf16>, vector<4x96xf32> -> vector<4x96xf32>
    %c0_133 = arith.constant 0 : index
    %c0_134 = arith.constant 0 : index
    %159 = vector.load %arg31[%c0_133, %c0_134] : memref<1x96xf32, #tpu.memory_space<vmem>>, vector<1x96xf32>
    %160 = vector.broadcast %159 : vector<1x96xf32> to vector<4x96xf32>
    %161 = arith.addf %158, %160 : vector<4x96xf32>
    %162 = arith.addf %161, %141 : vector<4x96xf32>
    %163 = arith.truncf %162 : vector<4x96xf32> to vector<4x96xbf16>
    %c0_135 = arith.constant 0 : index
    %c0_136 = arith.constant 0 : index
    %164 = vector.load %arg34[%c0_135, %c0_136] : memref<1x64xf32, #tpu.memory_space<vmem>>, vector<1x64xf32>
    %c0_137 = arith.constant 0 : index
    %c0_138 = arith.constant 0 : index
    %c0_139 = arith.constant 0 : index
    %165 = vector.load %arg32[%c0_137, %c0_138, %c0_139] : memref<3x2x4xbf16, #tpu.memory_space<vmem>>, vector<1x2x4xbf16>
    %166 = vector.shape_cast %165 : vector<1x2x4xbf16> to vector<2x4xbf16>
    %cst_140 = arith.constant dense<0.000000e+00> : vector<2x96xf32>
    %167 = tpu.matmul %166, %163, %cst_140 {dimension_numbers = #tpu.dot_dimension_numbers<[1], [0], [0], [1], [0, 0, 1, 1], [], []>} : vector<2x4xbf16>, vector<4x96xbf16>, vector<2x96xf32> -> vector<2x96xf32>
    %c0_141 = arith.constant 0 : index
    %c0_142 = arith.constant 0 : index
    %c0_143 = arith.constant 0 : index
    %168 = vector.load %arg33[%c0_141, %c0_142, %c0_143] : memref<3x96x64xbf16, #tpu.memory_space<vmem>>, vector<1x96x64xbf16>
    %169 = vector.shape_cast %168 : vector<1x96x64xbf16> to vector<96x64xbf16>
    %170 = arith.truncf %167 : vector<2x96xf32> to vector<2x96xbf16>
    %cst_144 = arith.constant dense<0.000000e+00> : vector<2x64xf32>
    %171 = tpu.matmul %170, %169, %cst_144 {dimension_numbers = #tpu.dot_dimension_numbers<[1], [0], [0], [1], [0, 0, 1, 1], [], []>} : vector<2x96xbf16>, vector<96x64xbf16>, vector<2x64xf32> -> vector<2x64xf32>
    %172 = vector.broadcast %164 : vector<1x64xf32> to vector<2x64xf32>
    %173 = arith.addf %172, %171 : vector<2x64xf32>
    %c1_145 = arith.constant 1 : index
    %c0_146 = arith.constant 0 : index
    %c0_147 = arith.constant 0 : index
    %174 = vector.load %arg32[%c1_145, %c0_146, %c0_147] : memref<3x2x4xbf16, #tpu.memory_space<vmem>>, vector<1x2x4xbf16>
    %175 = vector.shape_cast %174 : vector<1x2x4xbf16> to vector<2x4xbf16>
    %cst_148 = arith.constant dense<0.000000e+00> : vector<2x96xf32>
    %176 = tpu.matmul %175, %163, %cst_148 {dimension_numbers = #tpu.dot_dimension_numbers<[1], [0], [0], [1], [0, 0, 1, 1], [], []>} : vector<2x4xbf16>, vector<4x96xbf16>, vector<2x96xf32> -> vector<2x96xf32>
    %c1_149 = arith.constant 1 : index
    %c0_150 = arith.constant 0 : index
    %c0_151 = arith.constant 0 : index
    %177 = vector.load %arg33[%c1_149, %c0_150, %c0_151] : memref<3x96x64xbf16, #tpu.memory_space<vmem>>, vector<1x96x64xbf16>
    %178 = vector.shape_cast %177 : vector<1x96x64xbf16> to vector<96x64xbf16>
    %179 = arith.truncf %176 : vector<2x96xf32> to vector<2x96xbf16>
    %cst_152 = arith.constant dense<0.000000e+00> : vector<2x64xf32>
    %180 = tpu.matmul %179, %178, %cst_152 {dimension_numbers = #tpu.dot_dimension_numbers<[1], [0], [0], [1], [0, 0, 1, 1], [], []>} : vector<2x96xbf16>, vector<96x64xbf16>, vector<2x64xf32> -> vector<2x64xf32>
    %181 = arith.addf %173, %180 : vector<2x64xf32>
    %c2_153 = arith.constant 2 : index
    %c0_154 = arith.constant 0 : index
    %c0_155 = arith.constant 0 : index
    %182 = vector.load %arg32[%c2_153, %c0_154, %c0_155] : memref<3x2x4xbf16, #tpu.memory_space<vmem>>, vector<1x2x4xbf16>
    %183 = vector.shape_cast %182 : vector<1x2x4xbf16> to vector<2x4xbf16>
    %cst_156 = arith.constant dense<0.000000e+00> : vector<2x96xf32>
    %184 = tpu.matmul %183, %163, %cst_156 {dimension_numbers = #tpu.dot_dimension_numbers<[1], [0], [0], [1], [0, 0, 1, 1], [], []>} : vector<2x4xbf16>, vector<4x96xbf16>, vector<2x96xf32> -> vector<2x96xf32>
    %c2_157 = arith.constant 2 : index
    %c0_158 = arith.constant 0 : index
    %c0_159 = arith.constant 0 : index
    %185 = vector.load %arg33[%c2_157, %c0_158, %c0_159] : memref<3x96x64xbf16, #tpu.memory_space<vmem>>, vector<1x96x64xbf16>
    %186 = vector.shape_cast %185 : vector<1x96x64xbf16> to vector<96x64xbf16>
    %187 = arith.truncf %184 : vector<2x96xf32> to vector<2x96xbf16>
    %cst_160 = arith.constant dense<0.000000e+00> : vector<2x64xf32>
    %188 = tpu.matmul %187, %186, %cst_160 {dimension_numbers = #tpu.dot_dimension_numbers<[1], [0], [0], [1], [0, 0, 1, 1], [], []>} : vector<2x96xbf16>, vector<96x64xbf16>, vector<2x64xf32> -> vector<2x64xf32>
    %189 = arith.addf %181, %188 : vector<2x64xf32>
    %cst_161 = arith.constant 0.000000e+00 : f32
    %190 = vector.broadcast %cst_161 : f32 to vector<2x64xf32>
    %191 = arith.maximumf %189, %190 : vector<2x64xf32>
    %c0_162 = arith.constant 0 : index
    %c0_163 = arith.constant 0 : index
    %192 = vector.load %arg35[%c0_162, %c0_163] : memref<1x64xf32, #tpu.memory_space<vmem>>, vector<1x64xf32>
    %193 = vector.broadcast %192 : vector<1x64xf32> to vector<2x64xf32>
    %194 = arith.mulf %191, %193 : vector<2x64xf32>
    %c0_164 = arith.constant 0 : index
    %c0_165 = arith.constant 0 : index
    %195 = vector.load %arg36[%c0_164, %c0_165] : memref<1x64xf32, #tpu.memory_space<vmem>>, vector<1x64xf32>
    %196 = vector.broadcast %195 : vector<1x64xf32> to vector<2x64xf32>
    %197 = arith.addf %194, %196 : vector<2x64xf32>
    %c0_166 = arith.constant 0 : index
    %c0_167 = arith.constant 0 : index
    %198 = vector.load %arg37[%c0_166, %c0_167] : memref<64x128xbf16, #tpu.memory_space<vmem>>, vector<64x128xbf16>
    %199 = arith.truncf %197 : vector<2x64xf32> to vector<2x64xbf16>
    %cst_168 = arith.constant dense<0.000000e+00> : vector<2x128xf32>
    %200 = tpu.matmul %199, %198, %cst_168 {dimension_numbers = #tpu.dot_dimension_numbers<[1], [0], [0], [1], [0, 0, 1, 1], [], []>} : vector<2x64xbf16>, vector<64x128xbf16>, vector<2x128xf32> -> vector<2x128xf32>
    %c0_169 = arith.constant 0 : index
    %c0_170 = arith.constant 0 : index
    %201 = vector.load %arg38[%c0_169, %c0_170] : memref<1x128xf32, #tpu.memory_space<vmem>>, vector<1x128xf32>
    %202 = vector.broadcast %201 : vector<1x128xf32> to vector<2x128xf32>
    %203 = arith.addf %200, %202 : vector<2x128xf32>
    %cst_171 = arith.constant 0.000000e+00 : f32
    %204 = vector.broadcast %cst_171 : f32 to vector<2x128xf32>
    %205 = arith.maximumf %203, %204 : vector<2x128xf32>
    %c0_172 = arith.constant 0 : index
    %c0_173 = arith.constant 0 : index
    %206 = vector.load %arg39[%c0_172, %c0_173] : memref<128x64xbf16, #tpu.memory_space<vmem>>, vector<128x64xbf16>
    %207 = arith.truncf %205 : vector<2x128xf32> to vector<2x128xbf16>
    %cst_174 = arith.constant dense<0.000000e+00> : vector<2x64xf32>
    %208 = tpu.matmul %207, %206, %cst_174 {dimension_numbers = #tpu.dot_dimension_numbers<[1], [0], [0], [1], [0, 0, 1, 1], [], []>} : vector<2x128xbf16>, vector<128x64xbf16>, vector<2x64xf32> -> vector<2x64xf32>
    %c0_175 = arith.constant 0 : index
    %c0_176 = arith.constant 0 : index
    %209 = vector.load %arg40[%c0_175, %c0_176] : memref<1x64xf32, #tpu.memory_space<vmem>>, vector<1x64xf32>
    %210 = vector.broadcast %209 : vector<1x64xf32> to vector<2x64xf32>
    %211 = arith.addf %208, %210 : vector<2x64xf32>
    %212 = arith.addf %211, %191 : vector<2x64xf32>
    %c0_177 = arith.constant 0 : index
    %c0_178 = arith.constant 0 : index
    %213 = vector.load %arg41[%c0_177, %c0_178] : memref<64x128xbf16, #tpu.memory_space<vmem>>, vector<64x128xbf16>
    %214 = arith.truncf %212 : vector<2x64xf32> to vector<2x64xbf16>
    %cst_179 = arith.constant dense<0.000000e+00> : vector<2x128xf32>
    %215 = tpu.matmul %214, %213, %cst_179 {dimension_numbers = #tpu.dot_dimension_numbers<[1], [0], [0], [1], [0, 0, 1, 1], [], []>} : vector<2x64xbf16>, vector<64x128xbf16>, vector<2x128xf32> -> vector<2x128xf32>
    %216 = vector.extract_strided_slice %215 {offsets = [0, 0], sizes = [1, 128], strides = [1, 1]} : vector<2x128xf32> to vector<1x128xf32>
    %217 = vector.extract_strided_slice %215 {offsets = [1, 0], sizes = [1, 128], strides = [1, 1]} : vector<2x128xf32> to vector<1x128xf32>
    %218 = arith.addf %216, %217 : vector<1x128xf32>
    %c0_180 = arith.constant 0 : index
    %c0_181 = arith.constant 0 : index
    %219 = vector.load %arg42[%c0_180, %c0_181] : memref<1x128xf32, #tpu.memory_space<vmem>>, vector<1x128xf32>
    %220 = arith.addf %218, %219 : vector<1x128xf32>
    %cst_182 = arith.constant 0.000000e+00 : f32
    %221 = vector.broadcast %cst_182 : f32 to vector<8x128xf32>
    %222 = vector.broadcast %220 : vector<1x128xf32> to vector<8x128xf32>
    %223 = arith.addf %221, %222 : vector<8x128xf32>
    %c0_183 = arith.constant 0 : index
    %c0_184 = arith.constant 0 : index
    %c0_185 = arith.constant 0 : index
    %224 = vector.load %arg43[%c0_183, %c0_184, %c0_185] : memref<1x8x128xf32, #tpu.memory_space<vmem>>, vector<1x8x128xf32>
    %225 = vector.shape_cast %224 : vector<1x8x128xf32> to vector<8x128xf32>
    %226 = vector.shape_cast %223 : vector<8x128xf32> to vector<1x8x128xf32>
    tpu.vector_store %arg43[%c0_183, %c0_184, %c0_185], %226 {strides = array<i32>} : memref<1x8x128xf32, #tpu.memory_space<vmem>>, vector<1x8x128xf32>,
    return
  }
  func.func @transform_0(%arg0: i32) -> (i32, i32, i32) {
    %c0_i32 = arith.constant 0 : i32
    %c0_i32_0 = arith.constant 0 : i32
    %c0_i32_1 = arith.constant 0 : i32
    return %arg0, %c0_i32, %c0_i32_0 : i32, i32, i32
  }
  func.func @transform_1(%arg0: i32) -> (i32, i32, i32) {
    %c0_i32 = arith.constant 0 : i32
    %c0_i32_0 = arith.constant 0 : i32
    %c0_i32_1 = arith.constant 0 : i32
    %c0_i32_2 = arith.constant 0 : i32
    return %c0_i32, %c0_i32_0, %c0_i32_1 : i32, i32, i32
  }
  func.func @transform_2(%arg0: i32) -> (i32, i32, i32) {
    %c0_i32 = arith.constant 0 : i32
    %c0_i32_0 = arith.constant 0 : i32
    %c0_i32_1 = arith.constant 0 : i32
    %c0_i32_2 = arith.constant 0 : i32
    return %c0_i32, %c0_i32_0, %c0_i32_1 : i32, i32, i32
  }
  func.func @transform_3(%arg0: i32) -> (i32, i32) {
    %c0_i32 = arith.constant 0 : i32
    %c0_i32_0 = arith.constant 0 : i32
    %c0_i32_1 = arith.constant 0 : i32
    return %c0_i32, %c0_i32_0 : i32, i32
  }
  func.func @transform_4(%arg0: i32) -> (i32, i32) {
    %c0_i32 = arith.constant 0 : i32
    %c0_i32_0 = arith.constant 0 : i32
    %c0_i32_1 = arith.constant 0 : i32
    return %c0_i32, %c0_i32_0 : i32, i32
  }
  func.func @transform_5(%arg0: i32) -> (i32, i32) {
    %c0_i32 = arith.constant 0 : i32
    %c0_i32_0 = arith.constant 0 : i32
    %c0_i32_1 = arith.constant 0 : i32
    return %c0_i32, %c0_i32_0 : i32, i32
  }
  func.func @transform_6(%arg0: i32) -> (i32, i32, i32) {
    %c0_i32 = arith.constant 0 : i32
    %c0_i32_0 = arith.constant 0 : i32
    %c0_i32_1 = arith.constant 0 : i32
    %c0_i32_2 = arith.constant 0 : i32
    return %c0_i32, %c0_i32_0, %c0_i32_1 : i32, i32, i32
  }
  func.func @transform_7(%arg0: i32) -> (i32, i32, i32) {
    %c0_i32 = arith.constant 0 : i32
    %c0_i32_0 = arith.constant 0 : i32
    %c0_i32_1 = arith.constant 0 : i32
    %c0_i32_2 = arith.constant 0 : i32
    return %c0_i32, %c0_i32_0, %c0_i32_1 : i32, i32, i32
  }
  func.func @transform_8(%arg0: i32) -> (i32, i32) {
    %c0_i32 = arith.constant 0 : i32
    %c0_i32_0 = arith.constant 0 : i32
    %c0_i32_1 = arith.constant 0 : i32
    return %c0_i32, %c0_i32_0 : i32, i32
  }
  func.func @transform_9(%arg0: i32) -> (i32, i32) {
    %c0_i32 = arith.constant 0 : i32
    %c0_i32_0 = arith.constant 0 : i32
    %c0_i32_1 = arith.constant 0 : i32
    return %c0_i32, %c0_i32_0 : i32, i32
  }
  func.func @transform_10(%arg0: i32) -> (i32, i32) {
    %c0_i32 = arith.constant 0 : i32
    %c0_i32_0 = arith.constant 0 : i32
    %c0_i32_1 = arith.constant 0 : i32
    return %c0_i32, %c0_i32_0 : i32, i32
  }
  func.func @transform_11(%arg0: i32) -> (i32, i32) {
    %c0_i32 = arith.constant 0 : i32
    %c0_i32_0 = arith.constant 0 : i32
    %c0_i32_1 = arith.constant 0 : i32
    return %c0_i32, %c0_i32_0 : i32, i32
  }
  func.func @transform_12(%arg0: i32) -> (i32, i32) {
    %c0_i32 = arith.constant 0 : i32
    %c0_i32_0 = arith.constant 0 : i32
    %c0_i32_1 = arith.constant 0 : i32
    return %c0_i32, %c0_i32_0 : i32, i32
  }
  func.func @transform_13(%arg0: i32) -> (i32, i32) {
    %c0_i32 = arith.constant 0 : i32
    %c0_i32_0 = arith.constant 0 : i32
    %c0_i32_1 = arith.constant 0 : i32
    return %c0_i32, %c0_i32_0 : i32, i32
  }
  func.func @transform_14(%arg0: i32) -> (i32, i32) {
    %c0_i32 = arith.constant 0 : i32
    %c0_i32_0 = arith.constant 0 : i32
    %c0_i32_1 = arith.constant 0 : i32
    return %c0_i32, %c0_i32_0 : i32, i32
  }
  func.func @transform_15(%arg0: i32) -> (i32, i32) {
    %c0_i32 = arith.constant 0 : i32
    %c0_i32_0 = arith.constant 0 : i32
    %c0_i32_1 = arith.constant 0 : i32
    return %c0_i32, %c0_i32_0 : i32, i32
  }
  func.func @transform_16(%arg0: i32) -> (i32, i32) {
    %c0_i32 = arith.constant 0 : i32
    %c0_i32_0 = arith.constant 0 : i32
    %c0_i32_1 = arith.constant 0 : i32
    return %c0_i32, %c0_i32_0 : i32, i32
  }
  func.func @transform_17(%arg0: i32) -> (i32, i32) {
    %c0_i32 = arith.constant 0 : i32
    %c0_i32_0 = arith.constant 0 : i32
    %c0_i32_1 = arith.constant 0 : i32
    return %c0_i32, %c0_i32_0 : i32, i32
  }
  func.func @transform_18(%arg0: i32) -> (i32, i32) {
    %c0_i32 = arith.constant 0 : i32
    %c0_i32_0 = arith.constant 0 : i32
    %c0_i32_1 = arith.constant 0 : i32
    return %c0_i32, %c0_i32_0 : i32, i32
  }
  func.func @transform_19(%arg0: i32) -> (i32, i32) {
    %c0_i32 = arith.constant 0 : i32
    %c0_i32_0 = arith.constant 0 : i32
    %c0_i32_1 = arith.constant 0 : i32
    return %c0_i32, %c0_i32_0 : i32, i32
  }
  func.func @transform_20(%arg0: i32) -> (i32, i32) {
    %c0_i32 = arith.constant 0 : i32
    %c0_i32_0 = arith.constant 0 : i32
    %c0_i32_1 = arith.constant 0 : i32
    return %c0_i32, %c0_i32_0 : i32, i32
  }
  func.func @transform_21(%arg0: i32) -> (i32, i32) {
    %c0_i32 = arith.constant 0 : i32
    %c0_i32_0 = arith.constant 0 : i32
    %c0_i32_1 = arith.constant 0 : i32
    return %c0_i32, %c0_i32_0 : i32, i32
  }
  func.func @transform_22(%arg0: i32) -> (i32, i32, i32) {
    %c0_i32 = arith.constant 0 : i32
    %c0_i32_0 = arith.constant 0 : i32
    %c0_i32_1 = arith.constant 0 : i32
    %c0_i32_2 = arith.constant 0 : i32
    return %c0_i32, %c0_i32_0, %c0_i32_1 : i32, i32, i32
  }
  func.func @transform_23(%arg0: i32) -> (i32, i32, i32) {
    %c0_i32 = arith.constant 0 : i32
    %c0_i32_0 = arith.constant 0 : i32
    %c0_i32_1 = arith.constant 0 : i32
    %c0_i32_2 = arith.constant 0 : i32
    return %c0_i32, %c0_i32_0, %c0_i32_1 : i32, i32, i32
  }
  func.func @transform_24(%arg0: i32) -> (i32, i32) {
    %c0_i32 = arith.constant 0 : i32
    %c0_i32_0 = arith.constant 0 : i32
    %c0_i32_1 = arith.constant 0 : i32
    return %c0_i32, %c0_i32_0 : i32, i32
  }
  func.func @transform_25(%arg0: i32) -> (i32, i32) {
    %c0_i32 = arith.constant 0 : i32
    %c0_i32_0 = arith.constant 0 : i32
    %c0_i32_1 = arith.constant 0 : i32
    return %c0_i32, %c0_i32_0 : i32, i32
  }
  func.func @transform_26(%arg0: i32) -> (i32, i32) {
    %c0_i32 = arith.constant 0 : i32
    %c0_i32_0 = arith.constant 0 : i32
    %c0_i32_1 = arith.constant 0 : i32
    return %c0_i32, %c0_i32_0 : i32, i32
  }
  func.func @transform_27(%arg0: i32) -> (i32, i32) {
    %c0_i32 = arith.constant 0 : i32
    %c0_i32_0 = arith.constant 0 : i32
    %c0_i32_1 = arith.constant 0 : i32
    return %c0_i32, %c0_i32_0 : i32, i32
  }
  func.func @transform_28(%arg0: i32) -> (i32, i32) {
    %c0_i32 = arith.constant 0 : i32
    %c0_i32_0 = arith.constant 0 : i32
    %c0_i32_1 = arith.constant 0 : i32
    return %c0_i32, %c0_i32_0 : i32, i32
  }
  func.func @transform_29(%arg0: i32) -> (i32, i32) {
    %c0_i32 = arith.constant 0 : i32
    %c0_i32_0 = arith.constant 0 : i32
    %c0_i32_1 = arith.constant 0 : i32
    return %c0_i32, %c0_i32_0 : i32, i32
  }
  func.func @transform_30(%arg0: i32) -> (i32, i32) {
    %c0_i32 = arith.constant 0 : i32
    %c0_i32_0 = arith.constant 0 : i32
    %c0_i32_1 = arith.constant 0 : i32
    return %c0_i32, %c0_i32_0 : i32, i32
  }
  func.func @transform_31(%arg0: i32) -> (i32, i32, i32) {
    %c0_i32 = arith.constant 0 : i32
    %c0_i32_0 = arith.constant 0 : i32
    %c0_i32_1 = arith.constant 0 : i32
    %c0_i32_2 = arith.constant 0 : i32
    return %c0_i32, %c0_i32_0, %c0_i32_1 : i32, i32, i32
  }
  func.func @transform_32(%arg0: i32) -> (i32, i32, i32) {
    %c0_i32 = arith.constant 0 : i32
    %c0_i32_0 = arith.constant 0 : i32
    %c0_i32_1 = arith.constant 0 : i32
    %c0_i32_2 = arith.constant 0 : i32
    return %c0_i32, %c0_i32_0, %c0_i32_1 : i32, i32, i32
  }
  func.func @transform_33(%arg0: i32) -> (i32, i32) {
    %c0_i32 = arith.constant 0 : i32
    %c0_i32_0 = arith.constant 0 : i32
    %c0_i32_1 = arith.constant 0 : i32
    return %c0_i32, %c0_i32_0 : i32, i32
  }
  func.func @transform_34(%arg0: i32) -> (i32, i32) {
    %c0_i32 = arith.constant 0 : i32
    %c0_i32_0 = arith.constant 0 : i32
    %c0_i32_1 = arith.constant 0 : i32
    return %c0_i32, %c0_i32_0 : i32, i32
  }
  func.func @transform_35(%arg0: i32) -> (i32, i32) {
    %c0_i32 = arith.constant 0 : i32
    %c0_i32_0 = arith.constant 0 : i32
    %c0_i32_1 = arith.constant 0 : i32
    return %c0_i32, %c0_i32_0 : i32, i32
  }
  func.func @transform_36(%arg0: i32) -> (i32, i32) {
    %c0_i32 = arith.constant 0 : i32
    %c0_i32_0 = arith.constant 0 : i32
    %c0_i32_1 = arith.constant 0 : i32
    return %c0_i32, %c0_i32_0 : i32, i32
  }
  func.func @transform_37(%arg0: i32) -> (i32, i32) {
    %c0_i32 = arith.constant 0 : i32
    %c0_i32_0 = arith.constant 0 : i32
    %c0_i32_1 = arith.constant 0 : i32
    return %c0_i32, %c0_i32_0 : i32, i32
  }
  func.func @transform_38(%arg0: i32) -> (i32, i32) {
    %c0_i32 = arith.constant 0 : i32
    %c0_i32_0 = arith.constant 0 : i32
    %c0_i32_1 = arith.constant 0 : i32
    return %c0_i32, %c0_i32_0 : i32, i32
  }
  func.func @transform_39(%arg0: i32) -> (i32, i32) {
    %c0_i32 = arith.constant 0 : i32
    %c0_i32_0 = arith.constant 0 : i32
    %c0_i32_1 = arith.constant 0 : i32
    return %c0_i32, %c0_i32_0 : i32, i32
  }
  func.func @transform_40(%arg0: i32) -> (i32, i32) {
    %c0_i32 = arith.constant 0 : i32
    %c0_i32_0 = arith.constant 0 : i32
    %c0_i32_1 = arith.constant 0 : i32
    return %c0_i32, %c0_i32_0 : i32, i32
  }
  func.func @transform_41(%arg0: i32) -> (i32, i32) {
    %c0_i32 = arith.constant 0 : i32
    %c0_i32_0 = arith.constant 0 : i32
    %c0_i32_1 = arith.constant 0 : i32
    return %c0_i32, %c0_i32_0 : i32, i32
  }
  func.func @transform_42(%arg0: i32) -> (i32, i32, i32) {
    %c0_i32 = arith.constant 0 : i32
    %c0_i32_0 = arith.constant 0 : i32
    %c0_i32_1 = arith.constant 0 : i32
    return %arg0, %c0_i32, %c0_i32_0 : i32, i32, i32
  }
}

</mosaic_0001>

<llo_original>
// kernel: fused_model_forward.1
$region0: #{fused_model_forward.1}
  #allocation0 [shape = 'u32[]', space=smem, size = 0x4, offset = 0x4, fixed_abs, tag = 'smem constant byte address 0x4 - core index']
  #allocation1 [shape = 'u32[72,128]{1,0:T(1,128)}', space=vmem, size = 0x9000, scoped, tag = 'internal scratch']
  %s0 = inlined_call_operand.smem [shape: u32[43], index: -1, kind: input, shape index: {}]
  %s1 = sld [smem:[%s0]]
  %s2 = scalar_lea.smem %s0, 1
  %s3 = sld [smem:[%s2]]
  %s4 = scalar_lea.smem %s0, 2
  %s5 = sld [smem:[%s4]]
  %s6 = scalar_lea.smem %s0, 3
  %s7 = sld [smem:[%s6]]
  %s8 = scalar_lea.smem %s0, 4
  %s9 = sld [smem:[%s8]]
  %s10 = scalar_lea.smem %s0, 5
  %s11 = sld [smem:[%s10]]
  %s12 = scalar_lea.smem %s0, 6
  %s13 = sld [smem:[%s12]]
  %s14 = scalar_lea.smem %s0, 7
  %s15 = sld [smem:[%s14]]
  %s16 = scalar_lea.smem %s0, 8
  %s17 = sld [smem:[%s16]]
  %s18 = scalar_lea.smem %s0, 9
  %s19 = sld [smem:[%s18]]
  %s20 = scalar_lea.smem %s0, 10
  %s21 = sld [smem:[%s20]]
  %s22 = scalar_lea.smem %s0, 11
  %s23 = sld [smem:[%s22]]
  %s24 = scalar_lea.smem %s0, 12
  %s25 = sld [smem:[%s24]]
  %s26 = scalar_lea.smem %s0, 13
  %s27 = sld [smem:[%s26]]
  %s28 = scalar_lea.smem %s0, 14
  %s29 = sld [smem:[%s28]]
  %s30 = scalar_lea.smem %s0, 15
  %s31 = sld [smem:[%s30]]
  %s32 = scalar_lea.smem %s0, 16
  %s33 = sld [smem:[%s32]]
  %s34 = scalar_lea.smem %s0, 17
  %s35 = sld [smem:[%s34]]
  %s36 = scalar_lea.smem %s0, 18
  %s37 = sld [smem:[%s36]]
  %s38 = scalar_lea.smem %s0, 19
  %s39 = sld [smem:[%s38]]
  %s40 = scalar_lea.smem %s0, 20
  %s41 = sld [smem:[%s40]]
  %s42 = scalar_lea.smem %s0, 21
  %s43 = sld [smem:[%s42]]
  %s44 = scalar_lea.smem %s0, 22
  %s45 = sld [smem:[%s44]]
  %s46 = scalar_lea.smem %s0, 23
  %s47 = sld [smem:[%s46]]
  %s48 = scalar_lea.smem %s0, 24
  %s49 = sld [smem:[%s48]]
  %s50 = scalar_lea.smem %s0, 25
  %s51 = sld [smem:[%s50]]
  %s52 = scalar_lea.smem %s0, 26
  %s53 = sld [smem:[%s52]]
  %s54 = scalar_lea.smem %s0, 27
  %s55 = sld [smem:[%s54]]
  %s56 = scalar_lea.smem %s0, 28
  %s57 = sld [smem:[%s56]]
  %s58 = scalar_lea.smem %s0, 29
  %s59 = sld [smem:[%s58]]
  %s60 = scalar_lea.smem %s0, 30
  %s61 = sld [smem:[%s60]]
  %s62 = scalar_lea.smem %s0, 31
  %s63 = sld [smem:[%s62]]
  %s64 = scalar_lea.smem %s0, 32
  %s65 = sld [smem:[%s64]]
  %s66 = scalar_lea.smem %s0, 33
  %s67 = sld [smem:[%s66]]
  %s68 = scalar_lea.smem %s0, 34
  %s69 = sld [smem:[%s68]]
  %s70 = scalar_lea.smem %s0, 35
  %s71 = sld [smem:[%s70]]
  %s72 = scalar_lea.smem %s0, 36
  %s73 = sld [smem:[%s72]]
  %s74 = scalar_lea.smem %s0, 37
  %s75 = sld [smem:[%s74]]
  %s76 = scalar_lea.smem %s0, 38
  %s77 = sld [smem:[%s76]]
  %s78 = scalar_lea.smem %s0, 39
  %s79 = sld [smem:[%s78]]
  %s80 = scalar_lea.smem %s0, 40
  %s81 = sld [smem:[%s80]]
  %s82 = scalar_lea.smem %s0, 41
  %s83 = sld [smem:[%s82]]
  %s84 = scalar_lea.smem %s0, 42
  %s85 = sld [smem:[%s84]]
  %s86 = sld [smem:[#allocation0]]
  $region317: #{fused_model_forward.1} parent=0
    _
  %s88 = ssub.s32 1, %s86
  %s89 = scalar_select 0, %s88, %s86
  $region1: #{fused_model_forward.1} parent=0
    #allocation2 [shape = 'u8[12288]{0}', space=vmem, size = 0x3000, scoped, tag = 'input window, operand 1, single buffered']
    #allocation3 [shape = 's32[2]{0}', space=sflag, size = 0x8, scoped, tag = 'scoped memory for fused_model_forward.1']
    #allocation4 [shape = 'u8[512]{0}', space=vmem, size = 0x400, scoped, tag = 'input window, operand 5, single buffered']
    #allocation5 [shape = 's32[1]{0}', space=sflag, size = 0x4, scoped, tag = 'scoped memory for fused_model_forward.1']
    #allocation6 [shape = 'u8[6144]{0}', space=vmem, size = 0x1800, scoped, tag = 'input window, operand 6, single buffered']
    #allocation7 [shape = 'u8[98304]{0}', space=vmem, size = 0x18000, scoped, tag = 'input window, operand 7, single buffered']
    #allocation8 [shape = 's32[1]{0}', space=sflag, size = 0x4, scoped, tag = 'scoped memory for fused_model_forward.1']
    #allocation9 [shape = 'u8[512]{0}', space=vmem, size = 0x400, scoped, tag = 'input window, operand 8, single buffered']
    #allocation10 [shape = 'u8[1024]{0}', space=vmem, size = 0x400, scoped, tag = 'input window, operand 11, single buffered']
    #allocation11 [shape = 's32[1]{0}', space=sflag, size = 0x4, scoped, tag = 'scoped memory for fused_model_forward.1']
    #allocation12 [shape = 'u8[32768]{0}', space=vmem, size = 0x8000, scoped, tag = 'input window, operand 12, single buffered']
    #allocation13 [shape = 'u8[1024]{0}', space=vmem, size = 0x400, scoped, tag = 'input window, operand 13, single buffered']
    #allocation14 [shape = 's32[1]{0}', space=sflag, size = 0x4, scoped, tag = 'scoped memory for fused_model_forward.1']
    #allocation15 [shape = 'u8[65536]{0}', space=vmem, size = 0x10000, scoped, tag = 'input window, operand 14, single buffered']
    #allocation16 [shape = 'u8[512]{0}', space=vmem, size = 0x400, scoped, tag = 'input window, operand 16, single buffered']
    #allocation17 [shape = 's32[1]{0}', space=sflag, size = 0x4, scoped, tag = 'scoped memory for fused_model_forward.1']
    #allocation18 [shape = 'u8[512]{0}', space=vmem, size = 0x400, scoped, tag = 'input window, operand 17, single buffered']
    #allocation19 [shape = 'u8[65536]{0}', space=vmem, size = 0x10000, scoped, tag = 'input window, operand 18, single buffered']
    #allocation20 [shape = 's32[1]{0}', space=sflag, size = 0x4, scoped, tag = 'scoped memory for fused_model_forward.1']
    #allocation21 [shape = 'u8[65536]{0}', space=vmem, size = 0x10000, scoped, tag = 'input window, operand 20, single buffered']
    #allocation22 [shape = 'u8[3072]{0}', space=vmem, size = 0xc00, scoped, tag = 'input window, operand 22, single buffered']
    #allocation23 [shape = 's32[1]{0}', space=sflag, size = 0x4, scoped, tag = 'scoped memory for fused_model_forward.1']
    #allocation24 [shape = 'u8[98304]{0}', space=vmem, size = 0x18000, scoped, tag = 'input window, operand 23, single buffered']
    #allocation25 [shape = 'u8[512]{0}', space=vmem, size = 0x400, scoped, tag = 'input window, operand 24, single buffered']
    #allocation26 [shape = 's32[1]{0}', space=sflag, size = 0x4, scoped, tag = 'scoped memory for fused_model_forward.1']
    #allocation27 [shape = 'u8[512]{0}', space=vmem, size = 0x400, scoped, tag = 'input window, operand 25, single buffered']
    #allocation28 [shape = 'u8[512]{0}', space=vmem, size = 0x400, scoped, tag = 'input window, operand 26, single buffered']
    #allocation29 [shape = 's32[1]{0}', space=sflag, size = 0x4, scoped, tag = 'scoped memory for fused_model_forward.1']
    #allocation30 [shape = 'u8[49152]{0}', space=vmem, size = 0xc000, scoped, tag = 'input window, operand 27, single buffered']
    #allocation31 [shape = 'u8[49152]{0}', space=vmem, size = 0xc000, scoped, tag = 'input window, operand 29, single buffered']
    #allocation32 [shape = 's32[1]{0}', space=sflag, size = 0x4, scoped, tag = 'scoped memory for fused_model_forward.1']
    #allocation33 [shape = 'u8[1536]{0}', space=vmem, size = 0x800, scoped, tag = 'input window, operand 31, single buffered']
    #allocation34 [shape = 'u8[73728]{0}', space=vmem, size = 0x12000, scoped, tag = 'input window, operand 32, single buffered']
    #allocation35 [shape = 's32[1]{0}', space=sflag, size = 0x4, scoped, tag = 'scoped memory for fused_model_forward.1']
    #allocation36 [shape = 'u8[512]{0}', space=vmem, size = 0x400, scoped, tag = 'input window, operand 33, single buffered']
    #allocation37 [shape = 'u8[512]{0}', space=vmem, size = 0x400, scoped, tag = 'input window, operand 34, single buffered']
    #allocation38 [shape = 's32[1]{0}', space=sflag, size = 0x4, scoped, tag = 'scoped memory for fused_model_forward.1']
    #allocation39 [shape = 'u8[512]{0}', space=vmem, size = 0x400, scoped, tag = 'input window, operand 35, single buffered']
    #allocation40 [shape = 'u8[16384]{0}', space=vmem, size = 0x4000, scoped, tag = 'input window, operand 36, single buffered']
    #allocation41 [shape = 's32[1]{0}', space=sflag, size = 0x4, scoped, tag = 'scoped memory for fused_model_forward.1']
    #allocation42 [shape = 'u8[32768]{0}', space=vmem, size = 0x8000, scoped, tag = 'input window, operand 38, single buffered']
    #allocation43 [shape = 'u8[16384]{0}', space=vmem, size = 0x4000, scoped, tag = 'input window, operand 40, single buffered']
    #allocation44 [shape = 's32[1]{0}', space=sflag, size = 0x4, scoped, tag = 'scoped memory for fused_model_forward.1']
    #allocation45 [shape = 'u8[512]{0}', space=vmem, size = 0x400, scoped, tag = 'input window, operand 41, single buffered']
    %90 = vsyncpa [#allocation3], 0
    %91 = vsyncpa [#allocation5], 0
    %92 = vsyncpa [#allocation8], 0
    %93 = vsyncpa [#allocation11], 0
    %94 = vsyncpa [#allocation14], 0
    %95 = vsyncpa [#allocation17], 0
    %96 = vsyncpa [#allocation20], 0
    %97 = vsyncpa [#allocation23], 0
    %98 = vsyncpa [#allocation26], 0
    %99 = vsyncpa [#allocation29], 0
    %100 = vsyncpa [#allocation32], 0
    %101 = vsyncpa [#allocation35], 0
    %102 = vsyncpa [#allocation38], 0
    %103 = vsyncpa [#allocation41], 0
    %104 = vsyncpa [#allocation44], 0
    loop: start=0, step=1, limit=4
    $region2: #{fused_model_forward.1} parent=1 // loop_pre_header
      _
    $region3: #{fused_model_forward.1} parent=1 // loop_header
      %s106 = sphi 0, %s110
      %p107 = scmp.ge.s32.totalorder %s106, 4
      %s116 = sphi 0, %s118
      %s119 = sphi 0, %s116
      %s120 = sphi 0, %s119
      %s136 = sphi 0, %s120
      %s140 = sphi 0, %s140
      %s142 = sphi 0, %s140
      %s143 = sphi 0, %s142
      %s157 = sphi 0, %s143
      %s161 = sphi 0, %s161
      %s163 = sphi 0, %s161
      %s164 = sphi 0, %s163
      %s178 = sphi 0, %s164
      %s182 = sphi 0, %s182
      %s184 = sphi 0, %s182
      %s185 = sphi 0, %s184
      %s199 = sphi 0, %s185
      %s203 = sphi 0, %s203
      %s205 = sphi 0, %s203
      %s206 = sphi 0, %s205
      %s220 = sphi 0, %s206
      %s224 = sphi 0, %s224
      %s226 = sphi 0, %s224
      %s227 = sphi 0, %s226
      %s241 = sphi 0, %s227
      %s245 = sphi 0, %s245
      %s247 = sphi 0, %s245
      %s248 = sphi 0, %s247
      %s262 = sphi 0, %s248
      %s266 = sphi 0, %s266
      %s268 = sphi 0, %s266
      %s269 = sphi 0, %s268
      %s283 = sphi 0, %s269
      %s287 = sphi 0, %s287
      %s289 = sphi 0, %s287
      %s290 = sphi 0, %s289
      %s304 = sphi 0, %s290
      %s308 = sphi 0, %s308
      %s310 = sphi 0, %s308
      %s311 = sphi 0, %s310
      %s325 = sphi 0, %s311
      %s329 = sphi 0, %s329
      %s331 = sphi 0, %s329
      %s332 = sphi 0, %s331
      %s346 = sphi 0, %s332
      %s350 = sphi 0, %s350
      %s352 = sphi 0, %s350
      %s353 = sphi 0, %s352
      %s367 = sphi 0, %s353
      %s371 = sphi 0, %s371
      %s373 = sphi 0, %s371
      %s374 = sphi 0, %s373
      %s388 = sphi 0, %s374
      %s392 = sphi 0, %s392
      %s394 = sphi 0, %s392
      %s395 = sphi 0, %s394
      %s409 = sphi 0, %s395
      %s413 = sphi 0, %s413
      %s415 = sphi 0, %s413
      %s416 = sphi 0, %s415
      %s430 = sphi 0, %s416
      %s434 = sphi 0, %s434
      %s436 = sphi 0, %s434
      %s437 = sphi 0, %s436
      %s451 = sphi 0, %s437
      %s455 = sphi 0, %s455
      %s457 = sphi 0, %s455
      %s458 = sphi 0, %s457
      %s472 = sphi 0, %s458
      %s476 = sphi 0, %s476
      %s478 = sphi 0, %s476
      %s479 = sphi 0, %s478
      %s493 = sphi 0, %s479
      %s497 = sphi 0, %s497
      %s499 = sphi 0, %s497
      %s500 = sphi 0, %s499
      %s514 = sphi 0, %s500
      %s518 = sphi 0, %s518
      %s520 = sphi 0, %s518
      %s521 = sphi 0, %s520
      %s535 = sphi 0, %s521
      %s539 = sphi 0, %s539
      %s541 = sphi 0, %s539
      %s542 = sphi 0, %s541
      %s556 = sphi 0, %s542
      %s560 = sphi 0, %s560
      %s562 = sphi 0, %s560
      %s563 = sphi 0, %s562
      %s577 = sphi 0, %s563
      %s581 = sphi 0, %s581
      %s583 = sphi 0, %s581
      %s584 = sphi 0, %s583
      %s598 = sphi 0, %s584
      %s602 = sphi 0, %s602
      %s604 = sphi 0, %s602
      %s605 = sphi 0, %s604
      %s619 = sphi 0, %s605
      %s623 = sphi 0, %s623
      %s625 = sphi 0, %s623
      %s626 = sphi 0, %s625
      %s640 = sphi 0, %s626
      %s644 = sphi 0, %s644
      %s646 = sphi 0, %s644
      %s647 = sphi 0, %s646
      %s661 = sphi 0, %s647
      %s665 = sphi 0, %s665
      %s667 = sphi 0, %s665
      %s668 = sphi 0, %s667
      %s682 = sphi 0, %s668
      %s686 = sphi 0, %s686
      %s688 = sphi 0, %s686
      %s689 = sphi 0, %s688
      %s703 = sphi 0, %s689
      %s707 = sphi 0, %s707
      %s709 = sphi 0, %s707
      %s710 = sphi 0, %s709
      %s724 = sphi 0, %s710
      %s728 = sphi 0, %s728
      %s730 = sphi 0, %s728
      %s731 = sphi 0, %s730
      %s745 = sphi 0, %s731
      %s749 = sphi 0, %s749
      %s751 = sphi 0, %s749
      %s752 = sphi 0, %s751
      %s766 = sphi 0, %s752
      %s770 = sphi 0, %s770
      %s772 = sphi 0, %s770
      %s773 = sphi 0, %s772
      %s787 = sphi 0, %s773
      %s791 = sphi 0, %s791
      %s793 = sphi 0, %s791
      %s794 = sphi 0, %s793
      %s808 = sphi 0, %s794
      %s812 = sphi 0, %s812
      %s814 = sphi 0, %s812
      %s815 = sphi 0, %s814
      %s829 = sphi 0, %s815
      %s833 = sphi 0, %s833
      %s835 = sphi 0, %s833
      %s836 = sphi 0, %s835
      %s850 = sphi 0, %s836
      %s854 = sphi 0, %s854
      %s856 = sphi 0, %s854
      %s857 = sphi 0, %s856
      %s871 = sphi 0, %s857
      %s875 = sphi 0, %s875
      %s877 = sphi 0, %s875
      %s878 = sphi 0, %s877
      %s892 = sphi 0, %s878
      %s896 = sphi 0, %s896
      %s898 = sphi 0, %s896
      %s899 = sphi 0, %s898
      %s913 = sphi 0, %s899
      %s917 = sphi 0, %s917
      %s919 = sphi 0, %s917
      %s920 = sphi 0, %s919
      %s934 = sphi 0, %s920
      %s938 = sphi 0, %s938
      %s940 = sphi 0, %s938
      %s941 = sphi 0, %s940
      %s955 = sphi 0, %s941
      %s959 = sphi 0, %s959
      %s961 = sphi 0, %s959
      %s962 = sphi 0, %s961
      %s976 = sphi 0, %s962
      %s980 = sphi 0, %s980
      %s982 = sphi 0, %s980
      %s983 = sphi 0, %s982
      %s997 = sphi 0, %s983
      %s1003 = sphi 0, %s1005
      %s1006 = sphi 0, %s1003
      %s1007 = sphi 0, %s1006
      %s1023 = sphi 0, %s1007
    $region4: #{fused_model_forward.1} parent=1 // loop_header_branch
      %109 = sbr.rel (%p107) target = $region8
    $region5: #{fused_model_forward.1} parent=1 // loop_body
      %s111 = ssub.s32 %s106, 1
      %s112 = ssub.s32 %s106, 2
      %s113 = sadd.s32 %s106, 1
      %s114 = ssub.s32 %s106, %s113
      %p115 = scmp.eq.s32.totalorder %s114, 0
      %s117 = sadd.s32 %s116, 1
      %s118 = scalar_select %p115, %s116, %s117
      %p121 = pneg %p115
      %p122 = scmp.eq.s32.totalorder %s106, 1
      %p123 = por %p121, %p122
      %p124 = scmp.ne.s32.totalorder %s116, %s119
      %p125 = scmp.eq.s32.totalorder %s106, 0
      %p126 = por %p124, %p125
      %p127 = scmp.ne.s32.totalorder %s116, %s119
      %p128 = scmp.eq.s32.totalorder %s111, 1
      %p129 = por %p127, %p128
      %p130 = scmp.ne.s32.totalorder %s119, %s120
      %p131 = scmp.eq.s32.totalorder %s111, 0
      %p132 = por %p130, %p131
      %p133 = scmp.ne.s32.totalorder %s119, %s120
      %p134 = scmp.eq.s32.totalorder %s112, 1
      %p135 = por %p133, %p134
      %p137 = scmp.ne.s32.totalorder %s120, %s136
      %p138 = scmp.eq.s32.totalorder %s112, 0
      %p139 = por %p137, %p138
      %s141 = sadd.s32 %s140, 1
      %p144 = scmp.eq.s32.totalorder %s106, 1
      %p145 = scmp.ne.s32.totalorder %s140, %s142
      %p146 = scmp.eq.s32.totalorder %s106, 0
      %p147 = por %p145, %p146
      %p148 = scmp.ne.s32.totalorder %s140, %s142
      %p149 = scmp.eq.s32.totalorder %s111, 1
      %p150 = por %p148, %p149
      %p151 = scmp.ne.s32.totalorder %s142, %s143
      %p152 = scmp.eq.s32.totalorder %s111, 0
      %p153 = por %p151, %p152
      %p154 = scmp.ne.s32.totalorder %s142, %s143
      %p155 = scmp.eq.s32.totalorder %s112, 1
      %p156 = por %p154, %p155
      %p158 = scmp.ne.s32.totalorder %s143, %s157
      %p159 = scmp.eq.s32.totalorder %s112, 0
      %p160 = por %p158, %p159
      %s162 = sadd.s32 %s161, 1
      %p165 = scmp.eq.s32.totalorder %s106, 1
      %p166 = scmp.ne.s32.totalorder %s161, %s163
      %p167 = scmp.eq.s32.totalorder %s106, 0
      %p168 = por %p166, %p167
      %p169 = scmp.ne.s32.totalorder %s161, %s163
      %p170 = scmp.eq.s32.totalorder %s111, 1
      %p171 = por %p169, %p170
      %p172 = scmp.ne.s32.totalorder %s163, %s164
      %p173 = scmp.eq.s32.totalorder %s111, 0
      %p174 = por %p172, %p173
      %p175 = scmp.ne.s32.totalorder %s163, %s164
      %p176 = scmp.eq.s32.totalorder %s112, 1
      %p177 = por %p175, %p176
      %p179 = scmp.ne.s32.totalorder %s164, %s178
      %p180 = scmp.eq.s32.totalorder %s112, 0
      %p181 = por %p179, %p180
      %s183 = sadd.s32 %s182, 1
      %p186 = scmp.eq.s32.totalorder %s106, 1
      %p187 = scmp.ne.s32.totalorder %s182, %s184
      %p188 = scmp.eq.s32.totalorder %s106, 0
      %p189 = por %p187, %p188
      %p190 = scmp.ne.s32.totalorder %s182, %s184
      %p191 = scmp.eq.s32.totalorder %s111, 1
      %p192 = por %p190, %p191
      %p193 = scmp.ne.s32.totalorder %s184, %s185
      %p194 = scmp.eq.s32.totalorder %s111, 0
      %p195 = por %p193, %p194
      %p196 = scmp.ne.s32.totalorder %s184, %s185
      %p197 = scmp.eq.s32.totalorder %s112, 1
      %p198 = por %p196, %p197
      %p200 = scmp.ne.s32.totalorder %s185, %s199
      %p201 = scmp.eq.s32.totalorder %s112, 0
      %p202 = por %p200, %p201
      %s204 = sadd.s32 %s203, 1
      %p207 = scmp.eq.s32.totalorder %s106, 1
      %p208 = scmp.ne.s32.totalorder %s203, %s205
      %p209 = scmp.eq.s32.totalorder %s106, 0
      %p210 = por %p208, %p209
      %p211 = scmp.ne.s32.totalorder %s203, %s205
      %p212 = scmp.eq.s32.totalorder %s111, 1
      %p213 = por %p211, %p212
      %p214 = scmp.ne.s32.totalorder %s205, %s206
      %p215 = scmp.eq.s32.totalorder %s111, 0
      %p216 = por %p214, %p215
      %p217 = scmp.ne.s32.totalorder %s205, %s206
      %p218 = scmp.eq.s32.totalorder %s112, 1
      %p219 = por %p217, %p218
      %p221 = scmp.ne.s32.totalorder %s206, %s220
      %p222 = scmp.eq.s32.totalorder %s112, 0
      %p223 = por %p221, %p222
      %s225 = sadd.s32 %s224, 1
      %p228 = scmp.eq.s32.totalorder %s106, 1
      %p229 = scmp.ne.s32.totalorder %s224, %s226
      %p230 = scmp.eq.s32.totalorder %s106, 0
      %p231 = por %p229, %p230
      %p232 = scmp.ne.s32.totalorder %s224, %s226
      %p233 = scmp.eq.s32.totalorder %s111, 1
      %p234 = por %p232, %p233
      %p235 = scmp.ne.s32.totalorder %s226, %s227
      %p236 = scmp.eq.s32.totalorder %s111, 0
      %p237 = por %p235, %p236
      %p238 = scmp.ne.s32.totalorder %s226, %s227
      %p239 = scmp.eq.s32.totalorder %s112, 1
      %p240 = por %p238, %p239
      %p242 = scmp.ne.s32.totalorder %s227, %s241
      %p243 = scmp.eq.s32.totalorder %s112, 0
      %p244 = por %p242, %p243
      %s246 = sadd.s32 %s245, 1
      %p249 = scmp.eq.s32.totalorder %s106, 1
      %p250 = scmp.ne.s32.totalorder %s245, %s247
      %p251 = scmp.eq.s32.totalorder %s106, 0
      %p252 = por %p250, %p251
      %p253 = scmp.ne.s32.totalorder %s245, %s247
      %p254 = scmp.eq.s32.totalorder %s111, 1
      %p255 = por %p253, %p254
      %p256 = scmp.ne.s32.totalorder %s247, %s248
      %p257 = scmp.eq.s32.totalorder %s111, 0
      %p258 = por %p256, %p257
      %p259 = scmp.ne.s32.totalorder %s247, %s248
      %p260 = scmp.eq.s32.totalorder %s112, 1
      %p261 = por %p259, %p260
      %p263 = scmp.ne.s32.totalorder %s248, %s262
      %p264 = scmp.eq.s32.totalorder %s112, 0
      %p265 = por %p263, %p264
      %s267 = sadd.s32 %s266, 1
      %p270 = scmp.eq.s32.totalorder %s106, 1
      %p271 = scmp.ne.s32.totalorder %s266, %s268
      %p272 = scmp.eq.s32.totalorder %s106, 0
      %p273 = por %p271, %p272
      %p274 = scmp.ne.s32.totalorder %s266, %s268
      %p275 = scmp.eq.s32.totalorder %s111, 1
      %p276 = por %p274, %p275
      %p277 = scmp.ne.s32.totalorder %s268, %s269
      %p278 = scmp.eq.s32.totalorder %s111, 0
      %p279 = por %p277, %p278
      %p280 = scmp.ne.s32.totalorder %s268, %s269
      %p281 = scmp.eq.s32.totalorder %s112, 1
      %p282 = por %p280, %p281
      %p284 = scmp.ne.s32.totalorder %s269, %s283
      %p285 = scmp.eq.s32.totalorder %s112, 0
      %p286 = por %p284, %p285
      %s288 = sadd.s32 %s287, 1
      %p291 = scmp.eq.s32.totalorder %s106, 1
      %p292 = scmp.ne.s32.totalorder %s287, %s289
      %p293 = scmp.eq.s32.totalorder %s106, 0
      %p294 = por %p292, %p293
      %p295 = scmp.ne.s32.totalorder %s287, %s289
      %p296 = scmp.eq.s32.totalorder %s111, 1
      %p297 = por %p295, %p296
      %p298 = scmp.ne.s32.totalorder %s289, %s290
      %p299 = scmp.eq.s32.totalorder %s111, 0
      %p300 = por %p298, %p299
      %p301 = scmp.ne.s32.totalorder %s289, %s290
      %p302 = scmp.eq.s32.totalorder %s112, 1
      %p303 = por %p301, %p302
      %p305 = scmp.ne.s32.totalorder %s290, %s304
      %p306 = scmp.eq.s32.totalorder %s112, 0
      %p307 = por %p305, %p306
      %s309 = sadd.s32 %s308, 1
      %p312 = scmp.eq.s32.totalorder %s106, 1
      %p313 = scmp.ne.s32.totalorder %s308, %s310
      %p314 = scmp.eq.s32.totalorder %s106, 0
      %p315 = por %p313, %p314
      %p316 = scmp.ne.s32.totalorder %s308, %s310
      %p317 = scmp.eq.s32.totalorder %s111, 1
      %p318 = por %p316, %p317
      %p319 = scmp.ne.s32.totalorder %s310, %s311
      %p320 = scmp.eq.s32.totalorder %s111, 0
      %p321 = por %p319, %p320
      %p322 = scmp.ne.s32.totalorder %s310, %s311
      %p323 = scmp.eq.s32.totalorder %s112, 1
      %p324 = por %p322, %p323
      %p326 = scmp.ne.s32.totalorder %s311, %s325
      %p327 = scmp.eq.s32.totalorder %s112, 0
      %p328 = por %p326, %p327
      %s330 = sadd.s32 %s329, 1
      %p333 = scmp.eq.s32.totalorder %s106, 1
      %p334 = scmp.ne.s32.totalorder %s329, %s331
      %p335 = scmp.eq.s32.totalorder %s106, 0
      %p336 = por %p334, %p335
      %p337 = scmp.ne.s32.totalorder %s329, %s331
      %p338 = scmp.eq.s32.totalorder %s111, 1
      %p339 = por %p337, %p338
      %p340 = scmp.ne.s32.totalorder %s331, %s332
      %p341 = scmp.eq.s32.totalorder %s111, 0
      %p342 = por %p340, %p341
      %p343 = scmp.ne.s32.totalorder %s331, %s332
      %p344 = scmp.eq.s32.totalorder %s112, 1
      %p345 = por %p343, %p344
      %p347 = scmp.ne.s32.totalorder %s332, %s346
      %p348 = scmp.eq.s32.totalorder %s112, 0
      %p349 = por %p347, %p348
      %s351 = sadd.s32 %s350, 1
      %p354 = scmp.eq.s32.totalorder %s106, 1
      %p355 = scmp.ne.s32.totalorder %s350, %s352
      %p356 = scmp.eq.s32.totalorder %s106, 0
      %p357 = por %p355, %p356
      %p358 = scmp.ne.s32.totalorder %s350, %s352
      %p359 = scmp.eq.s32.totalorder %s111, 1
      %p360 = por %p358, %p359
      %p361 = scmp.ne.s32.totalorder %s352, %s353
      %p362 = scmp.eq.s32.totalorder %s111, 0
      %p363 = por %p361, %p362
      %p364 = scmp.ne.s32.totalorder %s352, %s353
      %p365 = scmp.eq.s32.totalorder %s112, 1
      %p366 = por %p364, %p365
      %p368 = scmp.ne.s32.totalorder %s353, %s367
      %p369 = scmp.eq.s32.totalorder %s112, 0
      %p370 = por %p368, %p369
      %s372 = sadd.s32 %s371, 1
      %p375 = scmp.eq.s32.totalorder %s106, 1
      %p376 = scmp.ne.s32.totalorder %s371, %s373
      %p377 = scmp.eq.s32.totalorder %s106, 0
      %p378 = por %p376, %p377
      %p379 = scmp.ne.s32.totalorder %s371, %s373
      %p380 = scmp.eq.s32.totalorder %s111, 1
      %p381 = por %p379, %p380
      %p382 = scmp.ne.s32.totalorder %s373, %s374
      %p383 = scmp.eq.s32.totalorder %s111, 0
      %p384 = por %p382, %p383
      %p385 = scmp.ne.s32.totalorder %s373, %s374
      %p386 = scmp.eq.s32.totalorder %s112, 1
      %p387 = por %p385, %p386
      %p389 = scmp.ne.s32.totalorder %s374, %s388
      %p390 = scmp.eq.s32.totalorder %s112, 0
      %p391 = por %p389, %p390
      %s393 = sadd.s32 %s392, 1
      %p396 = scmp.eq.s32.totalorder %s106, 1
      %p397 = scmp.ne.s32.totalorder %s392, %s394
      %p398 = scmp.eq.s32.totalorder %s106, 0
      %p399 = por %p397, %p398
      %p400 = scmp.ne.s32.totalorder %s392, %s394
      %p401 = scmp.eq.s32.totalorder %s111, 1
      %p402 = por %p400, %p401
      %p403 = scmp.ne.s32.totalorder %s394, %s395
      %p404 = scmp.eq.s32.totalorder %s111, 0
      %p405 = por %p403, %p404
      %p406 = scmp.ne.s32.totalorder %s394, %s395
      %p407 = scmp.eq.s32.totalorder %s112, 1
      %p408 = por %p406, %p407
      %p410 = scmp.ne.s32.totalorder %s395, %s409
      %p411 = scmp.eq.s32.totalorder %s112, 0
      %p412 = por %p410, %p411
      %s414 = sadd.s32 %s413, 1
      %p417 = scmp.eq.s32.totalorder %s106, 1
      %p418 = scmp.ne.s32.totalorder %s413, %s415
      %p419 = scmp.eq.s32.totalorder %s106, 0
      %p420 = por %p418, %p419
      %p421 = scmp.ne.s32.totalorder %s413, %s415
      %p422 = scmp.eq.s32.totalorder %s111, 1
      %p423 = por %p421, %p422
      %p424 = scmp.ne.s32.totalorder %s415, %s416
      %p425 = scmp.eq.s32.totalorder %s111, 0
      %p426 = por %p424, %p425
      %p427 = scmp.ne.s32.totalorder %s415, %s416
      %p428 = scmp.eq.s32.totalorder %s112, 1
      %p429 = por %p427, %p428
      %p431 = scmp.ne.s32.totalorder %s416, %s430
      %p432 = scmp.eq.s32.totalorder %s112, 0
      %p433 = por %p431, %p432
      %s435 = sadd.s32 %s434, 1
      %p438 = scmp.eq.s32.totalorder %s106, 1
      %p439 = scmp.ne.s32.totalorder %s434, %s436
      %p440 = scmp.eq.s32.totalorder %s106, 0
      %p441 = por %p439, %p440
      %p442 = scmp.ne.s32.totalorder %s434, %s436
      %p443 = scmp.eq.s32.totalorder %s111, 1
      %p444 = por %p442, %p443
      %p445 = scmp.ne.s32.totalorder %s436, %s437
      %p446 = scmp.eq.s32.totalorder %s111, 0
      %p447 = por %p445, %p446
      %p448 = scmp.ne.s32.totalorder %s436, %s437
      %p449 = scmp.eq.s32.totalorder %s112, 1
      %p450 = por %p448, %p449
      %p452 = scmp.ne.s32.totalorder %s437, %s451
      %p453 = scmp.eq.s32.totalorder %s112, 0
      %p454 = por %p452, %p453
      %s456 = sadd.s32 %s455, 1
      %p459 = scmp.eq.s32.totalorder %s106, 1
      %p460 = scmp.ne.s32.totalorder %s455, %s457
      %p461 = scmp.eq.s32.totalorder %s106, 0
      %p462 = por %p460, %p461
      %p463 = scmp.ne.s32.totalorder %s455, %s457
      %p464 = scmp.eq.s32.totalorder %s111, 1
      %p465 = por %p463, %p464
      %p466 = scmp.ne.s32.totalorder %s457, %s458
      %p467 = scmp.eq.s32.totalorder %s111, 0
      %p468 = por %p466, %p467
      %p469 = scmp.ne.s32.totalorder %s457, %s458
      %p470 = scmp.eq.s32.totalorder %s112, 1
      %p471 = por %p469, %p470
      %p473 = scmp.ne.s32.totalorder %s458, %s472
      %p474 = scmp.eq.s32.totalorder %s112, 0
      %p475 = por %p473, %p474
      %s477 = sadd.s32 %s476, 1
      %p480 = scmp.eq.s32.totalorder %s106, 1
      %p481 = scmp.ne.s32.totalorder %s476, %s478
      %p482 = scmp.eq.s32.totalorder %s106, 0
      %p483 = por %p481, %p482
      %p484 = scmp.ne.s32.totalorder %s476, %s478
      %p485 = scmp.eq.s32.totalorder %s111, 1
      %p486 = por %p484, %p485
      %p487 = scmp.ne.s32.totalorder %s478, %s479
      %p488 = scmp.eq.s32.totalorder %s111, 0
      %p489 = por %p487, %p488
      %p490 = scmp.ne.s32.totalorder %s478, %s479
      %p491 = scmp.eq.s32.totalorder %s112, 1
      %p492 = por %p490, %p491
      %p494 = scmp.ne.s32.totalorder %s479, %s493
      %p495 = scmp.eq.s32.totalorder %s112, 0
      %p496 = por %p494, %p495
      %s498 = sadd.s32 %s497, 1
      %p501 = scmp.eq.s32.totalorder %s106, 1
      %p502 = scmp.ne.s32.totalorder %s497, %s499
      %p503 = scmp.eq.s32.totalorder %s106, 0
      %p504 = por %p502, %p503
      %p505 = scmp.ne.s32.totalorder %s497, %s499
      %p506 = scmp.eq.s32.totalorder %s111, 1
      %p507 = por %p505, %p506
      %p508 = scmp.ne.s32.totalorder %s499, %s500
      %p509 = scmp.eq.s32.totalorder %s111, 0
      %p510 = por %p508, %p509
      %p511 = scmp.ne.s32.totalorder %s499, %s500
      %p512 = scmp.eq.s32.totalorder %s112, 1
      %p513 = por %p511, %p512
      %p515 = scmp.ne.s32.totalorder %s500, %s514
      %p516 = scmp.eq.s32.totalorder %s112, 0
      %p517 = por %p515, %p516
      %s519 = sadd.s32 %s518, 1
      %p522 = scmp.eq.s32.totalorder %s106, 1
      %p523 = scmp.ne.s32.totalorder %s518, %s520
      %p524 = scmp.eq.s32.totalorder %s106, 0
      %p525 = por %p523, %p524
      %p526 = scmp.ne.s32.totalorder %s518, %s520
      %p527 = scmp.eq.s32.totalorder %s111, 1
      %p528 = por %p526, %p527
      %p529 = scmp.ne.s32.totalorder %s520, %s521
      %p530 = scmp.eq.s32.totalorder %s111, 0
      %p531 = por %p529, %p530
      %p532 = scmp.ne.s32.totalorder %s520, %s521
      %p533 = scmp.eq.s32.totalorder %s112, 1
      %p534 = por %p532, %p533
      %p536 = scmp.ne.s32.totalorder %s521, %s535
      %p537 = scmp.eq.s32.totalorder %s112, 0
      %p538 = por %p536, %p537
      %s540 = sadd.s32 %s539, 1
      %p543 = scmp.eq.s32.totalorder %s106, 1
      %p544 = scmp.ne.s32.totalorder %s539, %s541
      %p545 = scmp.eq.s32.totalorder %s106, 0
      %p546 = por %p544, %p545
      %p547 = scmp.ne.s32.totalorder %s539, %s541
      %p548 = scmp.eq.s32.totalorder %s111, 1
      %p549 = por %p547, %p548
      %p550 = scmp.ne.s32.totalorder %s541, %s542
      %p551 = scmp.eq.s32.totalorder %s111, 0
      %p552 = por %p550, %p551
      %p553 = scmp.ne.s32.totalorder %s541, %s542
      %p554 = scmp.eq.s32.totalorder %s112, 1
      %p555 = por %p553, %p554
      %p557 = scmp.ne.s32.totalorder %s542, %s556
      %p558 = scmp.eq.s32.totalorder %s112, 0
      %p559 = por %p557, %p558
      %s561 = sadd.s32 %s560, 1
      %p564 = scmp.eq.s32.totalorder %s106, 1
      %p565 = scmp.ne.s32.totalorder %s560, %s562
      %p566 = scmp.eq.s32.totalorder %s106, 0
      %p567 = por %p565, %p566
      %p568 = scmp.ne.s32.totalorder %s560, %s562
      %p569 = scmp.eq.s32.totalorder %s111, 1
      %p570 = por %p568, %p569
      %p571 = scmp.ne.s32.totalorder %s562, %s563
      %p572 = scmp.eq.s32.totalorder %s111, 0
      %p573 = por %p571, %p572
      %p574 = scmp.ne.s32.totalorder %s562, %s563
      %p575 = scmp.eq.s32.totalorder %s112, 1
      %p576 = por %p574, %p575
      %p578 = scmp.ne.s32.totalorder %s563, %s577
      %p579 = scmp.eq.s32.totalorder %s112, 0
      %p580 = por %p578, %p579
      %s582 = sadd.s32 %s581, 1
      %p585 = scmp.eq.s32.totalorder %s106, 1
      %p586 = scmp.ne.s32.totalorder %s581, %s583
      %p587 = scmp.eq.s32.totalorder %s106, 0
      %p588 = por %p586, %p587
      %p589 = scmp.ne.s32.totalorder %s581, %s583
      %p590 = scmp.eq.s32.totalorder %s111, 1
      %p591 = por %p589, %p590
      %p592 = scmp.ne.s32.totalorder %s583, %s584
      %p593 = scmp.eq.s32.totalorder %s111, 0
      %p594 = por %p592, %p593
      %p595 = scmp.ne.s32.totalorder %s583, %s584
      %p596 = scmp.eq.s32.totalorder %s112, 1
      %p597 = por %p595, %p596
      %p599 = scmp.ne.s32.totalorder %s584, %s598
      %p600 = scmp.eq.s32.totalorder %s112, 0
      %p601 = por %p599, %p600
      %s603 = sadd.s32 %s602, 1
      %p606 = scmp.eq.s32.totalorder %s106, 1
      %p607 = scmp.ne.s32.totalorder %s602, %s604
      %p608 = scmp.eq.s32.totalorder %s106, 0
      %p609 = por %p607, %p608
      %p610 = scmp.ne.s32.totalorder %s602, %s604
      %p611 = scmp.eq.s32.totalorder %s111, 1
      %p612 = por %p610, %p611
      %p613 = scmp.ne.s32.totalorder %s604, %s605
      %p614 = scmp.eq.s32.totalorder %s111, 0
      %p615 = por %p613, %p614
      %p616 = scmp.ne.s32.totalorder %s604, %s605
      %p617 = scmp.eq.s32.totalorder %s112, 1
      %p618 = por %p616, %p617
      %p620 = scmp.ne.s32.totalorder %s605, %s619
      %p621 = scmp.eq.s32.totalorder %s112, 0
      %p622 = por %p620, %p621
      %s624 = sadd.s32 %s623, 1
      %p627 = scmp.eq.s32.totalorder %s106, 1
      %p628 = scmp.ne.s32.totalorder %s623, %s625
      %p629 = scmp.eq.s32.totalorder %s106, 0
      %p630 = por %p628, %p629
      %p631 = scmp.ne.s32.totalorder %s623, %s625
      %p632 = scmp.eq.s32.totalorder %s111, 1
      %p633 = por %p631, %p632
      %p634 = scmp.ne.s32.totalorder %s625, %s626
      %p635 = scmp.eq.s32.totalorder %s111, 0
      %p636 = por %p634, %p635
      %p637 = scmp.ne.s32.totalorder %s625, %s626
      %p638 = scmp.eq.s32.totalorder %s112, 1
      %p639 = por %p637, %p638
      %p641 = scmp.ne.s32.totalorder %s626, %s640
      %p642 = scmp.eq.s32.totalorder %s112, 0
      %p643 = por %p641, %p642
      %s645 = sadd.s32 %s644, 1
      %p648 = scmp.eq.s32.totalorder %s106, 1
      %p649 = scmp.ne.s32.totalorder %s644, %s646
      %p650 = scmp.eq.s32.totalorder %s106, 0
      %p651 = por %p649, %p650
      %p652 = scmp.ne.s32.totalorder %s644, %s646
      %p653 = scmp.eq.s32.totalorder %s111, 1
      %p654 = por %p652, %p653
      %p655 = scmp.ne.s32.totalorder %s646, %s647
      %p656 = scmp.eq.s32.totalorder %s111, 0
      %p657 = por %p655, %p656
      %p658 = scmp.ne.s32.totalorder %s646, %s647
      %p659 = scmp.eq.s32.totalorder %s112, 1
      %p660 = por %p658, %p659
      %p662 = scmp.ne.s32.totalorder %s647, %s661
      %p663 = scmp.eq.s32.totalorder %s112, 0
      %p664 = por %p662, %p663
      %s666 = sadd.s32 %s665, 1
      %p669 = scmp.eq.s32.totalorder %s106, 1
      %p670 = scmp.ne.s32.totalorder %s665, %s667
      %p671 = scmp.eq.s32.totalorder %s106, 0
      %p672 = por %p670, %p671
      %p673 = scmp.ne.s32.totalorder %s665, %s667
      %p674 = scmp.eq.s32.totalorder %s111, 1
      %p675 = por %p673, %p674
      %p676 = scmp.ne.s32.totalorder %s667, %s668
      %p677 = scmp.eq.s32.totalorder %s111, 0
      %p678 = por %p676, %p677
      %p679 = scmp.ne.s32.totalorder %s667, %s668
      %p680 = scmp.eq.s32.totalorder %s112, 1
      %p681 = por %p679, %p680
      %p683 = scmp.ne.s32.totalorder %s668, %s682
      %p684 = scmp.eq.s32.totalorder %s112, 0
      %p685 = por %p683, %p684
      %s687 = sadd.s32 %s686, 1
      %p690 = scmp.eq.s32.totalorder %s106, 1
      %p691 = scmp.ne.s32.totalorder %s686, %s688
      %p692 = scmp.eq.s32.totalorder %s106, 0
      %p693 = por %p691, %p692
      %p694 = scmp.ne.s32.totalorder %s686, %s688
      %p695 = scmp.eq.s32.totalorder %s111, 1
      %p696 = por %p694, %p695
      %p697 = scmp.ne.s32.totalorder %s688, %s689
      %p698 = scmp.eq.s32.totalorder %s111, 0
      %p699 = por %p697, %p698
      %p700 = scmp.ne.s32.totalorder %s688, %s689
      %p701 = scmp.eq.s32.totalorder %s112, 1
      %p702 = por %p700, %p701
      %p704 = scmp.ne.s32.totalorder %s689, %s703
      %p705 = scmp.eq.s32.totalorder %s112, 0
      %p706 = por %p704, %p705
      %s708 = sadd.s32 %s707, 1
      %p711 = scmp.eq.s32.totalorder %s106, 1
      %p712 = scmp.ne.s32.totalorder %s707, %s709
      %p713 = scmp.eq.s32.totalorder %s106, 0
      %p714 = por %p712, %p713
      %p715 = scmp.ne.s32.totalorder %s707, %s709
      %p716 = scmp.eq.s32.totalorder %s111, 1
      %p717 = por %p715, %p716
      %p718 = scmp.ne.s32.totalorder %s709, %s710
      %p719 = scmp.eq.s32.totalorder %s111, 0
      %p720 = por %p718, %p719
      %p721 = scmp.ne.s32.totalorder %s709, %s710
      %p722 = scmp.eq.s32.totalorder %s112, 1
      %p723 = por %p721, %p722
      %p725 = scmp.ne.s32.totalorder %s710, %s724
      %p726 = scmp.eq.s32.totalorder %s112, 0
      %p727 = por %p725, %p726
      %s729 = sadd.s32 %s728, 1
      %p732 = scmp.eq.s32.totalorder %s106, 1
      %p733 = scmp.ne.s32.totalorder %s728, %s730
      %p734 = scmp.eq.s32.totalorder %s106, 0
      %p735 = por %p733, %p734
      %p736 = scmp.ne.s32.totalorder %s728, %s730
      %p737 = scmp.eq.s32.totalorder %s111, 1
      %p738 = por %p736, %p737
      %p739 = scmp.ne.s32.totalorder %s730, %s731
      %p740 = scmp.eq.s32.totalorder %s111, 0
      %p741 = por %p739, %p740
      %p742 = scmp.ne.s32.totalorder %s730, %s731
      %p743 = scmp.eq.s32.totalorder %s112, 1
      %p744 = por %p742, %p743
      %p746 = scmp.ne.s32.totalorder %s731, %s745
      %p747 = scmp.eq.s32.totalorder %s112, 0
      %p748 = por %p746, %p747
      %s750 = sadd.s32 %s749, 1
      %p753 = scmp.eq.s32.totalorder %s106, 1
      %p754 = scmp.ne.s32.totalorder %s749, %s751
      %p755 = scmp.eq.s32.totalorder %s106, 0
      %p756 = por %p754, %p755
      %p757 = scmp.ne.s32.totalorder %s749, %s751
      %p758 = scmp.eq.s32.totalorder %s111, 1
      %p759 = por %p757, %p758
      %p760 = scmp.ne.s32.totalorder %s751, %s752
      %p761 = scmp.eq.s32.totalorder %s111, 0
      %p762 = por %p760, %p761
      %p763 = scmp.ne.s32.totalorder %s751, %s752
      %p764 = scmp.eq.s32.totalorder %s112, 1
      %p765 = por %p763, %p764
      %p767 = scmp.ne.s32.totalorder %s752, %s766
      %p768 = scmp.eq.s32.totalorder %s112, 0
      %p769 = por %p767, %p768
      %s771 = sadd.s32 %s770, 1
      %p774 = scmp.eq.s32.totalorder %s106, 1
      %p775 = scmp.ne.s32.totalorder %s770, %s772
      %p776 = scmp.eq.s32.totalorder %s106, 0
      %p777 = por %p775, %p776
      %p778 = scmp.ne.s32.totalorder %s770, %s772
      %p779 = scmp.eq.s32.totalorder %s111, 1
      %p780 = por %p778, %p779
      %p781 = scmp.ne.s32.totalorder %s772, %s773
      %p782 = scmp.eq.s32.totalorder %s111, 0
      %p783 = por %p781, %p782
      %p784 = scmp.ne.s32.totalorder %s772, %s773
      %p785 = scmp.eq.s32.totalorder %s112, 1
      %p786 = por %p784, %p785
      %p788 = scmp.ne.s32.totalorder %s773, %s787
      %p789 = scmp.eq.s32.totalorder %s112, 0
      %p790 = por %p788, %p789
      %s792 = sadd.s32 %s791, 1
      %p795 = scmp.eq.s32.totalorder %s106, 1
      %p796 = scmp.ne.s32.totalorder %s791, %s793
      %p797 = scmp.eq.s32.totalorder %s106, 0
      %p798 = por %p796, %p797
      %p799 = scmp.ne.s32.totalorder %s791, %s793
      %p800 = scmp.eq.s32.totalorder %s111, 1
      %p801 = por %p799, %p800
      %p802 = scmp.ne.s32.totalorder %s793, %s794
      %p803 = scmp.eq.s32.totalorder %s111, 0
      %p804 = por %p802, %p803
      %p805 = scmp.ne.s32.totalorder %s793, %s794
      %p806 = scmp.eq.s32.totalorder %s112, 1
      %p807 = por %p805, %p806
      %p809 = scmp.ne.s32.totalorder %s794, %s808
      %p810 = scmp.eq.s32.totalorder %s112, 0
      %p811 = por %p809, %p810
      %s813 = sadd.s32 %s812, 1
      %p816 = scmp.eq.s32.totalorder %s106, 1
      %p817 = scmp.ne.s32.totalorder %s812, %s814
      %p818 = scmp.eq.s32.totalorder %s106, 0
      %p819 = por %p817, %p818
      %p820 = scmp.ne.s32.totalorder %s812, %s814
      %p821 = scmp.eq.s32.totalorder %s111, 1
      %p822 = por %p820, %p821
      %p823 = scmp.ne.s32.totalorder %s814, %s815
      %p824 = scmp.eq.s32.totalorder %s111, 0
      %p825 = por %p823, %p824
      %p826 = scmp.ne.s32.totalorder %s814, %s815
      %p827 = scmp.eq.s32.totalorder %s112, 1
      %p828 = por %p826, %p827
      %p830 = scmp.ne.s32.totalorder %s815, %s829
      %p831 = scmp.eq.s32.totalorder %s112, 0
      %p832 = por %p830, %p831
      %s834 = sadd.s32 %s833, 1
      %p837 = scmp.eq.s32.totalorder %s106, 1
      %p838 = scmp.ne.s32.totalorder %s833, %s835
      %p839 = scmp.eq.s32.totalorder %s106, 0
      %p840 = por %p838, %p839
      %p841 = scmp.ne.s32.totalorder %s833, %s835
      %p842 = scmp.eq.s32.totalorder %s111, 1
      %p843 = por %p841, %p842
      %p844 = scmp.ne.s32.totalorder %s835, %s836
      %p845 = scmp.eq.s32.totalorder %s111, 0
      %p846 = por %p844, %p845
      %p847 = scmp.ne.s32.totalorder %s835, %s836
      %p848 = scmp.eq.s32.totalorder %s112, 1
      %p849 = por %p847, %p848
      %p851 = scmp.ne.s32.totalorder %s836, %s850
      %p852 = scmp.eq.s32.totalorder %s112, 0
      %p853 = por %p851, %p852
      %s855 = sadd.s32 %s854, 1
      %p858 = scmp.eq.s32.totalorder %s106, 1
      %p859 = scmp.ne.s32.totalorder %s854, %s856
      %p860 = scmp.eq.s32.totalorder %s106, 0
      %p861 = por %p859, %p860
      %p862 = scmp.ne.s32.totalorder %s854, %s856
      %p863 = scmp.eq.s32.totalorder %s111, 1
      %p864 = por %p862, %p863
      %p865 = scmp.ne.s32.totalorder %s856, %s857
      %p866 = scmp.eq.s32.totalorder %s111, 0
      %p867 = por %p865, %p866
      %p868 = scmp.ne.s32.totalorder %s856, %s857
      %p869 = scmp.eq.s32.totalorder %s112, 1
      %p870 = por %p868, %p869
      %p872 = scmp.ne.s32.totalorder %s857, %s871
      %p873 = scmp.eq.s32.totalorder %s112, 0
      %p874 = por %p872, %p873
      %s876 = sadd.s32 %s875, 1
      %p879 = scmp.eq.s32.totalorder %s106, 1
      %p880 = scmp.ne.s32.totalorder %s875, %s877
      %p881 = scmp.eq.s32.totalorder %s106, 0
      %p882 = por %p880, %p881
      %p883 = scmp.ne.s32.totalorder %s875, %s877
      %p884 = scmp.eq.s32.totalorder %s111, 1
      %p885 = por %p883, %p884
      %p886 = scmp.ne.s32.totalorder %s877, %s878
      %p887 = scmp.eq.s32.totalorder %s111, 0
      %p888 = por %p886, %p887
      %p889 = scmp.ne.s32.totalorder %s877, %s878
      %p890 = scmp.eq.s32.totalorder %s112, 1
      %p891 = por %p889, %p890
      %p893 = scmp.ne.s32.totalorder %s878, %s892
      %p894 = scmp.eq.s32.totalorder %s112, 0
      %p895 = por %p893, %p894
      %s897 = sadd.s32 %s896, 1
      %p900 = scmp.eq.s32.totalorder %s106, 1
      %p901 = scmp.ne.s32.totalorder %s896, %s898
      %p902 = scmp.eq.s32.totalorder %s106, 0
      %p903 = por %p901, %p902
      %p904 = scmp.ne.s32.totalorder %s896, %s898
      %p905 = scmp.eq.s32.totalorder %s111, 1
      %p906 = por %p904, %p905
      %p907 = scmp.ne.s32.totalorder %s898, %s899
      %p908 = scmp.eq.s32.totalorder %s111, 0
      %p909 = por %p907, %p908
      %p910 = scmp.ne.s32.totalorder %s898, %s899
      %p911 = scmp.eq.s32.totalorder %s112, 1
      %p912 = por %p910, %p911
      %p914 = scmp.ne.s32.totalorder %s899, %s913
      %p915 = scmp.eq.s32.totalorder %s112, 0
      %p916 = por %p914, %p915
      %s918 = sadd.s32 %s917, 1
      %p921 = scmp.eq.s32.totalorder %s106, 1
      %p922 = scmp.ne.s32.totalorder %s917, %s919
      %p923 = scmp.eq.s32.totalorder %s106, 0
      %p924 = por %p922, %p923
      %p925 = scmp.ne.s32.totalorder %s917, %s919
      %p926 = scmp.eq.s32.totalorder %s111, 1
      %p927 = por %p925, %p926
      %p928 = scmp.ne.s32.totalorder %s919, %s920
      %p929 = scmp.eq.s32.totalorder %s111, 0
      %p930 = por %p928, %p929
      %p931 = scmp.ne.s32.totalorder %s919, %s920
      %p932 = scmp.eq.s32.totalorder %s112, 1
      %p933 = por %p931, %p932
      %p935 = scmp.ne.s32.totalorder %s920, %s934
      %p936 = scmp.eq.s32.totalorder %s112, 0
      %p937 = por %p935, %p936
      %s939 = sadd.s32 %s938, 1
      %p942 = scmp.eq.s32.totalorder %s106, 1
      %p943 = scmp.ne.s32.totalorder %s938, %s940
      %p944 = scmp.eq.s32.totalorder %s106, 0
      %p945 = por %p943, %p944
      %p946 = scmp.ne.s32.totalorder %s938, %s940
      %p947 = scmp.eq.s32.totalorder %s111, 1
      %p948 = por %p946, %p947
      %p949 = scmp.ne.s32.totalorder %s940, %s941
      %p950 = scmp.eq.s32.totalorder %s111, 0
      %p951 = por %p949, %p950
      %p952 = scmp.ne.s32.totalorder %s940, %s941
      %p953 = scmp.eq.s32.totalorder %s112, 1
      %p954 = por %p952, %p953
      %p956 = scmp.ne.s32.totalorder %s941, %s955
      %p957 = scmp.eq.s32.totalorder %s112, 0
      %p958 = por %p956, %p957
      %s960 = sadd.s32 %s959, 1
      %p963 = scmp.eq.s32.totalorder %s106, 1
      %p964 = scmp.ne.s32.totalorder %s959, %s961
      %p965 = scmp.eq.s32.totalorder %s106, 0
      %p966 = por %p964, %p965
      %p967 = scmp.ne.s32.totalorder %s959, %s961
      %p968 = scmp.eq.s32.totalorder %s111, 1
      %p969 = por %p967, %p968
      %p970 = scmp.ne.s32.totalorder %s961, %s962
      %p971 = scmp.eq.s32.totalorder %s111, 0
      %p972 = por %p970, %p971
      %p973 = scmp.ne.s32.totalorder %s961, %s962
      %p974 = scmp.eq.s32.totalorder %s112, 1
      %p975 = por %p973, %p974
      %p977 = scmp.ne.s32.totalorder %s962, %s976
      %p978 = scmp.eq.s32.totalorder %s112, 0
      %p979 = por %p977, %p978
      %s981 = sadd.s32 %s980, 1
      %p984 = scmp.eq.s32.totalorder %s106, 1
      %p985 = scmp.ne.s32.totalorder %s980, %s982
      %p986 = scmp.eq.s32.totalorder %s106, 0
      %p987 = por %p985, %p986
      %p988 = scmp.ne.s32.totalorder %s980, %s982
      %p989 = scmp.eq.s32.totalorder %s111, 1
      %p990 = por %p988, %p989
      %p991 = scmp.ne.s32.totalorder %s982, %s983
      %p992 = scmp.eq.s32.totalorder %s111, 0
      %p993 = por %p991, %p992
      %p994 = scmp.ne.s32.totalorder %s982, %s983
      %p995 = scmp.eq.s32.totalorder %s112, 1
      %p996 = por %p994, %p995
      %p998 = scmp.ne.s32.totalorder %s983, %s997
      %p999 = scmp.eq.s32.totalorder %s112, 0
      %p1000 = por %p998, %p999
      %s1001 = ssub.s32 %s106, %s113
      %p1002 = scmp.eq.s32.totalorder %s1001, 0
      %s1004 = sadd.s32 %s1003, 1
      %s1005 = scalar_select %p1002, %s1003, %s1004
      %p1008 = pneg %p1002
      %p1009 = scmp.eq.s32.totalorder %s106, 1
      %p1010 = por %p1008, %p1009
      %p1011 = scmp.ne.s32.totalorder %s1003, %s1006
      %p1012 = scmp.eq.s32.totalorder %s106, 0
      %p1013 = por %p1011, %p1012
      %p1014 = scmp.ne.s32.totalorder %s1003, %s1006
      %p1015 = scmp.eq.s32.totalorder %s111, 1
      %p1016 = por %p1014, %p1015
      %p1017 = scmp.ne.s32.totalorder %s1006, %s1007
      %p1018 = scmp.eq.s32.totalorder %s111, 0
      %p1019 = por %p1017, %p1018
      %p1020 = scmp.ne.s32.totalorder %s1006, %s1007
      %p1021 = scmp.eq.s32.totalorder %s112, 1
      %p1022 = por %p1020, %p1021
      %p1024 = scmp.ne.s32.totalorder %s1007, %s1023
      %p1025 = scmp.eq.s32.totalorder %s112, 0
      %p1026 = por %p1024, %p1025
      %p1027 = scmp.le.s32.totalorder 1, %s106
      %p1028 = scmp.lt.s32.totalorder %s106, 3
      %p1029 = pnand %p1027, %p1028
      %p1030 = pneg %p1029
      // Predicated region
      $region9: #{fused_model_forward.1} parent=5 // pred_check
        _
      $region10: #{fused_model_forward.1} parent=5 // pred_check_branch
        %1032 = sbr.rel (%p1029) target = $region12
      $region11: #{fused_model_forward.1} parent=5 // pred_region
        %s1033 = ssub.s32 %s106, 1
        // Predicated region
        $region13: #{fused_model_forward.1} parent=11 // pred_check
          %p1034 = pneg %p153
        $region14: #{fused_model_forward.1} parent=11 // pred_check_branch
          %1036 = sbr.rel (%p1034) target = $region16
        $region15: #{fused_model_forward.1} parent=11 // pred_region
          %1038 = vsyncadd [#allocation3], 0
          %s1039 = sshll.u32 %s3, 4
          %s1040 = int_to_ptr.hbm [resolvable:$true] %s1039
          %s1041 = sshll.u32 [#allocation2], 4
          %s1042 = int_to_ptr.vmem [resolvable:$true] %s1041
          %1047 = dma.hbm_to_vmem [thread:$0]  %s1040, 384, %s1042, [#allocation3], 64, 64, 4
        $region16: #{fused_model_forward.1} parent=11 // pred_fallthru
          _
        // Predicated region
        $region17: #{fused_model_forward.1} parent=11 // pred_check
          %p1048 = pneg %p174
        $region18: #{fused_model_forward.1} parent=11 // pred_check_branch
          %1050 = sbr.rel (%p1048) target = $region20
        $region19: #{fused_model_forward.1} parent=11 // pred_region
          _
        $region20: #{fused_model_forward.1} parent=11 // pred_fallthru
          _
        // Predicated region
        $region21: #{fused_model_forward.1} parent=11 // pred_check
          %p1051 = pneg %p195
        $region22: #{fused_model_forward.1} parent=11 // pred_check_branch
          %1053 = sbr.rel (%p1051) target = $region24
        $region23: #{fused_model_forward.1} parent=11 // pred_region
          _
        $region24: #{fused_model_forward.1} parent=11 // pred_fallthru
          _
        // Predicated region
        $region25: #{fused_model_forward.1} parent=11 // pred_check
          %p1054 = pneg %p216
        $region26: #{fused_model_forward.1} parent=11 // pred_check_branch
          %1056 = sbr.rel (%p1054) target = $region28
        $region27: #{fused_model_forward.1} parent=11 // pred_region
          _
        $region28: #{fused_model_forward.1} parent=11 // pred_fallthru
          _
        // Predicated region
        $region29: #{fused_model_forward.1} parent=11 // pred_check
          %p1057 = pneg %p237
        $region30: #{fused_model_forward.1} parent=11 // pred_check_branch
          %1059 = sbr.rel (%p1057) target = $region32
        $region31: #{fused_model_forward.1} parent=11 // pred_region
          %1061 = vsyncadd [#allocation5], 0
          %s1063 = sshll.u32 %s11, 4
          %s1064 = int_to_ptr.hbm [resolvable:$true] %s1063
          %s1065 = sshll.u32 [#allocation4], 4
          %s1066 = int_to_ptr.vmem [resolvable:$true] %s1065
          %1068 = dma.hbm_to_vmem [thread:$0]  %s1064, 16, %s1066, [#allocation5]
        $region32: #{fused_model_forward.1} parent=11 // pred_fallthru
          _
        // Predicated region
        $region33: #{fused_model_forward.1} parent=11 // pred_check
          %p1069 = pneg %p258
        $region34: #{fused_model_forward.1} parent=11 // pred_check_branch
          %1071 = sbr.rel (%p1069) target = $region36
        $region35: #{fused_model_forward.1} parent=11 // pred_region
          %1073 = vsyncadd [#allocation5], 0
          %s1074 = sshll.u32 %s13, 4
          %s1075 = int_to_ptr.hbm [resolvable:$true] %s1074
          %s1076 = sshll.u32 [#allocation6], 4
          %s1077 = int_to_ptr.vmem [resolvable:$true] %s1076
          %1082 = dma.hbm_to_vmem [thread:$0]  %s1075, 192, %s1077, [#allocation5], 64, 64, 4
        $region36: #{fused_model_forward.1} parent=11 // pred_fallthru
          _
        // Predicated region
        $region37: #{fused_model_forward.1} parent=11 // pred_check
          %p1083 = pneg %p279
        $region38: #{fused_model_forward.1} parent=11 // pred_check_branch
          %1085 = sbr.rel (%p1083) target = $region40
        $region39: #{fused_model_forward.1} parent=11 // pred_region
          %1087 = vsyncadd [#allocation8], 0
          %s1088 = sshll.u32 %s15, 4
          %s1089 = int_to_ptr.hbm [resolvable:$true] %s1088
          %s1090 = sshll.u32 [#allocation7], 4
          %s1091 = int_to_ptr.vmem [resolvable:$true] %s1090
          %1096 = dma.hbm_to_vmem [thread:$0]  %s1089, 3072, %s1091, [#allocation8], 64, 64, 4
        $region40: #{fused_model_forward.1} parent=11 // pred_fallthru
          _
        // Predicated region
        $region41: #{fused_model_forward.1} parent=11 // pred_check
          %p1097 = pneg %p300
        $region42: #{fused_model_forward.1} parent=11 // pred_check_branch
          %1099 = sbr.rel (%p1097) target = $region44
        $region43: #{fused_model_forward.1} parent=11 // pred_region
          %1101 = vsyncadd [#allocation8], 0
          %s1103 = sshll.u32 %s17, 4
          %s1104 = int_to_ptr.hbm [resolvable:$true] %s1103
          %s1105 = sshll.u32 [#allocation9], 4
          %s1106 = int_to_ptr.vmem [resolvable:$true] %s1105
          %1108 = dma.hbm_to_vmem [thread:$0]  %s1104, 16, %s1106, [#allocation8]
        $region44: #{fused_model_forward.1} parent=11 // pred_fallthru
          _
        // Predicated region
        $region45: #{fused_model_forward.1} parent=11 // pred_check
          %p1109 = pneg %p321
        $region46: #{fused_model_forward.1} parent=11 // pred_check_branch
          %1111 = sbr.rel (%p1109) target = $region48
        $region47: #{fused_model_forward.1} parent=11 // pred_region
          _
        $region48: #{fused_model_forward.1} parent=11 // pred_fallthru
          _
        // Predicated region
        $region49: #{fused_model_forward.1} parent=11 // pred_check
          %p1112 = pneg %p342
        $region50: #{fused_model_forward.1} parent=11 // pred_check_branch
          %1114 = sbr.rel (%p1112) target = $region52
        $region51: #{fused_model_forward.1} parent=11 // pred_region
          _
        $region52: #{fused_model_forward.1} parent=11 // pred_fallthru
          _
        // Predicated region
        $region53: #{fused_model_forward.1} parent=11 // pred_check
          %p1115 = pneg %p363
        $region54: #{fused_model_forward.1} parent=11 // pred_check_branch
          %1117 = sbr.rel (%p1115) target = $region56
        $region55: #{fused_model_forward.1} parent=11 // pred_region
          %1119 = vsyncadd [#allocation11], 0
          %s1121 = sshll.u32 %s23, 4
          %s1122 = int_to_ptr.hbm [resolvable:$true] %s1121
          %s1123 = sshll.u32 [#allocation10], 4
          %s1124 = int_to_ptr.vmem [resolvable:$true] %s1123
          %1126 = dma.hbm_to_vmem [thread:$0]  %s1122, 32, %s1124, [#allocation11]
        $region56: #{fused_model_forward.1} parent=11 // pred_fallthru
          _
        // Predicated region
        $region57: #{fused_model_forward.1} parent=11 // pred_check
          %p1127 = pneg %p384
        $region58: #{fused_model_forward.1} parent=11 // pred_check_branch
          %1129 = sbr.rel (%p1127) target = $region60
        $region59: #{fused_model_forward.1} parent=11 // pred_region
          %1131 = vsyncadd [#allocation11], 0
          %s1132 = sshll.u32 %s25, 4
          %s1133 = int_to_ptr.hbm [resolvable:$true] %s1132
          %s1134 = sshll.u32 [#allocation12], 4
          %s1135 = int_to_ptr.vmem [resolvable:$true] %s1134
          %1140 = dma.hbm_to_vmem [thread:$0]  %s1133, 1024, %s1135, [#allocation11], 128, 128, 8
        $region60: #{fused_model_forward.1} parent=11 // pred_fallthru
          _
        // Predicated region
        $region61: #{fused_model_forward.1} parent=11 // pred_check
          %p1141 = pneg %p405
        $region62: #{fused_model_forward.1} parent=11 // pred_check_branch
          %1143 = sbr.rel (%p1141) target = $region64
        $region63: #{fused_model_forward.1} parent=11 // pred_region
          %1145 = vsyncadd [#allocation14], 0
          %s1147 = sshll.u32 %s27, 4
          %s1148 = int_to_ptr.hbm [resolvable:$true] %s1147
          %s1149 = sshll.u32 [#allocation13], 4
          %s1150 = int_to_ptr.vmem [resolvable:$true] %s1149
          %1152 = dma.hbm_to_vmem [thread:$0]  %s1148, 32, %s1150, [#allocation14]
        $region64: #{fused_model_forward.1} parent=11 // pred_fallthru
          _
        // Predicated region
        $region65: #{fused_model_forward.1} parent=11 // pred_check
          %p1153 = pneg %p426
        $region66: #{fused_model_forward.1} parent=11 // pred_check_branch
          %1155 = sbr.rel (%p1153) target = $region68
        $region67: #{fused_model_forward.1} parent=11 // pred_region
          %1157 = vsyncadd [#allocation14], 0
          %s1158 = sshll.u32 %s29, 4
          %s1159 = int_to_ptr.hbm [resolvable:$true] %s1158
          %s1160 = sshll.u32 [#allocation15], 4
          %s1161 = int_to_ptr.vmem [resolvable:$true] %s1160
          %1166 = dma.hbm_to_vmem [thread:$0]  %s1159, 2048, %s1161, [#allocation14], 64, 64, 4
        $region68: #{fused_model_forward.1} parent=11 // pred_fallthru
          _
        // Predicated region
        $region69: #{fused_model_forward.1} parent=11 // pred_check
          %p1167 = pneg %p447
        $region70: #{fused_model_forward.1} parent=11 // pred_check_branch
          %1169 = sbr.rel (%p1167) target = $region72
        $region71: #{fused_model_forward.1} parent=11 // pred_region
          _
        $region72: #{fused_model_forward.1} parent=11 // pred_fallthru
          _
        // Predicated region
        $region73: #{fused_model_forward.1} parent=11 // pred_check
          %p1170 = pneg %p468
        $region74: #{fused_model_forward.1} parent=11 // pred_check_branch
          %1172 = sbr.rel (%p1170) target = $region76
        $region75: #{fused_model_forward.1} parent=11 // pred_region
          %1174 = vsyncadd [#allocation17], 0
          %s1176 = sshll.u32 %s33, 4
          %s1177 = int_to_ptr.hbm [resolvable:$true] %s1176
          %s1178 = sshll.u32 [#allocation16], 4
          %s1179 = int_to_ptr.vmem [resolvable:$true] %s1178
          %1181 = dma.hbm_to_vmem [thread:$0]  %s1177, 16, %s1179, [#allocation17]
        $region76: #{fused_model_forward.1} parent=11 // pred_fallthru
          _
        // Predicated region
        $region77: #{fused_model_forward.1} parent=11 // pred_check
          %p1182 = pneg %p489
        $region78: #{fused_model_forward.1} parent=11 // pred_check_branch
          %1184 = sbr.rel (%p1182) target = $region80
        $region79: #{fused_model_forward.1} parent=11 // pred_region
          %1186 = vsyncadd [#allocation17], 0
          %s1188 = sshll.u32 %s35, 4
          %s1189 = int_to_ptr.hbm [resolvable:$true] %s1188
          %s1190 = sshll.u32 [#allocation18], 4
          %s1191 = int_to_ptr.vmem [resolvable:$true] %s1190
          %1193 = dma.hbm_to_vmem [thread:$0]  %s1189, 16, %s1191, [#allocation17]
        $region80: #{fused_model_forward.1} parent=11 // pred_fallthru
          _
        // Predicated region
        $region81: #{fused_model_forward.1} parent=11 // pred_check
          %p1194 = pneg %p510
        $region82: #{fused_model_forward.1} parent=11 // pred_check_branch
          %1196 = sbr.rel (%p1194) target = $region84
        $region83: #{fused_model_forward.1} parent=11 // pred_region
          %1198 = vsyncadd [#allocation20], 0
          %s1199 = sshll.u32 %s37, 4
          %s1200 = int_to_ptr.hbm [resolvable:$true] %s1199
          %s1201 = sshll.u32 [#allocation19], 4
          %s1202 = int_to_ptr.vmem [resolvable:$true] %s1201
          %1207 = dma.hbm_to_vmem [thread:$0]  %s1200, 2048, %s1202, [#allocation20], 128, 128, 8
        $region84: #{fused_model_forward.1} parent=11 // pred_fallthru
          _
        // Predicated region
        $region85: #{fused_model_forward.1} parent=11 // pred_check
          %p1208 = pneg %p531
        $region86: #{fused_model_forward.1} parent=11 // pred_check_branch
          %1210 = sbr.rel (%p1208) target = $region88
        $region87: #{fused_model_forward.1} parent=11 // pred_region
          _
        $region88: #{fused_model_forward.1} parent=11 // pred_fallthru
          _
        // Predicated region
        $region89: #{fused_model_forward.1} parent=11 // pred_check
          %p1211 = pneg %p552
        $region90: #{fused_model_forward.1} parent=11 // pred_check_branch
          %1213 = sbr.rel (%p1211) target = $region92
        $region91: #{fused_model_forward.1} parent=11 // pred_region
          %1215 = vsyncadd [#allocation20], 0
          %s1216 = sshll.u32 %s41, 4
          %s1217 = int_to_ptr.hbm [resolvable:$true] %s1216
          %s1218 = sshll.u32 [#allocation21], 4
          %s1219 = int_to_ptr.vmem [resolvable:$true] %s1218
          %1224 = dma.hbm_to_vmem [thread:$0]  %s1217, 2048, %s1219, [#allocation20], 64, 64, 4
        $region92: #{fused_model_forward.1} parent=11 // pred_fallthru
          _
        // Predicated region
        $region93: #{fused_model_forward.1} parent=11 // pred_check
          %p1225 = pneg %p573
        $region94: #{fused_model_forward.1} parent=11 // pred_check_branch
          %1227 = sbr.rel (%p1225) target = $region96
        $region95: #{fused_model_forward.1} parent=11 // pred_region
          _
        $region96: #{fused_model_forward.1} parent=11 // pred_fallthru
          _
        // Predicated region
        $region97: #{fused_model_forward.1} parent=11 // pred_check
          %p1228 = pneg %p594
        $region98: #{fused_model_forward.1} parent=11 // pred_check_branch
          %1230 = sbr.rel (%p1228) target = $region100
        $region99: #{fused_model_forward.1} parent=11 // pred_region
          %1232 = vsyncadd [#allocation23], 0
          %s1233 = sshll.u32 %s45, 4
          %s1234 = int_to_ptr.hbm [resolvable:$true] %s1233
          %s1235 = sshll.u32 [#allocation22], 4
          %s1236 = int_to_ptr.vmem [resolvable:$true] %s1235
          %1241 = dma.hbm_to_vmem [thread:$0]  %s1234, 96, %s1236, [#allocation23], 32, 32, 2
        $region100: #{fused_model_forward.1} parent=11 // pred_fallthru
          _
        // Predicated region
        $region101: #{fused_model_forward.1} parent=11 // pred_check
          %p1242 = pneg %p615
        $region102: #{fused_model_forward.1} parent=11 // pred_check_branch
          %1244 = sbr.rel (%p1242) target = $region104
        $region103: #{fused_model_forward.1} parent=11 // pred_region
          %1246 = vsyncadd [#allocation23], 0
          %s1247 = sshll.u32 %s47, 4
          %s1248 = int_to_ptr.hbm [resolvable:$true] %s1247
          %s1249 = sshll.u32 [#allocation24], 4
          %s1250 = int_to_ptr.vmem [resolvable:$true] %s1249
          %1255 = dma.hbm_to_vmem [thread:$0]  %s1248, 3072, %s1250, [#allocation23], 64, 64, 4
        $region104: #{fused_model_forward.1} parent=11 // pred_fallthru
          _
        // Predicated region
        $region105: #{fused_model_forward.1} parent=11 // pred_check
          %p1256 = pneg %p636
        $region106: #{fused_model_forward.1} parent=11 // pred_check_branch
          %1258 = sbr.rel (%p1256) target = $region108
        $region107: #{fused_model_forward.1} parent=11 // pred_region
          %1260 = vsyncadd [#allocation26], 0
          %s1262 = sshll.u32 %s49, 4
          %s1263 = int_to_ptr.hbm [resolvable:$true] %s1262
          %s1264 = sshll.u32 [#allocation25], 4
          %s1265 = int_to_ptr.vmem [resolvable:$true] %s1264
          %1267 = dma.hbm_to_vmem [thread:$0]  %s1263, 16, %s1265, [#allocation26]
        $region108: #{fused_model_forward.1} parent=11 // pred_fallthru
          _
        // Predicated region
        $region109: #{fused_model_forward.1} parent=11 // pred_check
          %p1268 = pneg %p657
        $region110: #{fused_model_forward.1} parent=11 // pred_check_branch
          %1270 = sbr.rel (%p1268) target = $region112
        $region111: #{fused_model_forward.1} parent=11 // pred_region
          %1272 = vsyncadd [#allocation26], 0
          %s1274 = sshll.u32 %s51, 4
          %s1275 = int_to_ptr.hbm [resolvable:$true] %s1274
          %s1276 = sshll.u32 [#allocation27], 4
          %s1277 = int_to_ptr.vmem [resolvable:$true] %s1276
          %1279 = dma.hbm_to_vmem [thread:$0]  %s1275, 16, %s1277, [#allocation26]
        $region112: #{fused_model_forward.1} parent=11 // pred_fallthru
          _
        // Predicated region
        $region113: #{fused_model_forward.1} parent=11 // pred_check
          %p1280 = pneg %p678
        $region114: #{fused_model_forward.1} parent=11 // pred_check_branch
          %1282 = sbr.rel (%p1280) target = $region116
        $region115: #{fused_model_forward.1} parent=11 // pred_region
          %1284 = vsyncadd [#allocation29], 0
          %s1286 = sshll.u32 %s53, 4
          %s1287 = int_to_ptr.hbm [resolvable:$true] %s1286
          %s1288 = sshll.u32 [#allocation28], 4
          %s1289 = int_to_ptr.vmem [resolvable:$true] %s1288
          %1291 = dma.hbm_to_vmem [thread:$0]  %s1287, 16, %s1289, [#allocation29]
        $region116: #{fused_model_forward.1} parent=11 // pred_fallthru
          _
        // Predicated region
        $region117: #{fused_model_forward.1} parent=11 // pred_check
          %p1292 = pneg %p699
        $region118: #{fused_model_forward.1} parent=11 // pred_check_branch
          %1294 = sbr.rel (%p1292) target = $region120
        $region119: #{fused_model_forward.1} parent=11 // pred_region
          %1296 = vsyncadd [#allocation29], 0
          %s1297 = sshll.u32 %s55, 4
          %s1298 = int_to_ptr.hbm [resolvable:$true] %s1297
          %s1299 = sshll.u32 [#allocation30], 4
          %s1300 = int_to_ptr.vmem [resolvable:$true] %s1299
          %1305 = dma.hbm_to_vmem [thread:$0]  %s1298, 1536, %s1300, [#allocation29], 128, 128, 8
        $region120: #{fused_model_forward.1} parent=11 // pred_fallthru
          _
        // Predicated region
        $region121: #{fused_model_forward.1} parent=11 // pred_check
          %p1306 = pneg %p720
        $region122: #{fused_model_forward.1} parent=11 // pred_check_branch
          %1308 = sbr.rel (%p1306) target = $region124
        $region123: #{fused_model_forward.1} parent=11 // pred_region
          _
        $region124: #{fused_model_forward.1} parent=11 // pred_fallthru
          _
        // Predicated region
        $region125: #{fused_model_forward.1} parent=11 // pred_check
          %p1309 = pneg %p741
        $region126: #{fused_model_forward.1} parent=11 // pred_check_branch
          %1311 = sbr.rel (%p1309) target = $region128
        $region127: #{fused_model_forward.1} parent=11 // pred_region
          %1313 = vsyncadd [#allocation32], 0
          %s1314 = sshll.u32 %s59, 4
          %s1315 = int_to_ptr.hbm [resolvable:$true] %s1314
          %s1316 = sshll.u32 [#allocation31], 4
          %s1317 = int_to_ptr.vmem [resolvable:$true] %s1316
          %1322 = dma.hbm_to_vmem [thread:$0]  %s1315, 1536, %s1317, [#allocation32], 64, 64, 4
        $region128: #{fused_model_forward.1} parent=11 // pred_fallthru
          _
        // Predicated region
        $region129: #{fused_model_forward.1} parent=11 // pred_check
          %p1323 = pneg %p762
        $region130: #{fused_model_forward.1} parent=11 // pred_check_branch
          %1325 = sbr.rel (%p1323) target = $region132
        $region131: #{fused_model_forward.1} parent=11 // pred_region
          _
        $region132: #{fused_model_forward.1} parent=11 // pred_fallthru
          _
        // Predicated region
        $region133: #{fused_model_forward.1} parent=11 // pred_check
          %p1326 = pneg %p783
        $region134: #{fused_model_forward.1} parent=11 // pred_check_branch
          %1328 = sbr.rel (%p1326) target = $region136
        $region135: #{fused_model_forward.1} parent=11 // pred_region
          %1330 = vsyncadd [#allocation32], 0
          %s1331 = sshll.u32 %s63, 4
          %s1332 = int_to_ptr.hbm [resolvable:$true] %s1331
          %s1333 = sshll.u32 [#allocation33], 4
          %s1334 = int_to_ptr.vmem [resolvable:$true] %s1333
          %1339 = dma.hbm_to_vmem [thread:$0]  %s1332, 48, %s1334, [#allocation32], 16, 16, 1
        $region136: #{fused_model_forward.1} parent=11 // pred_fallthru
          _
        // Predicated region
        $region137: #{fused_model_forward.1} parent=11 // pred_check
          %p1340 = pneg %p804
        $region138: #{fused_model_forward.1} parent=11 // pred_check_branch
          %1342 = sbr.rel (%p1340) target = $region140
        $region139: #{fused_model_forward.1} parent=11 // pred_region
          %1344 = vsyncadd [#allocation35], 0
          %s1345 = sshll.u32 %s65, 4
          %s1346 = int_to_ptr.hbm [resolvable:$true] %s1345
          %s1347 = sshll.u32 [#allocation34], 4
          %s1348 = int_to_ptr.vmem [resolvable:$true] %s1347
          %1353 = dma.hbm_to_vmem [thread:$0]  %s1346, 2304, %s1348, [#allocation35], 64, 64, 4
        $region140: #{fused_model_forward.1} parent=11 // pred_fallthru
          _
        // Predicated region
        $region141: #{fused_model_forward.1} parent=11 // pred_check
          %p1354 = pneg %p825
        $region142: #{fused_model_forward.1} parent=11 // pred_check_branch
          %1356 = sbr.rel (%p1354) target = $region144
        $region143: #{fused_model_forward.1} parent=11 // pred_region
          %1358 = vsyncadd [#allocation35], 0
          %s1360 = sshll.u32 %s67, 4
          %s1361 = int_to_ptr.hbm [resolvable:$true] %s1360
          %s1362 = sshll.u32 [#allocation36], 4
          %s1363 = int_to_ptr.vmem [resolvable:$true] %s1362
          %1365 = dma.hbm_to_vmem [thread:$0]  %s1361, 16, %s1363, [#allocation35]
        $region144: #{fused_model_forward.1} parent=11 // pred_fallthru
          _
        // Predicated region
        $region145: #{fused_model_forward.1} parent=11 // pred_check
          %p1366 = pneg %p846
        $region146: #{fused_model_forward.1} parent=11 // pred_check_branch
          %1368 = sbr.rel (%p1366) target = $region148
        $region147: #{fused_model_forward.1} parent=11 // pred_region
          %1370 = vsyncadd [#allocation38], 0
          %s1372 = sshll.u32 %s69, 4
          %s1373 = int_to_ptr.hbm [resolvable:$true] %s1372
          %s1374 = sshll.u32 [#allocation37], 4
          %s1375 = int_to_ptr.vmem [resolvable:$true] %s1374
          %1377 = dma.hbm_to_vmem [thread:$0]  %s1373, 16, %s1375, [#allocation38]
        $region148: #{fused_model_forward.1} parent=11 // pred_fallthru
          _
        // Predicated region
        $region149: #{fused_model_forward.1} parent=11 // pred_check
          %p1378 = pneg %p867
        $region150: #{fused_model_forward.1} parent=11 // pred_check_branch
          %1380 = sbr.rel (%p1378) target = $region152
        $region151: #{fused_model_forward.1} parent=11 // pred_region
          %1382 = vsyncadd [#allocation38], 0
          %s1384 = sshll.u32 %s71, 4
          %s1385 = int_to_ptr.hbm [resolvable:$true] %s1384
          %s1386 = sshll.u32 [#allocation39], 4
          %s1387 = int_to_ptr.vmem [resolvable:$true] %s1386
          %1389 = dma.hbm_to_vmem [thread:$0]  %s1385, 16, %s1387, [#allocation38]
        $region152: #{fused_model_forward.1} parent=11 // pred_fallthru
          _
        // Predicated region
        $region153: #{fused_model_forward.1} parent=11 // pred_check
          %p1390 = pneg %p888
        $region154: #{fused_model_forward.1} parent=11 // pred_check_branch
          %1392 = sbr.rel (%p1390) target = $region156
        $region155: #{fused_model_forward.1} parent=11 // pred_region
          %1394 = vsyncadd [#allocation41], 0
          %s1395 = sshll.u32 %s73, 4
          %s1396 = int_to_ptr.hbm [resolvable:$true] %s1395
          %s1397 = sshll.u32 [#allocation40], 4
          %s1398 = int_to_ptr.vmem [resolvable:$true] %s1397
          %1403 = dma.hbm_to_vmem [thread:$0]  %s1396, 512, %s1398, [#allocation41], 64, 64, 4
        $region156: #{fused_model_forward.1} parent=11 // pred_fallthru
          _
        // Predicated region
        $region157: #{fused_model_forward.1} parent=11 // pred_check
          %p1404 = pneg %p909
        $region158: #{fused_model_forward.1} parent=11 // pred_check_branch
          %1406 = sbr.rel (%p1404) target = $region160
        $region159: #{fused_model_forward.1} parent=11 // pred_region
          _
        $region160: #{fused_model_forward.1} parent=11 // pred_fallthru
          _
        // Predicated region
        $region161: #{fused_model_forward.1} parent=11 // pred_check
          %p1407 = pneg %p930
        $region162: #{fused_model_forward.1} parent=11 // pred_check_branch
          %1409 = sbr.rel (%p1407) target = $region164
        $region163: #{fused_model_forward.1} parent=11 // pred_region
          %1411 = vsyncadd [#allocation41], 0
          %s1412 = sshll.u32 %s77, 4
          %s1413 = int_to_ptr.hbm [resolvable:$true] %s1412
          %s1414 = sshll.u32 [#allocation42], 4
          %s1415 = int_to_ptr.vmem [resolvable:$true] %s1414
          %1420 = dma.hbm_to_vmem [thread:$0]  %s1413, 1024, %s1415, [#allocation41], 64, 64, 4
        $region164: #{fused_model_forward.1} parent=11 // pred_fallthru
          _
        // Predicated region
        $region165: #{fused_model_forward.1} parent=11 // pred_check
          %p1421 = pneg %p951
        $region166: #{fused_model_forward.1} parent=11 // pred_check_branch
          %1423 = sbr.rel (%p1421) target = $region168
        $region167: #{fused_model_forward.1} parent=11 // pred_region
          _
        $region168: #{fused_model_forward.1} parent=11 // pred_fallthru
          _
        // Predicated region
        $region169: #{fused_model_forward.1} parent=11 // pred_check
          %p1424 = pneg %p972
        $region170: #{fused_model_forward.1} parent=11 // pred_check_branch
          %1426 = sbr.rel (%p1424) target = $region172
        $region171: #{fused_model_forward.1} parent=11 // pred_region
          %1428 = vsyncadd [#allocation44], 0
          %s1429 = sshll.u32 %s81, 4
          %s1430 = int_to_ptr.hbm [resolvable:$true] %s1429
          %s1431 = sshll.u32 [#allocation43], 4
          %s1432 = int_to_ptr.vmem [resolvable:$true] %s1431
          %1437 = dma.hbm_to_vmem [thread:$0]  %s1430, 512, %s1432, [#allocation44], 64, 64, 4
        $region172: #{fused_model_forward.1} parent=11 // pred_fallthru
          _
        // Predicated region
        $region173: #{fused_model_forward.1} parent=11 // pred_check
          %p1438 = pneg %p993
        $region174: #{fused_model_forward.1} parent=11 // pred_check_branch
          %1440 = sbr.rel (%p1438) target = $region176
        $region175: #{fused_model_forward.1} parent=11 // pred_region
          %1442 = vsyncadd [#allocation44], 0
          %s1444 = sshll.u32 %s83, 4
          %s1445 = int_to_ptr.hbm [resolvable:$true] %s1444
          %s1446 = sshll.u32 [#allocation45], 4
          %s1447 = int_to_ptr.vmem [resolvable:$true] %s1446
          %1449 = dma.hbm_to_vmem [thread:$0]  %s1445, 16, %s1447, [#allocation44]
        $region176: #{fused_model_forward.1} parent=11 // pred_fallthru
          _
      $region12: #{fused_model_forward.1} parent=5 // pred_fallthru
        _
      %p1450 = scmp.lt.s32.totalorder %s106, 2
      // Predicated region
      $region177: #{fused_model_forward.1} parent=5 // pred_check
        %p1451 = pneg %p1450
      $region178: #{fused_model_forward.1} parent=5 // pred_check_branch
        %1453 = sbr.rel (%p1451) target = $region180
      $region179: #{fused_model_forward.1} parent=5 // pred_region
        // Predicated region
        $region181: #{fused_model_forward.1} parent=179 // pred_check
          %p1454 = pneg %p126
        $region182: #{fused_model_forward.1} parent=179 // pred_check_branch
          %1456 = sbr.rel (%p1454) target = $region184
        $region183: #{fused_model_forward.1} parent=179 // pred_region
          %p1457 = scmp.lt.s32.totalorder %s106, 1
          %s1458 = scalar_select %p1457, %s106, 1
          %s1459 = smul.addr %s1458, 4
          %s1460 = smul.addr %s1459, 8
          %s1461 = scalar_lea.vmem %s1, %s1460
        $region184: #{fused_model_forward.1} parent=179 // pred_fallthru
          _
      $region180: #{fused_model_forward.1} parent=5 // pred_fallthru
        _
      %p1462 = scmp.le.s32.totalorder 1, %s106
      %p1463 = scmp.lt.s32.totalorder %s106, 3
      %p1464 = pnand %p1462, %p1463
      %p1465 = pneg %p1464
      // Predicated region
      $region185: #{fused_model_forward.1} parent=5 // pred_check
        _
      $region186: #{fused_model_forward.1} parent=5 // pred_check_branch
        %1467 = sbr.rel (%p1464) target = $region188
      $region187: #{fused_model_forward.1} parent=5 // pred_region
        %s1468 = ssub.s32 %s106, 1
        // Predicated region
        $region189: #{fused_model_forward.1} parent=187 // pred_check
          %p1469 = pneg %p153
        $region190: #{fused_model_forward.1} parent=187 // pred_check_branch
          %1471 = sbr.rel (%p1469) target = $region192
        $region191: #{fused_model_forward.1} parent=187 // pred_region
          %1473 = dma.done [#allocation3], 384
        $region192: #{fused_model_forward.1} parent=187 // pred_fallthru
          _
        // Predicated region
        $region193: #{fused_model_forward.1} parent=187 // pred_check
          %p1474 = pneg %p237
        $region194: #{fused_model_forward.1} parent=187 // pred_check_branch
          %1476 = sbr.rel (%p1474) target = $region196
        $region195: #{fused_model_forward.1} parent=187 // pred_region
          %1478 = dma.done [#allocation5], 16
        $region196: #{fused_model_forward.1} parent=187 // pred_fallthru
          _
        // Predicated region
        $region197: #{fused_model_forward.1} parent=187 // pred_check
          %p1479 = pneg %p258
        $region198: #{fused_model_forward.1} parent=187 // pred_check_branch
          %1481 = sbr.rel (%p1479) target = $region200
        $region199: #{fused_model_forward.1} parent=187 // pred_region
          %1483 = dma.done [#allocation5], 192
        $region200: #{fused_model_forward.1} parent=187 // pred_fallthru
          _
        // Predicated region
        $region201: #{fused_model_forward.1} parent=187 // pred_check
          %p1484 = pneg %p279
        $region202: #{fused_model_forward.1} parent=187 // pred_check_branch
          %1486 = sbr.rel (%p1484) target = $region204
        $region203: #{fused_model_forward.1} parent=187 // pred_region
          %1488 = dma.done [#allocation8], 3072
        $region204: #{fused_model_forward.1} parent=187 // pred_fallthru
          _
        // Predicated region
        $region205: #{fused_model_forward.1} parent=187 // pred_check
          %p1489 = pneg %p300
        $region206: #{fused_model_forward.1} parent=187 // pred_check_branch
          %1491 = sbr.rel (%p1489) target = $region208
        $region207: #{fused_model_forward.1} parent=187 // pred_region
          %1493 = dma.done [#allocation8], 16
        $region208: #{fused_model_forward.1} parent=187 // pred_fallthru
          _
        // Predicated region
        $region209: #{fused_model_forward.1} parent=187 // pred_check
          %p1494 = pneg %p363
        $region210: #{fused_model_forward.1} parent=187 // pred_check_branch
          %1496 = sbr.rel (%p1494) target = $region212
        $region211: #{fused_model_forward.1} parent=187 // pred_region
          %1498 = dma.done [#allocation11], 32
        $region212: #{fused_model_forward.1} parent=187 // pred_fallthru
          _
        // Predicated region
        $region213: #{fused_model_forward.1} parent=187 // pred_check
          %p1499 = pneg %p384
        $region214: #{fused_model_forward.1} parent=187 // pred_check_branch
          %1501 = sbr.rel (%p1499) target = $region216
        $region215: #{fused_model_forward.1} parent=187 // pred_region
          %1503 = dma.done [#allocation11], 1024
        $region216: #{fused_model_forward.1} parent=187 // pred_fallthru
          _
        // Predicated region
        $region217: #{fused_model_forward.1} parent=187 // pred_check
          %p1504 = pneg %p405
        $region218: #{fused_model_forward.1} parent=187 // pred_check_branch
          %1506 = sbr.rel (%p1504) target = $region220
        $region219: #{fused_model_forward.1} parent=187 // pred_region
          %1508 = dma.done [#allocation14], 32
        $region220: #{fused_model_forward.1} parent=187 // pred_fallthru
          _
        // Predicated region
        $region221: #{fused_model_forward.1} parent=187 // pred_check
          %p1509 = pneg %p426
        $region222: #{fused_model_forward.1} parent=187 // pred_check_branch
          %1511 = sbr.rel (%p1509) target = $region224
        $region223: #{fused_model_forward.1} parent=187 // pred_region
          %1513 = dma.done [#allocation14], 2048
        $region224: #{fused_model_forward.1} parent=187 // pred_fallthru
          _
        // Predicated region
        $region225: #{fused_model_forward.1} parent=187 // pred_check
          %p1514 = pneg %p468
        $region226: #{fused_model_forward.1} parent=187 // pred_check_branch
          %1516 = sbr.rel (%p1514) target = $region228
        $region227: #{fused_model_forward.1} parent=187 // pred_region
          %1518 = dma.done [#allocation17], 16
        $region228: #{fused_model_forward.1} parent=187 // pred_fallthru
          _
        // Predicated region
        $region229: #{fused_model_forward.1} parent=187 // pred_check
          %p1519 = pneg %p489
        $region230: #{fused_model_forward.1} parent=187 // pred_check_branch
          %1521 = sbr.rel (%p1519) target = $region232
        $region231: #{fused_model_forward.1} parent=187 // pred_region
          %1523 = dma.done [#allocation17], 16
        $region232: #{fused_model_forward.1} parent=187 // pred_fallthru
          _
        // Predicated region
        $region233: #{fused_model_forward.1} parent=187 // pred_check
          %p1524 = pneg %p510
        $region234: #{fused_model_forward.1} parent=187 // pred_check_branch
          %1526 = sbr.rel (%p1524) target = $region236
        $region235: #{fused_model_forward.1} parent=187 // pred_region
          %1528 = dma.done [#allocation20], 2048
        $region236: #{fused_model_forward.1} parent=187 // pred_fallthru
          _
        // Predicated region
        $region237: #{fused_model_forward.1} parent=187 // pred_check
          %p1529 = pneg %p552
        $region238: #{fused_model_forward.1} parent=187 // pred_check_branch
          %1531 = sbr.rel (%p1529) target = $region240
        $region239: #{fused_model_forward.1} parent=187 // pred_region
          %1533 = dma.done [#allocation20], 2048
        $region240: #{fused_model_forward.1} parent=187 // pred_fallthru
          _
        // Predicated region
        $region241: #{fused_model_forward.1} parent=187 // pred_check
          %p1534 = pneg %p594
        $region242: #{fused_model_forward.1} parent=187 // pred_check_branch
          %1536 = sbr.rel (%p1534) target = $region244
        $region243: #{fused_model_forward.1} parent=187 // pred_region
          %1538 = dma.done [#allocation23], 96
        $region244: #{fused_model_forward.1} parent=187 // pred_fallthru
          _
        // Predicated region
        $region245: #{fused_model_forward.1} parent=187 // pred_check
          %p1539 = pneg %p615
        $region246: #{fused_model_forward.1} parent=187 // pred_check_branch
          %1541 = sbr.rel (%p1539) target = $region248
        $region247: #{fused_model_forward.1} parent=187 // pred_region
          %1543 = dma.done [#allocation23], 3072
        $region248: #{fused_model_forward.1} parent=187 // pred_fallthru
          _
        // Predicated region
        $region249: #{fused_model_forward.1} parent=187 // pred_check
          %p1544 = pneg %p636
        $region250: #{fused_model_forward.1} parent=187 // pred_check_branch
          %1546 = sbr.rel (%p1544) target = $region252
        $region251: #{fused_model_forward.1} parent=187 // pred_region
          %1548 = dma.done [#allocation26], 16
        $region252: #{fused_model_forward.1} parent=187 // pred_fallthru
          _
        // Predicated region
        $region253: #{fused_model_forward.1} parent=187 // pred_check
          %p1549 = pneg %p657
        $region254: #{fused_model_forward.1} parent=187 // pred_check_branch
          %1551 = sbr.rel (%p1549) target = $region256
        $region255: #{fused_model_forward.1} parent=187 // pred_region
          %1553 = dma.done [#allocation26], 16
        $region256: #{fused_model_forward.1} parent=187 // pred_fallthru
          _
        // Predicated region
        $region257: #{fused_model_forward.1} parent=187 // pred_check
          %p1554 = pneg %p678
        $region258: #{fused_model_forward.1} parent=187 // pred_check_branch
          %1556 = sbr.rel (%p1554) target = $region260
        $region259: #{fused_model_forward.1} parent=187 // pred_region
          %1558 = dma.done [#allocation29], 16
        $region260: #{fused_model_forward.1} parent=187 // pred_fallthru
          _
        // Predicated region
        $region261: #{fused_model_forward.1} parent=187 // pred_check
          %p1559 = pneg %p699
        $region262: #{fused_model_forward.1} parent=187 // pred_check_branch
          %1561 = sbr.rel (%p1559) target = $region264
        $region263: #{fused_model_forward.1} parent=187 // pred_region
          %1563 = dma.done [#allocation29], 1536
        $region264: #{fused_model_forward.1} parent=187 // pred_fallthru
          _
        // Predicated region
        $region265: #{fused_model_forward.1} parent=187 // pred_check
          %p1564 = pneg %p741
        $region266: #{fused_model_forward.1} parent=187 // pred_check_branch
          %1566 = sbr.rel (%p1564) target = $region268
        $region267: #{fused_model_forward.1} parent=187 // pred_region
          %1568 = dma.done [#allocation32], 1536
        $region268: #{fused_model_forward.1} parent=187 // pred_fallthru
          _
        // Predicated region
        $region269: #{fused_model_forward.1} parent=187 // pred_check
          %p1569 = pneg %p783
        $region270: #{fused_model_forward.1} parent=187 // pred_check_branch
          %1571 = sbr.rel (%p1569) target = $region272
        $region271: #{fused_model_forward.1} parent=187 // pred_region
          %1573 = dma.done [#allocation32], 48
        $region272: #{fused_model_forward.1} parent=187 // pred_fallthru
          _
        // Predicated region
        $region273: #{fused_model_forward.1} parent=187 // pred_check
          %p1574 = pneg %p804
        $region274: #{fused_model_forward.1} parent=187 // pred_check_branch
          %1576 = sbr.rel (%p1574) target = $region276
        $region275: #{fused_model_forward.1} parent=187 // pred_region
          %1578 = dma.done [#allocation35], 2304
        $region276: #{fused_model_forward.1} parent=187 // pred_fallthru
          _
        // Predicated region
        $region277: #{fused_model_forward.1} parent=187 // pred_check
          %p1579 = pneg %p825
        $region278: #{fused_model_forward.1} parent=187 // pred_check_branch
          %1581 = sbr.rel (%p1579) target = $region280
        $region279: #{fused_model_forward.1} parent=187 // pred_region
          %1583 = dma.done [#allocation35], 16
        $region280: #{fused_model_forward.1} parent=187 // pred_fallthru
          _
        // Predicated region
        $region281: #{fused_model_forward.1} parent=187 // pred_check
          %p1584 = pneg %p846
        $region282: #{fused_model_forward.1} parent=187 // pred_check_branch
          %1586 = sbr.rel (%p1584) target = $region284
        $region283: #{fused_model_forward.1} parent=187 // pred_region
          %1588 = dma.done [#allocation38], 16
        $region284: #{fused_model_forward.1} parent=187 // pred_fallthru
          _
        // Predicated region
        $region285: #{fused_model_forward.1} parent=187 // pred_check
          %p1589 = pneg %p867
        $region286: #{fused_model_forward.1} parent=187 // pred_check_branch
          %1591 = sbr.rel (%p1589) target = $region288
        $region287: #{fused_model_forward.1} parent=187 // pred_region
          %1593 = dma.done [#allocation38], 16
        $region288: #{fused_model_forward.1} parent=187 // pred_fallthru
          _
        // Predicated region
        $region289: #{fused_model_forward.1} parent=187 // pred_check
          %p1594 = pneg %p888
        $region290: #{fused_model_forward.1} parent=187 // pred_check_branch
          %1596 = sbr.rel (%p1594) target = $region292
        $region291: #{fused_model_forward.1} parent=187 // pred_region
          %1598 = dma.done [#allocation41], 512
        $region292: #{fused_model_forward.1} parent=187 // pred_fallthru
          _
        // Predicated region
        $region293: #{fused_model_forward.1} parent=187 // pred_check
          %p1599 = pneg %p930
        $region294: #{fused_model_forward.1} parent=187 // pred_check_branch
          %1601 = sbr.rel (%p1599) target = $region296
        $region295: #{fused_model_forward.1} parent=187 // pred_region
          %1603 = dma.done [#allocation41], 1024
        $region296: #{fused_model_forward.1} parent=187 // pred_fallthru
          _
        // Predicated region
        $region297: #{fused_model_forward.1} parent=187 // pred_check
          %p1604 = pneg %p972
        $region298: #{fused_model_forward.1} parent=187 // pred_check_branch
          %1606 = sbr.rel (%p1604) target = $region300
        $region299: #{fused_model_forward.1} parent=187 // pred_region
          %1608 = dma.done [#allocation44], 512
        $region300: #{fused_model_forward.1} parent=187 // pred_fallthru
          _
        // Predicated region
        $region301: #{fused_model_forward.1} parent=187 // pred_check
          %p1609 = pneg %p993
        $region302: #{fused_model_forward.1} parent=187 // pred_check_branch
          %1611 = sbr.rel (%p1609) target = $region304
        $region303: #{fused_model_forward.1} parent=187 // pred_region
          %1613 = dma.done [#allocation44], 16
        $region304: #{fused_model_forward.1} parent=187 // pred_fallthru
          _
        %p1614 = scmp.lt.s32.totalorder %s111, 1
        %s1615 = scalar_select %p1614, %s111, 1
        %s1616 = smul.addr %s1615, 4
        %s1617 = smul.addr %s1616, 8
        %s1618 = scalar_lea.vmem %s1, %s1617
        %p1619 = pneg %p132
        %p1620 = pneg %p129
        %p1621 = pneg %p153
        %p1622 = pneg %p150
        %p1623 = pneg %p174
        %p1624 = pneg %p171
        %p1625 = pneg %p195
        %p1626 = pneg %p192
        %p1627 = pneg %p216
        %p1628 = pneg %p213
        %p1629 = pneg %p237
        %p1630 = pneg %p234
        %p1631 = pneg %p258
        %p1632 = pneg %p255
        %p1633 = pneg %p279
        %p1634 = pneg %p276
        %p1635 = pneg %p300
        %p1636 = pneg %p297
        %p1637 = pneg %p321
        %p1638 = pneg %p318
        %p1639 = pneg %p342
        %p1640 = pneg %p339
        %p1641 = pneg %p363
        %p1642 = pneg %p360
        %p1643 = pneg %p384
        %p1644 = pneg %p381
        %p1645 = pneg %p405
        %p1646 = pneg %p402
        %p1647 = pneg %p426
        %p1648 = pneg %p423
        %p1649 = pneg %p447
        %p1650 = pneg %p444
        %p1651 = pneg %p468
        %p1652 = pneg %p465
        %p1653 = pneg %p489
        %p1654 = pneg %p486
        %p1655 = pneg %p510
        %p1656 = pneg %p507
        %p1657 = pneg %p531
        %p1658 = pneg %p528
        %p1659 = pneg %p552
        %p1660 = pneg %p549
        %p1661 = pneg %p573
        %p1662 = pneg %p570
        %p1663 = pneg %p594
        %p1664 = pneg %p591
        %p1665 = pneg %p615
        %p1666 = pneg %p612
        %p1667 = pneg %p636
        %p1668 = pneg %p633
        %p1669 = pneg %p657
        %p1670 = pneg %p654
        %p1671 = pneg %p678
        %p1672 = pneg %p675
        %p1673 = pneg %p699
        %p1674 = pneg %p696
        %p1675 = pneg %p720
        %p1676 = pneg %p717
        %p1677 = pneg %p741
        %p1678 = pneg %p738
        %p1679 = pneg %p762
        %p1680 = pneg %p759
        %p1681 = pneg %p783
        %p1682 = pneg %p780
        %p1683 = pneg %p804
        %p1684 = pneg %p801
        %p1685 = pneg %p825
        %p1686 = pneg %p822
        %p1687 = pneg %p846
        %p1688 = pneg %p843
        %p1689 = pneg %p867
        %p1690 = pneg %p864
        %p1691 = pneg %p888
        %p1692 = pneg %p885
        %p1693 = pneg %p909
        %p1694 = pneg %p906
        %p1695 = pneg %p930
        %p1696 = pneg %p927
        %p1697 = pneg %p951
        %p1698 = pneg %p948
        %p1699 = pneg %p972
        %p1700 = pneg %p969
        %p1701 = pneg %p993
        %p1702 = pneg %p990
        %p1703 = pneg %p1019
        %p1704 = pneg %p1016
        %p1705 = scmp.lt.s32.totalorder %s111, 1
        %s1706 = scalar_select %p1705, %s111, 1
        %s1707 = smul.addr %s1706, 8
        %s1708 = scalar_lea.vmem %s85, %s1707
        %p1709 = scmp.lt.s32.totalorder %s111, 1
        %s1710 = scalar_select %p1709, %s111, 1
        %s1711 = smul.addr %s1710, 4
        %s1712 = smul.addr %s1711, 8
        %s1713 = scalar_lea.vmem %s1, %s1712
        %p1714 = scmp.lt.s32.totalorder %s111, 1
        %s1715 = scalar_select %p1714, %s111, 1
        %s1716 = smul.addr %s1715, 8
        %s1717 = scalar_lea.vmem %s85, %s1716
        %v1719 = vld [vmem:[%s1713] sm:$0xff]
        %v1720 = vld [vmem:[%s1713 + $0x8] sm:$0xff]
        %v1721 = vld [vmem:[%s1713 + $0x10] sm:$0xff]
        %v1722 = vld [vmem:[%s1713 + $0x18] sm:$0xff]
        %v1723 = vpack.c.bf16 %v1720, %v1719
        %v1724 = vpack.c.bf16 %v1722, %v1721
        %v1725 = vld [vmem:[%s7] sm:$0x3]
        %v1726 = vld [vmem:[#allocation2] sm:$0xf]
        %v1727 = vld [vmem:[#allocation2 + $0x4] sm:$0xf]
        %v1730 = vunpack.c.l.b16 %v1726
        %v1731 = vunpack.c.l.b16 %v1727
        %v1732 = vpack.c.b16 %v1731, %v1730
        %vm1733 = vcmask 261120
        %v1735 = vsel %vm1733, %v1732, 0
        %1737 = vmatpush.bf16.msra.mxu0 0
        %1738 = vmatpush.bf16.msra.mxu0 0
        %1739 = vmatpush.bf16.msra.mxu0 0
        %1740 = vmatpush.bf16.msra.mxu0 0
        %1741 = vmatpush.bf16.msra.mxu0 0
        %1742 = vmatpush.bf16.msra.mxu0 0
        %1743 = vmatpush.bf16.msra.mxu0 %v1724
        %1744 = vmatpush.bf16.msra.mxu0 %v1723
        %1745 = vmatmul.bf16.gmra.mxu0 %v1735
        %v1746 = vpop.f32.mrf.mxu0
        %v1747 = vadd.f32 0.0, %v1746
        %v1748 = vpop.f32.mrf.mxu0
        %v1749 = vadd.f32 0.0, %v1748
        %1750 = vdwg.mxu0
        %v1751 = vld [vmem:[%s5] sm:$0xff]
        %v1752 = vld [vmem:[%s5 + $0x8] sm:$0xff]
        %v1753 = vld [vmem:[%s5 + $0x10] sm:$0xff]
        %v1754 = vld [vmem:[%s5 + $0x18] sm:$0xff]
        %v1755 = vld [vmem:[%s5 + $0x20] sm:$0xff]
        %v1756 = vld [vmem:[%s5 + $0x28] sm:$0xff]
        %v1757 = vld [vmem:[%s5 + $0x30] sm:$0xff]
        %v1758 = vld [vmem:[%s5 + $0x38] sm:$0xff]
        %v1759 = vld [vmem:[%s5 + $0x40] sm:$0xff]
        %v1760 = vld [vmem:[%s5 + $0x48] sm:$0xff]
        %v1761 = vld [vmem:[%s5 + $0x50] sm:$0xff]
        %v1762 = vld [vmem:[%s5 + $0x58] sm:$0xff]
        %v1763 = vpack.c.bf16 %v1749, %v1747
        %v1776 = vunpack.c.l.b16 %v1751
        %v1777 = vunpack.c.h.b16 %v1751
        %v1778 = vunpack.c.l.b16 %v1752
        %v1779 = vunpack.c.h.b16 %v1752
        %v1780 = vunpack.c.l.b16 %v1753
        %v1781 = vunpack.c.h.b16 %v1753
        %v1782 = vunpack.c.l.b16 %v1754
        %v1783 = vunpack.c.h.b16 %v1754
        %v1784 = vunpack.c.l.b16 %v1755
        %v1785 = vunpack.c.h.b16 %v1755
        %v1786 = vunpack.c.l.b16 %v1756
        %v1787 = vunpack.c.h.b16 %v1756
        %v1788 = vunpack.c.l.b16 %v1757
        %v1789 = vunpack.c.h.b16 %v1757
        %v1790 = vunpack.c.l.b16 %v1758
        %v1791 = vunpack.c.h.b16 %v1758
        %v1792 = vunpack.c.l.b16 %v1759
        %v1793 = vunpack.c.h.b16 %v1759
        %v1794 = vunpack.c.l.b16 %v1760
        %v1795 = vunpack.c.h.b16 %v1760
        %v1796 = vunpack.c.l.b16 %v1761
        %v1797 = vunpack.c.h.b16 %v1761
        %v1798 = vunpack.c.l.b16 %v1762
        %v1799 = vunpack.c.h.b16 %v1762
        %v1800 = vpack.c.b16 %v1778, %v1776
        %v1801 = vpack.c.b16 %v1779, %v1777
        %v1802 = vpack.c.b16 %v1782, %v1780
        %v1803 = vpack.c.b16 %v1783, %v1781
        %v1804 = vpack.c.b16 %v1786, %v1784
        %v1805 = vpack.c.b16 %v1787, %v1785
        %v1806 = vpack.c.b16 %v1790, %v1788
        %v1807 = vpack.c.b16 %v1791, %v1789
        %v1808 = vpack.c.b16 %v1794, %v1792
        %v1809 = vpack.c.b16 %v1795, %v1793
        %v1810 = vpack.c.b16 %v1798, %v1796
        %v1811 = vpack.c.b16 %v1799, %v1797
        %vm1824 = vcmask 785408
        %v1826 = vsel %vm1824, %v1763, 0
        %1828 = vmatpush.bf16.msra.mxu0 0
        %1829 = vmatpush.bf16.msra.mxu0 0
        %1830 = vmatpush.bf16.msra.mxu0 %v1810
        %1831 = vmatpush.bf16.msra.mxu0 %v1808
        %1832 = vmatpush.bf16.msra.mxu0 %v1806
        %1833 = vmatpush.bf16.msra.mxu0 %v1804
        %1834 = vmatpush.bf16.msra.mxu0 %v1802
        %1835 = vmatpush.bf16.msra.mxu0 %v1800
        %1836 = vmatmul.bf16.gmra.mxu0 %v1826
        %v1837 = vpop.f32.mrf.mxu0
        %v1838 = vadd.f32 0.0, %v1837
        %v1839 = vpop.f32.mrf.mxu0
        %v1840 = vadd.f32 0.0, %v1839
        %1841 = vdwg.mxu0
        %1842 = vmatpush.bf16.msra.mxu0 0
        %1843 = vmatpush.bf16.msra.mxu0 0
        %1844 = vmatpush.bf16.msra.mxu0 %v1811
        %1845 = vmatpush.bf16.msra.mxu0 %v1809
        %1846 = vmatpush.bf16.msra.mxu0 %v1807
        %1847 = vmatpush.bf16.msra.mxu0 %v1805
        %1848 = vmatpush.bf16.msra.mxu0 %v1803
        %1849 = vmatpush.bf16.msra.mxu0 %v1801
        %1850 = vmatmul.bf16.gmra.mxu0 %v1826
        %v1851 = vpop.f32.mrf.mxu0
        %v1852 = vadd.f32 0.0, %v1851
        %v1853 = vpop.f32.mrf.mxu0
        %v1854 = vadd.f32 0.0, %v1853
        %1855 = vdwg.mxu0
        %v1857 = vperm.slane %v1725, 0
        %v1858 = vperm.slane %v1725, 1
        %v1861 = vadd.f32 %v1857, %v1838
        %v1862 = vadd.f32 %v1858, %v1852
        %v1863 = vadd.f32 %v1857, %v1840
        %v1864 = vadd.f32 %v1858, %v1854
        %s1865 = scalar_lea.vmem [#allocation2], 8
        %v1866 = vld [vmem:[%s1865] sm:$0xf]
        %v1867 = vld [vmem:[%s1865 + $0x4] sm:$0xf]
        %v1870 = vunpack.c.l.b16 %v1866
        %v1871 = vunpack.c.l.b16 %v1867
        %v1872 = vpack.c.b16 %v1871, %v1870
        %v1874 = vsel %vm1733, %v1872, 0
        %1876 = vmatpush.bf16.msra.mxu0 0
        %1877 = vmatpush.bf16.msra.mxu0 0
        %1878 = vmatpush.bf16.msra.mxu0 0
        %1879 = vmatpush.bf16.msra.mxu0 0
        %1880 = vmatpush.bf16.msra.mxu0 0
        %1881 = vmatpush.bf16.msra.mxu0 0
        %1882 = vmatpush.bf16.msra.mxu0 %v1724
        %1883 = vmatpush.bf16.msra.mxu0 %v1723
        %1884 = vmatmul.bf16.gmra.mxu0 %v1874
        %v1885 = vpop.f32.mrf.mxu0
        %v1886 = vadd.f32 0.0, %v1885
        %v1887 = vpop.f32.mrf.mxu0
        %v1888 = vadd.f32 0.0, %v1887
        %1889 = vdwg.mxu0
        %s1890 = scalar_lea.vmem %s5, 96
        %v1891 = vld [vmem:[%s1890] sm:$0xff]
        %v1892 = vld [vmem:[%s1890 + $0x8] sm:$0xff]
        %v1893 = vld [vmem:[%s1890 + $0x10] sm:$0xff]
        %v1894 = vld [vmem:[%s1890 + $0x18] sm:$0xff]
        %v1895 = vld [vmem:[%s1890 + $0x20] sm:$0xff]
        %v1896 = vld [vmem:[%s1890 + $0x28] sm:$0xff]
        %v1897 = vld [vmem:[%s1890 + $0x30] sm:$0xff]
        %v1898 = vld [vmem:[%s1890 + $0x38] sm:$0xff]
        %v1899 = vld [vmem:[%s1890 + $0x40] sm:$0xff]
        %v1900 = vld [vmem:[%s1890 + $0x48] sm:$0xff]
        %v1901 = vld [vmem:[%s1890 + $0x50] sm:$0xff]
        %v1902 = vld [vmem:[%s1890 + $0x58] sm:$0xff]
        %v1903 = vpack.c.bf16 %v1888, %v1886
        %v1916 = vunpack.c.l.b16 %v1891
        %v1917 = vunpack.c.h.b16 %v1891
        %v1918 = vunpack.c.l.b16 %v1892
        %v1919 = vunpack.c.h.b16 %v1892
        %v1920 = vunpack.c.l.b16 %v1893
        %v1921 = vunpack.c.h.b16 %v1893
        %v1922 = vunpack.c.l.b16 %v1894
        %v1923 = vunpack.c.h.b16 %v1894
        %v1924 = vunpack.c.l.b16 %v1895
        %v1925 = vunpack.c.h.b16 %v1895
        %v1926 = vunpack.c.l.b16 %v1896
        %v1927 = vunpack.c.h.b16 %v1896
        %v1928 = vunpack.c.l.b16 %v1897
        %v1929 = vunpack.c.h.b16 %v1897
        %v1930 = vunpack.c.l.b16 %v1898
        %v1931 = vunpack.c.h.b16 %v1898
        %v1932 = vunpack.c.l.b16 %v1899
        %v1933 = vunpack.c.h.b16 %v1899
        %v1934 = vunpack.c.l.b16 %v1900
        %v1935 = vunpack.c.h.b16 %v1900
        %v1936 = vunpack.c.l.b16 %v1901
        %v1937 = vunpack.c.h.b16 %v1901
        %v1938 = vunpack.c.l.b16 %v1902
        %v1939 = vunpack.c.h.b16 %v1902
        %v1940 = vpack.c.b16 %v1918, %v1916
        %v1941 = vpack.c.b16 %v1919, %v1917
        %v1942 = vpack.c.b16 %v1922, %v1920
        %v1943 = vpack.c.b16 %v1923, %v1921
        %v1944 = vpack.c.b16 %v1926, %v1924
        %v1945 = vpack.c.b16 %v1927, %v1925
        %v1946 = vpack.c.b16 %v1930, %v1928
        %v1947 = vpack.c.b16 %v1931, %v1929
        %v1948 = vpack.c.b16 %v1934, %v1932
        %v1949 = vpack.c.b16 %v1935, %v1933
        %v1950 = vpack.c.b16 %v1938, %v1936
        %v1951 = vpack.c.b16 %v1939, %v1937
        %v1965 = vsel %vm1824, %v1903, 0
        %1967 = vmatpush.bf16.msra.mxu0 0
        %1968 = vmatpush.bf16.msra.mxu0 0
        %1969 = vmatpush.bf16.msra.mxu0 %v1950
        %1970 = vmatpush.bf16.msra.mxu0 %v1948
        %1971 = vmatpush.bf16.msra.mxu0 %v1946
        %1972 = vmatpush.bf16.msra.mxu0 %v1944
        %1973 = vmatpush.bf16.msra.mxu0 %v1942
        %1974 = vmatpush.bf16.msra.mxu0 %v1940
        %1975 = vmatmul.bf16.gmra.mxu0 %v1965
        %v1976 = vpop.f32.mrf.mxu0
        %v1977 = vadd.f32 0.0, %v1976
        %v1978 = vpop.f32.mrf.mxu0
        %v1979 = vadd.f32 0.0, %v1978
        %1980 = vdwg.mxu0
        %1981 = vmatpush.bf16.msra.mxu0 0
        %1982 = vmatpush.bf16.msra.mxu0 0
        %1983 = vmatpush.bf16.msra.mxu0 %v1951
        %1984 = vmatpush.bf16.msra.mxu0 %v1949
        %1985 = vmatpush.bf16.msra.mxu0 %v1947
        %1986 = vmatpush.bf16.msra.mxu0 %v1945
        %1987 = vmatpush.bf16.msra.mxu0 %v1943
        %1988 = vmatpush.bf16.msra.mxu0 %v1941
        %1989 = vmatmul.bf16.gmra.mxu0 %v1965
        %v1990 = vpop.f32.mrf.mxu0
        %v1991 = vadd.f32 0.0, %v1990
        %v1992 = vpop.f32.mrf.mxu0
        %v1993 = vadd.f32 0.0, %v1992
        %1994 = vdwg.mxu0
        %v1995 = vadd.f32 %v1861, %v1977
        %v1996 = vadd.f32 %v1862, %v1991
        %v1997 = vadd.f32 %v1863, %v1979
        %v1998 = vadd.f32 %v1864, %v1993
        %s1999 = scalar_lea.vmem [#allocation2], 16
        %v2000 = vld [vmem:[%s1999] sm:$0xf]
        %v2001 = vld [vmem:[%s1999 + $0x4] sm:$0xf]
        %v2004 = vunpack.c.l.b16 %v2000
        %v2005 = vunpack.c.l.b16 %v2001
        %v2006 = vpack.c.b16 %v2005, %v2004
        %v2008 = vsel %vm1733, %v2006, 0
        %2010 = vmatpush.bf16.msra.mxu0 0
        %2011 = vmatpush.bf16.msra.mxu0 0
        %2012 = vmatpush.bf16.msra.mxu0 0
        %2013 = vmatpush.bf16.msra.mxu0 0
        %2014 = vmatpush.bf16.msra.mxu0 0
        %2015 = vmatpush.bf16.msra.mxu0 0
        %2016 = vmatpush.bf16.msra.mxu0 %v1724
        %2017 = vmatpush.bf16.msra.mxu0 %v1723
        %2018 = vmatmul.bf16.gmra.mxu0 %v2008
        %v2019 = vpop.f32.mrf.mxu0
        %v2020 = vadd.f32 0.0, %v2019
        %v2021 = vpop.f32.mrf.mxu0
        %v2022 = vadd.f32 0.0, %v2021
        %2023 = vdwg.mxu0
        %s2024 = scalar_lea.vmem %s5, 192
        %v2025 = vld [vmem:[%s2024] sm:$0xff]
        %v2026 = vld [vmem:[%s2024 + $0x8] sm:$0xff]
        %v2027 = vld [vmem:[%s2024 + $0x10] sm:$0xff]
        %v2028 = vld [vmem:[%s2024 + $0x18] sm:$0xff]
        %v2029 = vld [vmem:[%s2024 + $0x20] sm:$0xff]
        %v2030 = vld [vmem:[%s2024 + $0x28] sm:$0xff]
        %v2031 = vld [vmem:[%s2024 + $0x30] sm:$0xff]
        %v2032 = vld [vmem:[%s2024 + $0x38] sm:$0xff]
        %v2033 = vld [vmem:[%s2024 + $0x40] sm:$0xff]
        %v2034 = vld [vmem:[%s2024 + $0x48] sm:$0xff]
        %v2035 = vld [vmem:[%s2024 + $0x50] sm:$0xff]
        %v2036 = vld [vmem:[%s2024 + $0x58] sm:$0xff]
        %v2037 = vpack.c.bf16 %v2022, %v2020
        %v2050 = vunpack.c.l.b16 %v2025
        %v2051 = vunpack.c.h.b16 %v2025
        %v2052 = vunpack.c.l.b16 %v2026
        %v2053 = vunpack.c.h.b16 %v2026
        %v2054 = vunpack.c.l.b16 %v2027
        %v2055 = vunpack.c.h.b16 %v2027
        %v2056 = vunpack.c.l.b16 %v2028
        %v2057 = vunpack.c.h.b16 %v2028
        %v2058 = vunpack.c.l.b16 %v2029
        %v2059 = vunpack.c.h.b16 %v2029
        %v2060 = vunpack.c.l.b16 %v2030
        %v2061 = vunpack.c.h.b16 %v2030
        %v2062 = vunpack.c.l.b16 %v2031
        %v2063 = vunpack.c.h.b16 %v2031
        %v2064 = vunpack.c.l.b16 %v2032
        %v2065 = vunpack.c.h.b16 %v2032
        %v2066 = vunpack.c.l.b16 %v2033
        %v2067 = vunpack.c.h.b16 %v2033
        %v2068 = vunpack.c.l.b16 %v2034
        %v2069 = vunpack.c.h.b16 %v2034
        %v2070 = vunpack.c.l.b16 %v2035
        %v2071 = vunpack.c.h.b16 %v2035
        %v2072 = vunpack.c.l.b16 %v2036
        %v2073 = vunpack.c.h.b16 %v2036
        %v2074 = vpack.c.b16 %v2052, %v2050
        %v2075 = vpack.c.b16 %v2053, %v2051
        %v2076 = vpack.c.b16 %v2056, %v2054
        %v2077 = vpack.c.b16 %v2057, %v2055
        %v2078 = vpack.c.b16 %v2060, %v2058
        %v2079 = vpack.c.b16 %v2061, %v2059
        %v2080 = vpack.c.b16 %v2064, %v2062
        %v2081 = vpack.c.b16 %v2065, %v2063
        %v2082 = vpack.c.b16 %v2068, %v2066
        %v2083 = vpack.c.b16 %v2069, %v2067
        %v2084 = vpack.c.b16 %v2072, %v2070
        %v2085 = vpack.c.b16 %v2073, %v2071
        %v2099 = vsel %vm1824, %v2037, 0
        %2101 = vmatpush.bf16.msra.mxu0 0
        %2102 = vmatpush.bf16.msra.mxu0 0
        %2103 = vmatpush.bf16.msra.mxu0 %v2084
        %2104 = vmatpush.bf16.msra.mxu0 %v2082
        %2105 = vmatpush.bf16.msra.mxu0 %v2080
        %2106 = vmatpush.bf16.msra.mxu0 %v2078
        %2107 = vmatpush.bf16.msra.mxu0 %v2076
        %2108 = vmatpush.bf16.msra.mxu0 %v2074
        %2109 = vmatmul.bf16.gmra.mxu0 %v2099
        %v2110 = vpop.f32.mrf.mxu0
        %v2111 = vadd.f32 0.0, %v2110
        %v2112 = vpop.f32.mrf.mxu0
        %v2113 = vadd.f32 0.0, %v2112
        %2114 = vdwg.mxu0
        %2115 = vmatpush.bf16.msra.mxu0 0
        %2116 = vmatpush.bf16.msra.mxu0 0
        %2117 = vmatpush.bf16.msra.mxu0 %v2085
        %2118 = vmatpush.bf16.msra.mxu0 %v2083
        %2119 = vmatpush.bf16.msra.mxu0 %v2081
        %2120 = vmatpush.bf16.msra.mxu0 %v2079
        %2121 = vmatpush.bf16.msra.mxu0 %v2077
        %2122 = vmatpush.bf16.msra.mxu0 %v2075
        %2123 = vmatmul.bf16.gmra.mxu0 %v2099
        %v2124 = vpop.f32.mrf.mxu0
        %v2125 = vadd.f32 0.0, %v2124
        %v2126 = vpop.f32.mrf.mxu0
        %v2127 = vadd.f32 0.0, %v2126
        %2128 = vdwg.mxu0
        %v2129 = vadd.f32 %v1995, %v2111
        %v2130 = vadd.f32 %v1996, %v2125
        %v2131 = vadd.f32 %v1997, %v2113
        %v2132 = vadd.f32 %v1998, %v2127
        %v2133 = vmax.f32 %v2129, 0.0
        %v2134 = vmax.f32 %v2130, 0.0
        %v2135 = vmax.f32 %v2131, 0.0
        %v2136 = vmax.f32 %v2132, 0.0
        %v2137 = vld [vmem:[%s9] sm:$0xf]
        %v2138 = vld [vmem:[%s9 + $0x4] sm:$0xf]
        %v2139 = vld [vmem:[%s9 + $0x8] sm:$0xf]
        %v2140 = vld [vmem:[%s9 + $0xc] sm:$0xf]
        %v2141 = vld [vmem:[%s9 + $0x10] sm:$0xf]
        %v2142 = vld [vmem:[%s9 + $0x14] sm:$0xf]
        %v2143 = vld [vmem:[%s9 + $0x18] sm:$0xf]
        %v2144 = vld [vmem:[%s9 + $0x1c] sm:$0xf]
        %v2145 = vld [vmem:[%s9 + $0x20] sm:$0xf]
        %v2146 = vld [vmem:[%s9 + $0x24] sm:$0xf]
        %v2147 = vld [vmem:[%s9 + $0x28] sm:$0xf]
        %v2148 = vld [vmem:[%s9 + $0x2c] sm:$0xf]
        %v2149 = vld [vmem:[%s9 + $0x30] sm:$0xf]
        %v2150 = vld [vmem:[%s9 + $0x34] sm:$0xf]
        %v2151 = vld [vmem:[%s9 + $0x38] sm:$0xf]
        %v2152 = vld [vmem:[%s9 + $0x3c] sm:$0xf]
        %v2153 = vld [vmem:[%s9 + $0x40] sm:$0xf]
        %v2154 = vld [vmem:[%s9 + $0x44] sm:$0xf]
        %v2155 = vld [vmem:[%s9 + $0x48] sm:$0xf]
        %v2156 = vld [vmem:[%s9 + $0x4c] sm:$0xf]
        %v2157 = vld [vmem:[%s9 + $0x50] sm:$0xf]
        %v2158 = vld [vmem:[%s9 + $0x54] sm:$0xf]
        %v2159 = vld [vmem:[%s9 + $0x58] sm:$0xf]
        %v2160 = vld [vmem:[%s9 + $0x5c] sm:$0xf]
        %v2161 = vld [vmem:[%s9 + $0x60] sm:$0xf]
        %v2162 = vld [vmem:[%s9 + $0x64] sm:$0xf]
        %v2163 = vld [vmem:[%s9 + $0x68] sm:$0xf]
        %v2164 = vld [vmem:[%s9 + $0x6c] sm:$0xf]
        %v2165 = vld [vmem:[%s9 + $0x70] sm:$0xf]
        %v2166 = vld [vmem:[%s9 + $0x74] sm:$0xf]
        %v2167 = vld [vmem:[%s9 + $0x78] sm:$0xf]
        %v2168 = vld [vmem:[%s9 + $0x7c] sm:$0xf]
        %v2169 = vpack.c.bf16 %v2135, %v2133
        %v2170 = vpack.c.bf16 %v2136, %v2134
        %v2171 = vld [vmem:[#allocation4] sm:$0x1]
        %v2173 = vperm.slane %v2171, 0
        %v2207 = vunpack.c.l.b16 %v2137
        %v2208 = vunpack.c.l.b16 %v2138
        %v2209 = vunpack.c.l.b16 %v2139
        %v2210 = vunpack.c.l.b16 %v2140
        %v2211 = vunpack.c.l.b16 %v2141
        %v2212 = vunpack.c.l.b16 %v2142
        %v2213 = vunpack.c.l.b16 %v2143
        %v2214 = vunpack.c.l.b16 %v2144
        %v2215 = vunpack.c.l.b16 %v2145
        %v2216 = vunpack.c.l.b16 %v2146
        %v2217 = vunpack.c.l.b16 %v2147
        %v2218 = vunpack.c.l.b16 %v2148
        %v2219 = vunpack.c.l.b16 %v2149
        %v2220 = vunpack.c.l.b16 %v2150
        %v2221 = vunpack.c.l.b16 %v2151
        %v2222 = vunpack.c.l.b16 %v2152
        %v2223 = vunpack.c.l.b16 %v2153
        %v2224 = vunpack.c.l.b16 %v2154
        %v2225 = vunpack.c.l.b16 %v2155
        %v2226 = vunpack.c.l.b16 %v2156
        %v2227 = vunpack.c.l.b16 %v2157
        %v2228 = vunpack.c.l.b16 %v2158
        %v2229 = vunpack.c.l.b16 %v2159
        %v2230 = vunpack.c.l.b16 %v2160
        %v2231 = vunpack.c.l.b16 %v2161
        %v2232 = vunpack.c.l.b16 %v2162
        %v2233 = vunpack.c.l.b16 %v2163
        %v2234 = vunpack.c.l.b16 %v2164
        %v2235 = vunpack.c.l.b16 %v2165
        %v2236 = vunpack.c.l.b16 %v2166
        %v2237 = vunpack.c.l.b16 %v2167
        %v2238 = vunpack.c.l.b16 %v2168
        %v2239 = vpack.c.b16 %v2208, %v2207
        %v2240 = vpack.c.b16 %v2210, %v2209
        %v2241 = vpack.c.b16 %v2212, %v2211
        %v2242 = vpack.c.b16 %v2214, %v2213
        %v2243 = vpack.c.b16 %v2216, %v2215
        %v2244 = vpack.c.b16 %v2218, %v2217
        %v2245 = vpack.c.b16 %v2220, %v2219
        %v2246 = vpack.c.b16 %v2222, %v2221
        %v2247 = vpack.c.b16 %v2224, %v2223
        %v2248 = vpack.c.b16 %v2226, %v2225
        %v2249 = vpack.c.b16 %v2228, %v2227
        %v2250 = vpack.c.b16 %v2230, %v2229
        %v2251 = vpack.c.b16 %v2232, %v2231
        %v2252 = vpack.c.b16 %v2234, %v2233
        %v2253 = vpack.c.b16 %v2236, %v2235
        %v2254 = vpack.c.b16 %v2238, %v2237
        %2271 = vmatpush.bf16.msra.mxu0 %v2246
        %2272 = vmatpush.bf16.msra.mxu0 %v2245
        %2273 = vmatpush.bf16.msra.mxu0 %v2244
        %2274 = vmatpush.bf16.msra.mxu0 %v2243
        %2275 = vmatpush.bf16.msra.mxu0 %v2242
        %2276 = vmatpush.bf16.msra.mxu0 %v2241
        %2277 = vmatpush.bf16.msra.mxu0 %v2240
        %2278 = vmatpush.bf16.msra.mxu0 %v2239
        %2279 = vmatmul.bf16.gmra.mxu0 %v2169
        %v2280 = vpop.f32.mrf.mxu0
        %v2281 = vadd.f32 %v2173, %v2280
        %v2282 = vpop.f32.mrf.mxu0
        %v2283 = vadd.f32 %v2173, %v2282
        %2284 = vdwg.mxu0
        %2285 = vmatpush.bf16.msra.mxu0 %v2254
        %2286 = vmatpush.bf16.msra.mxu0 %v2253
        %2287 = vmatpush.bf16.msra.mxu0 %v2252
        %2288 = vmatpush.bf16.msra.mxu0 %v2251
        %2289 = vmatpush.bf16.msra.mxu0 %v2250
        %2290 = vmatpush.bf16.msra.mxu0 %v2249
        %2291 = vmatpush.bf16.msra.mxu0 %v2248
        %2292 = vmatpush.bf16.msra.mxu0 %v2247
        %2293 = vmatmul.bf16.gmra.mxu0 %v2170
        %v2294 = vpop.f32.mrf.mxu0
        %v2295 = vadd.f32 %v2281, %v2294
        %v2296 = vpop.f32.mrf.mxu0
        %v2297 = vadd.f32 %v2283, %v2296
        %2298 = vdwg.mxu0
        %v2299 = vmax.f32 %v2295, 0.0
        %v2300 = vmax.f32 %v2297, 0.0
        %v2301 = vpack.c.bf16 %v2300, %v2299
        %v2302 = vld [vmem:[#allocation9] sm:$0x1]
        %v2303 = vld [vmem:[#allocation6] sm:$0xf]
        %vm2304 = vcmask 130048
        %v2306 = vsel %vm2304, %v2303, 0
        %2308 = vmatpush.bf16.msra.mxu0 0
        %2309 = vmatpush.bf16.msra.mxu0 0
        %2310 = vmatpush.bf16.msra.mxu0 0
        %2311 = vmatpush.bf16.msra.mxu0 0
        %2312 = vmatpush.bf16.msra.mxu0 0
        %2313 = vmatpush.bf16.msra.mxu0 0
        %2314 = vmatpush.bf16.msra.mxu0 0
        %2315 = vmatpush.bf16.msra.mxu0 %v2301
        %2316 = vmatmul.bf16.gmra.mxu0 %v2306
        %v2317 = vpop.f32.mrf.mxu0
        %v2318 = vadd.f32 0.0, %v2317
        %v2319 = vpop.f32.mrf.mxu0
        %2320 = vdwg.mxu0
        %v2321 = vld [vmem:[#allocation7] sm:$0xf]
        %v2322 = vld [vmem:[#allocation7 + $0x4] sm:$0xf]
        %v2323 = vld [vmem:[#allocation7 + $0x8] sm:$0xf]
        %v2324 = vld [vmem:[#allocation7 + $0xc] sm:$0xf]
        %v2325 = vld [vmem:[#allocation7 + $0x10] sm:$0xf]
        %v2326 = vld [vmem:[#allocation7 + $0x14] sm:$0xf]
        %v2327 = vld [vmem:[#allocation7 + $0x18] sm:$0xf]
        %v2328 = vld [vmem:[#allocation7 + $0x1c] sm:$0xf]
        %v2329 = vld [vmem:[#allocation7 + $0x20] sm:$0xf]
        %v2330 = vld [vmem:[#allocation7 + $0x24] sm:$0xf]
        %v2331 = vld [vmem:[#allocation7 + $0x28] sm:$0xf]
        %v2332 = vld [vmem:[#allocation7 + $0x2c] sm:$0xf]
        %v2333 = vld [vmem:[#allocation7 + $0x30] sm:$0xf]
        %v2334 = vld [vmem:[#allocation7 + $0x34] sm:$0xf]
        %v2335 = vld [vmem:[#allocation7 + $0x38] sm:$0xf]
        %v2336 = vld [vmem:[#allocation7 + $0x3c] sm:$0xf]
        %v2337 = vpack.c.bf16 %v2318, %v2318
        %v2354 = vunpack.c.l.b16 %v2321
        %v2355 = vunpack.c.l.b16 %v2322
        %v2356 = vunpack.c.l.b16 %v2323
        %v2357 = vunpack.c.l.b16 %v2324
        %v2358 = vunpack.c.l.b16 %v2325
        %v2359 = vunpack.c.l.b16 %v2326
        %v2360 = vunpack.c.l.b16 %v2327
        %v2361 = vunpack.c.l.b16 %v2328
        %v2362 = vunpack.c.l.b16 %v2329
        %v2363 = vunpack.c.l.b16 %v2330
        %v2364 = vunpack.c.l.b16 %v2331
        %v2365 = vunpack.c.l.b16 %v2332
        %v2366 = vunpack.c.l.b16 %v2333
        %v2367 = vunpack.c.l.b16 %v2334
        %v2368 = vunpack.c.l.b16 %v2335
        %v2369 = vunpack.c.l.b16 %v2336
        %v2370 = vpack.c.b16 %v2355, %v2354
        %v2371 = vpack.c.b16 %v2357, %v2356
        %v2372 = vpack.c.b16 %v2359, %v2358
        %v2373 = vpack.c.b16 %v2361, %v2360
        %v2374 = vpack.c.b16 %v2363, %v2362
        %v2375 = vpack.c.b16 %v2365, %v2364
        %v2376 = vpack.c.b16 %v2367, %v2366
        %v2377 = vpack.c.b16 %v2369, %v2368
        %2386 = vmatpush.bf16.msra.mxu0 %v2377
        %2387 = vmatpush.bf16.msra.mxu0 %v2376
        %2388 = vmatpush.bf16.msra.mxu0 %v2375
        %2389 = vmatpush.bf16.msra.mxu0 %v2374
        %2390 = vmatpush.bf16.msra.mxu0 %v2373
        %2391 = vmatpush.bf16.msra.mxu0 %v2372
        %2392 = vmatpush.bf16.msra.mxu0 %v2371
        %2393 = vmatpush.bf16.msra.mxu0 %v2370
        %2394 = vmatmul.bf16.gmra.mxu0 %v2337
        %v2395 = vpop.f32.mrf.mxu0
        %v2396 = vadd.f32 0.0, %v2395
        %v2397 = vpop.f32.mrf.mxu0
        %2398 = vdwg.mxu0
        %v2400 = vperm.slane %v2302, 0
        %v2402 = vadd.f32 %v2400, %v2396
        %s2403 = scalar_lea.vmem [#allocation6], 4
        %v2404 = vld [vmem:[%s2403] sm:$0xf]
        %v2406 = vsel %vm2304, %v2404, 0
        %2408 = vmatpush.bf16.msra.mxu0 0
        %2409 = vmatpush.bf16.msra.mxu0 0
        %2410 = vmatpush.bf16.msra.mxu0 0
        %2411 = vmatpush.bf16.msra.mxu0 0
        %2412 = vmatpush.bf16.msra.mxu0 0
        %2413 = vmatpush.bf16.msra.mxu0 0
        %2414 = vmatpush.bf16.msra.mxu0 0
        %2415 = vmatpush.bf16.msra.mxu0 %v2301
        %2416 = vmatmul.bf16.gmra.mxu0 %v2406
        %v2417 = vpop.f32.mrf.mxu0
        %v2418 = vadd.f32 0.0, %v2417
        %v2419 = vpop.f32.mrf.mxu0
        %2420 = vdwg.mxu0
        %s2421 = scalar_lea.vmem [#allocation7], 64
        %v2422 = vld [vmem:[%s2421] sm:$0xf]
        %v2423 = vld [vmem:[%s2421 + $0x4] sm:$0xf]
        %v2424 = vld [vmem:[%s2421 + $0x8] sm:$0xf]
        %v2425 = vld [vmem:[%s2421 + $0xc] sm:$0xf]
        %v2426 = vld [vmem:[%s2421 + $0x10] sm:$0xf]
        %v2427 = vld [vmem:[%s2421 + $0x14] sm:$0xf]
        %v2428 = vld [vmem:[%s2421 + $0x18] sm:$0xf]
        %v2429 = vld [vmem:[%s2421 + $0x1c] sm:$0xf]
        %v2430 = vld [vmem:[%s2421 + $0x20] sm:$0xf]
        %v2431 = vld [vmem:[%s2421 + $0x24] sm:$0xf]
        %v2432 = vld [vmem:[%s2421 + $0x28] sm:$0xf]
        %v2433 = vld [vmem:[%s2421 + $0x2c] sm:$0xf]
        %v2434 = vld [vmem:[%s2421 + $0x30] sm:$0xf]
        %v2435 = vld [vmem:[%s2421 + $0x34] sm:$0xf]
        %v2436 = vld [vmem:[%s2421 + $0x38] sm:$0xf]
        %v2437 = vld [vmem:[%s2421 + $0x3c] sm:$0xf]
        %v2438 = vpack.c.bf16 %v2418, %v2418
        %v2455 = vunpack.c.l.b16 %v2422
        %v2456 = vunpack.c.l.b16 %v2423
        %v2457 = vunpack.c.l.b16 %v2424
        %v2458 = vunpack.c.l.b16 %v2425
        %v2459 = vunpack.c.l.b16 %v2426
        %v2460 = vunpack.c.l.b16 %v2427
        %v2461 = vunpack.c.l.b16 %v2428
        %v2462 = vunpack.c.l.b16 %v2429
        %v2463 = vunpack.c.l.b16 %v2430
        %v2464 = vunpack.c.l.b16 %v2431
        %v2465 = vunpack.c.l.b16 %v2432
        %v2466 = vunpack.c.l.b16 %v2433
        %v2467 = vunpack.c.l.b16 %v2434
        %v2468 = vunpack.c.l.b16 %v2435
        %v2469 = vunpack.c.l.b16 %v2436
        %v2470 = vunpack.c.l.b16 %v2437
        %v2471 = vpack.c.b16 %v2456, %v2455
        %v2472 = vpack.c.b16 %v2458, %v2457
        %v2473 = vpack.c.b16 %v2460, %v2459
        %v2474 = vpack.c.b16 %v2462, %v2461
        %v2475 = vpack.c.b16 %v2464, %v2463
        %v2476 = vpack.c.b16 %v2466, %v2465
        %v2477 = vpack.c.b16 %v2468, %v2467
        %v2478 = vpack.c.b16 %v2470, %v2469
        %2487 = vmatpush.bf16.msra.mxu0 %v2478
        %2488 = vmatpush.bf16.msra.mxu0 %v2477
        %2489 = vmatpush.bf16.msra.mxu0 %v2476
        %2490 = vmatpush.bf16.msra.mxu0 %v2475
        %2491 = vmatpush.bf16.msra.mxu0 %v2474
        %2492 = vmatpush.bf16.msra.mxu0 %v2473
        %2493 = vmatpush.bf16.msra.mxu0 %v2472
        %2494 = vmatpush.bf16.msra.mxu0 %v2471
        %2495 = vmatmul.bf16.gmra.mxu0 %v2438
        %v2496 = vpop.f32.mrf.mxu0
        %v2497 = vadd.f32 0.0, %v2496
        %v2498 = vpop.f32.mrf.mxu0
        %2499 = vdwg.mxu0
        %v2500 = vadd.f32 %v2402, %v2497
        %s2501 = scalar_lea.vmem [#allocation6], 8
        %v2502 = vld [vmem:[%s2501] sm:$0xf]
        %v2504 = vsel %vm2304, %v2502, 0
        %2506 = vmatpush.bf16.msra.mxu0 0
        %2507 = vmatpush.bf16.msra.mxu0 0
        %2508 = vmatpush.bf16.msra.mxu0 0
        %2509 = vmatpush.bf16.msra.mxu0 0
        %2510 = vmatpush.bf16.msra.mxu0 0
        %2511 = vmatpush.bf16.msra.mxu0 0
        %2512 = vmatpush.bf16.msra.mxu0 0
        %2513 = vmatpush.bf16.msra.mxu0 %v2301
        %2514 = vmatmul.bf16.gmra.mxu0 %v2504
        %v2515 = vpop.f32.mrf.mxu0
        %v2516 = vadd.f32 0.0, %v2515
        %v2517 = vpop.f32.mrf.mxu0
        %2518 = vdwg.mxu0
        %s2519 = scalar_lea.vmem [#allocation7], 128
        %v2520 = vld [vmem:[%s2519] sm:$0xf]
        %v2521 = vld [vmem:[%s2519 + $0x4] sm:$0xf]
        %v2522 = vld [vmem:[%s2519 + $0x8] sm:$0xf]
        %v2523 = vld [vmem:[%s2519 + $0xc] sm:$0xf]
        %v2524 = vld [vmem:[%s2519 + $0x10] sm:$0xf]
        %v2525 = vld [vmem:[%s2519 + $0x14] sm:$0xf]
        %v2526 = vld [vmem:[%s2519 + $0x18] sm:$0xf]
        %v2527 = vld [vmem:[%s2519 + $0x1c] sm:$0xf]
        %v2528 = vld [vmem:[%s2519 + $0x20] sm:$0xf]
        %v2529 = vld [vmem:[%s2519 + $0x24] sm:$0xf]
        %v2530 = vld [vmem:[%s2519 + $0x28] sm:$0xf]
        %v2531 = vld [vmem:[%s2519 + $0x2c] sm:$0xf]
        %v2532 = vld [vmem:[%s2519 + $0x30] sm:$0xf]
        %v2533 = vld [vmem:[%s2519 + $0x34] sm:$0xf]
        %v2534 = vld [vmem:[%s2519 + $0x38] sm:$0xf]
        %v2535 = vld [vmem:[%s2519 + $0x3c] sm:$0xf]
        %v2536 = vpack.c.bf16 %v2516, %v2516
        %v2553 = vunpack.c.l.b16 %v2520
        %v2554 = vunpack.c.l.b16 %v2521
        %v2555 = vunpack.c.l.b16 %v2522
        %v2556 = vunpack.c.l.b16 %v2523
        %v2557 = vunpack.c.l.b16 %v2524
        %v2558 = vunpack.c.l.b16 %v2525
        %v2559 = vunpack.c.l.b16 %v2526
        %v2560 = vunpack.c.l.b16 %v2527
        %v2561 = vunpack.c.l.b16 %v2528
        %v2562 = vunpack.c.l.b16 %v2529
        %v2563 = vunpack.c.l.b16 %v2530
        %v2564 = vunpack.c.l.b16 %v2531
        %v2565 = vunpack.c.l.b16 %v2532
        %v2566 = vunpack.c.l.b16 %v2533
        %v2567 = vunpack.c.l.b16 %v2534
        %v2568 = vunpack.c.l.b16 %v2535
        %v2569 = vpack.c.b16 %v2554, %v2553
        %v2570 = vpack.c.b16 %v2556, %v2555
        %v2571 = vpack.c.b16 %v2558, %v2557
        %v2572 = vpack.c.b16 %v2560, %v2559
        %v2573 = vpack.c.b16 %v2562, %v2561
        %v2574 = vpack.c.b16 %v2564, %v2563
        %v2575 = vpack.c.b16 %v2566, %v2565
        %v2576 = vpack.c.b16 %v2568, %v2567
        %2585 = vmatpush.bf16.msra.mxu0 %v2576
        %2586 = vmatpush.bf16.msra.mxu0 %v2575
        %2587 = vmatpush.bf16.msra.mxu0 %v2574
        %2588 = vmatpush.bf16.msra.mxu0 %v2573
        %2589 = vmatpush.bf16.msra.mxu0 %v2572
        %2590 = vmatpush.bf16.msra.mxu0 %v2571
        %2591 = vmatpush.bf16.msra.mxu0 %v2570
        %2592 = vmatpush.bf16.msra.mxu0 %v2569
        %2593 = vmatmul.bf16.gmra.mxu0 %v2536
        %v2594 = vpop.f32.mrf.mxu0
        %v2595 = vadd.f32 0.0, %v2594
        %v2596 = vpop.f32.mrf.mxu0
        %2597 = vdwg.mxu0
        %v2598 = vadd.f32 %v2500, %v2595
        %v2599 = vmax.f32 %v2598, 0.0
        %v2600 = vld [vmem:[%s19] sm:$0xf]
        %v2602 = vsel %vm2304, %v2600, 0
        %2604 = vmatpush.bf16.msra.mxu0 0
        %2605 = vmatpush.bf16.msra.mxu0 0
        %2606 = vmatpush.bf16.msra.mxu0 0
        %2607 = vmatpush.bf16.msra.mxu0 0
        %2608 = vmatpush.bf16.msra.mxu0 0
        %2609 = vmatpush.bf16.msra.mxu0 0
        %2610 = vmatpush.bf16.msra.mxu0 0
        %2611 = vmatpush.bf16.msra.mxu0 %v2169
        %2612 = vmatmul.bf16.gmra.mxu0 %v2602
        %v2613 = vpop.f32.mrf.mxu0
        %v2614 = vadd.f32 0.0, %v2613
        %v2615 = vpop.f32.mrf.mxu0
        %2616 = vdwg.mxu0
        %2617 = vmatpush.bf16.msra.mxu0 0
        %2618 = vmatpush.bf16.msra.mxu0 0
        %2619 = vmatpush.bf16.msra.mxu0 0
        %2620 = vmatpush.bf16.msra.mxu0 0
        %2621 = vmatpush.bf16.msra.mxu0 0
        %2622 = vmatpush.bf16.msra.mxu0 0
        %2623 = vmatpush.bf16.msra.mxu0 0
        %2624 = vmatpush.bf16.msra.mxu0 %v2170
        %2625 = vmatmul.bf16.gmra.mxu0 %v2602
        %v2626 = vpop.f32.mrf.mxu0
        %v2627 = vadd.f32 0.0, %v2626
        %v2628 = vpop.f32.mrf.mxu0
        %2629 = vdwg.mxu0
        %v2630 = vld [vmem:[%s21] sm:$0xff]
        %v2631 = vld [vmem:[%s21 + $0x8] sm:$0xff]
        %v2632 = vld [vmem:[%s21 + $0x10] sm:$0xff]
        %v2633 = vld [vmem:[%s21 + $0x18] sm:$0xff]
        %v2634 = vld [vmem:[%s21 + $0x20] sm:$0xff]
        %v2635 = vld [vmem:[%s21 + $0x28] sm:$0xff]
        %v2636 = vld [vmem:[%s21 + $0x30] sm:$0xff]
        %v2637 = vld [vmem:[%s21 + $0x38] sm:$0xff]
        %v2638 = vld [vmem:[%s21 + $0x40] sm:$0xff]
        %v2639 = vld [vmem:[%s21 + $0x48] sm:$0xff]
        %v2640 = vld [vmem:[%s21 + $0x50] sm:$0xff]
        %v2641 = vld [vmem:[%s21 + $0x58] sm:$0xff]
        %v2642 = vld [vmem:[%s21 + $0x60] sm:$0xff]
        %v2643 = vld [vmem:[%s21 + $0x68] sm:$0xff]
        %v2644 = vld [vmem:[%s21 + $0x70] sm:$0xff]
        %v2645 = vld [vmem:[%s21 + $0x78] sm:$0xff]
        %v2646 = vld [vmem:[%s21 + $0x80] sm:$0xff]
        %v2647 = vld [vmem:[%s21 + $0x88] sm:$0xff]
        %v2648 = vld [vmem:[%s21 + $0x90] sm:$0xff]
        %v2649 = vld [vmem:[%s21 + $0x98] sm:$0xff]
        %v2650 = vld [vmem:[%s21 + $0xa0] sm:$0xff]
        %v2651 = vld [vmem:[%s21 + $0xa8] sm:$0xff]
        %v2652 = vld [vmem:[%s21 + $0xb0] sm:$0xff]
        %v2653 = vld [vmem:[%s21 + $0xb8] sm:$0xff]
        %v2654 = vld [vmem:[%s21 + $0xc0] sm:$0xff]
        %v2655 = vld [vmem:[%s21 + $0xc8] sm:$0xff]
        %v2656 = vld [vmem:[%s21 + $0xd0] sm:$0xff]
        %v2657 = vld [vmem:[%s21 + $0xd8] sm:$0xff]
        %v2658 = vld [vmem:[%s21 + $0xe0] sm:$0xff]
        %v2659 = vld [vmem:[%s21 + $0xe8] sm:$0xff]
        %v2660 = vld [vmem:[%s21 + $0xf0] sm:$0xff]
        %v2661 = vld [vmem:[%s21 + $0xf8] sm:$0xff]
        %v2662 = vpack.c.bf16 %v2614, %v2614
        %v2663 = vpack.c.bf16 %v2627, %v2627
        %v2664 = vld [vmem:[#allocation10] sm:$0x3]
        %v2666 = vperm.slane %v2664, 0
        %v2667 = vperm.slane %v2664, 1
        %v2702 = vunpack.c.l.b16 %v2630
        %v2703 = vunpack.c.h.b16 %v2630
        %v2704 = vunpack.c.l.b16 %v2631
        %v2705 = vunpack.c.h.b16 %v2631
        %v2706 = vunpack.c.l.b16 %v2632
        %v2707 = vunpack.c.h.b16 %v2632
        %v2708 = vunpack.c.l.b16 %v2633
        %v2709 = vunpack.c.h.b16 %v2633
        %v2710 = vunpack.c.l.b16 %v2634
        %v2711 = vunpack.c.h.b16 %v2634
        %v2712 = vunpack.c.l.b16 %v2635
        %v2713 = vunpack.c.h.b16 %v2635
        %v2714 = vunpack.c.l.b16 %v2636
        %v2715 = vunpack.c.h.b16 %v2636
        %v2716 = vunpack.c.l.b16 %v2637
        %v2717 = vunpack.c.h.b16 %v2637
        %v2718 = vunpack.c.l.b16 %v2638
        %v2719 = vunpack.c.h.b16 %v2638
        %v2720 = vunpack.c.l.b16 %v2639
        %v2721 = vunpack.c.h.b16 %v2639
        %v2722 = vunpack.c.l.b16 %v2640
        %v2723 = vunpack.c.h.b16 %v2640
        %v2724 = vunpack.c.l.b16 %v2641
        %v2725 = vunpack.c.h.b16 %v2641
        %v2726 = vunpack.c.l.b16 %v2642
        %v2727 = vunpack.c.h.b16 %v2642
        %v2728 = vunpack.c.l.b16 %v2643
        %v2729 = vunpack.c.h.b16 %v2643
        %v2730 = vunpack.c.l.b16 %v2644
        %v2731 = vunpack.c.h.b16 %v2644
        %v2732 = vunpack.c.l.b16 %v2645
        %v2733 = vunpack.c.h.b16 %v2645
        %v2734 = vunpack.c.l.b16 %v2646
        %v2735 = vunpack.c.h.b16 %v2646
        %v2736 = vunpack.c.l.b16 %v2647
        %v2737 = vunpack.c.h.b16 %v2647
        %v2738 = vunpack.c.l.b16 %v2648
        %v2739 = vunpack.c.h.b16 %v2648
        %v2740 = vunpack.c.l.b16 %v2649
        %v2741 = vunpack.c.h.b16 %v2649
        %v2742 = vunpack.c.l.b16 %v2650
        %v2743 = vunpack.c.h.b16 %v2650
        %v2744 = vunpack.c.l.b16 %v2651
        %v2745 = vunpack.c.h.b16 %v2651
        %v2746 = vunpack.c.l.b16 %v2652
        %v2747 = vunpack.c.h.b16 %v2652
        %v2748 = vunpack.c.l.b16 %v2653
        %v2749 = vunpack.c.h.b16 %v2653
        %v2750 = vunpack.c.l.b16 %v2654
        %v2751 = vunpack.c.h.b16 %v2654
        %v2752 = vunpack.c.l.b16 %v2655
        %v2753 = vunpack.c.h.b16 %v2655
        %v2754 = vunpack.c.l.b16 %v2656
        %v2755 = vunpack.c.h.b16 %v2656
        %v2756 = vunpack.c.l.b16 %v2657
        %v2757 = vunpack.c.h.b16 %v2657
        %v2758 = vunpack.c.l.b16 %v2658
        %v2759 = vunpack.c.h.b16 %v2658
        %v2760 = vunpack.c.l.b16 %v2659
        %v2761 = vunpack.c.h.b16 %v2659
        %v2762 = vunpack.c.l.b16 %v2660
        %v2763 = vunpack.c.h.b16 %v2660
        %v2764 = vunpack.c.l.b16 %v2661
        %v2765 = vunpack.c.h.b16 %v2661
        %v2766 = vpack.c.b16 %v2704, %v2702
        %v2767 = vpack.c.b16 %v2705, %v2703
        %v2768 = vpack.c.b16 %v2708, %v2706
        %v2769 = vpack.c.b16 %v2709, %v2707
        %v2770 = vpack.c.b16 %v2712, %v2710
        %v2771 = vpack.c.b16 %v2713, %v2711
        %v2772 = vpack.c.b16 %v2716, %v2714
        %v2773 = vpack.c.b16 %v2717, %v2715
        %v2774 = vpack.c.b16 %v2720, %v2718
        %v2775 = vpack.c.b16 %v2721, %v2719
        %v2776 = vpack.c.b16 %v2724, %v2722
        %v2777 = vpack.c.b16 %v2725, %v2723
        %v2778 = vpack.c.b16 %v2728, %v2726
        %v2779 = vpack.c.b16 %v2729, %v2727
        %v2780 = vpack.c.b16 %v2732, %v2730
        %v2781 = vpack.c.b16 %v2733, %v2731
        %v2782 = vpack.c.b16 %v2736, %v2734
        %v2783 = vpack.c.b16 %v2737, %v2735
        %v2784 = vpack.c.b16 %v2740, %v2738
        %v2785 = vpack.c.b16 %v2741, %v2739
        %v2786 = vpack.c.b16 %v2744, %v2742
        %v2787 = vpack.c.b16 %v2745, %v2743
        %v2788 = vpack.c.b16 %v2748, %v2746
        %v2789 = vpack.c.b16 %v2749, %v2747
        %v2790 = vpack.c.b16 %v2752, %v2750
        %v2791 = vpack.c.b16 %v2753, %v2751
        %v2792 = vpack.c.b16 %v2756, %v2754
        %v2793 = vpack.c.b16 %v2757, %v2755
        %v2794 = vpack.c.b16 %v2760, %v2758
        %v2795 = vpack.c.b16 %v2761, %v2759
        %v2796 = vpack.c.b16 %v2764, %v2762
        %v2797 = vpack.c.b16 %v2765, %v2763
        %2830 = vmatpush.bf16.msra.mxu0 %v2780
        %2831 = vmatpush.bf16.msra.mxu0 %v2778
        %2832 = vmatpush.bf16.msra.mxu0 %v2776
        %2833 = vmatpush.bf16.msra.mxu0 %v2774
        %2834 = vmatpush.bf16.msra.mxu0 %v2772
        %2835 = vmatpush.bf16.msra.mxu0 %v2770
        %2836 = vmatpush.bf16.msra.mxu0 %v2768
        %2837 = vmatpush.bf16.msra.mxu0 %v2766
        %2838 = vmatmul.bf16.gmra.mxu0 %v2662
        %v2839 = vpop.f32.mrf.mxu0
        %v2840 = vadd.f32 %v2666, %v2839
        %v2841 = vpop.f32.mrf.mxu0
        %2842 = vdwg.mxu0
        %2843 = vmatpush.bf16.msra.mxu0 %v2796
        %2844 = vmatpush.bf16.msra.mxu0 %v2794
        %2845 = vmatpush.bf16.msra.mxu0 %v2792
        %2846 = vmatpush.bf16.msra.mxu0 %v2790
        %2847 = vmatpush.bf16.msra.mxu0 %v2788
        %2848 = vmatpush.bf16.msra.mxu0 %v2786
        %2849 = vmatpush.bf16.msra.mxu0 %v2784
        %2850 = vmatpush.bf16.msra.mxu0 %v2782
        %2851 = vmatmul.bf16.gmra.mxu0 %v2663
        %v2852 = vpop.f32.mrf.mxu0
        %v2853 = vadd.f32 %v2840, %v2852
        %v2854 = vpop.f32.mrf.mxu0
        %2855 = vdwg.mxu0
        %2856 = vmatpush.bf16.msra.mxu0 %v2781
        %2857 = vmatpush.bf16.msra.mxu0 %v2779
        %2858 = vmatpush.bf16.msra.mxu0 %v2777
        %2859 = vmatpush.bf16.msra.mxu0 %v2775
        %2860 = vmatpush.bf16.msra.mxu0 %v2773
        %2861 = vmatpush.bf16.msra.mxu0 %v2771
        %2862 = vmatpush.bf16.msra.mxu0 %v2769
        %2863 = vmatpush.bf16.msra.mxu0 %v2767
        %2864 = vmatmul.bf16.gmra.mxu0 %v2662
        %v2865 = vpop.f32.mrf.mxu0
        %v2866 = vadd.f32 %v2667, %v2865
        %v2867 = vpop.f32.mrf.mxu0
        %2868 = vdwg.mxu0
        %2869 = vmatpush.bf16.msra.mxu0 %v2797
        %2870 = vmatpush.bf16.msra.mxu0 %v2795
        %2871 = vmatpush.bf16.msra.mxu0 %v2793
        %2872 = vmatpush.bf16.msra.mxu0 %v2791
        %2873 = vmatpush.bf16.msra.mxu0 %v2789
        %2874 = vmatpush.bf16.msra.mxu0 %v2787
        %2875 = vmatpush.bf16.msra.mxu0 %v2785
        %2876 = vmatpush.bf16.msra.mxu0 %v2783
        %2877 = vmatmul.bf16.gmra.mxu0 %v2663
        %v2878 = vpop.f32.mrf.mxu0
        %v2879 = vadd.f32 %v2866, %v2878
        %v2880 = vpop.f32.mrf.mxu0
        %2881 = vdwg.mxu0
        %v2882 = vld [vmem:[#allocation12] sm:$0xff]
        %v2883 = vld [vmem:[#allocation12 + $0x8] sm:$0xff]
        %v2884 = vld [vmem:[#allocation12 + $0x10] sm:$0xff]
        %v2885 = vld [vmem:[#allocation12 + $0x18] sm:$0xff]
        %v2886 = vld [vmem:[#allocation12 + $0x20] sm:$0xff]
        %v2887 = vld [vmem:[#allocation12 + $0x28] sm:$0xff]
        %v2888 = vld [vmem:[#allocation12 + $0x30] sm:$0xff]
        %v2889 = vld [vmem:[#allocation12 + $0x38] sm:$0xff]
        %v2890 = vpack.c.bf16 %v2599, %v2599
        %v2891 = vld [vmem:[#allocation13] sm:$0x3]
        %v2893 = vperm.slane %v2891, 0
        %v2894 = vperm.slane %v2891, 1
        %v2905 = vunpack.c.l.b16 %v2882
        %v2906 = vunpack.c.h.b16 %v2882
        %v2907 = vunpack.c.l.b16 %v2883
        %v2908 = vunpack.c.h.b16 %v2883
        %v2909 = vunpack.c.l.b16 %v2884
        %v2910 = vunpack.c.h.b16 %v2884
        %v2911 = vunpack.c.l.b16 %v2885
        %v2912 = vunpack.c.h.b16 %v2885
        %v2913 = vunpack.c.l.b16 %v2886
        %v2914 = vunpack.c.h.b16 %v2886
        %v2915 = vunpack.c.l.b16 %v2887
        %v2916 = vunpack.c.h.b16 %v2887
        %v2917 = vunpack.c.l.b16 %v2888
        %v2918 = vunpack.c.h.b16 %v2888
        %v2919 = vunpack.c.l.b16 %v2889
        %v2920 = vunpack.c.h.b16 %v2889
        %v2921 = vpack.c.b16 %v2907, %v2905
        %v2922 = vpack.c.b16 %v2908, %v2906
        %v2923 = vpack.c.b16 %v2911, %v2909
        %v2924 = vpack.c.b16 %v2912, %v2910
        %v2925 = vpack.c.b16 %v2915, %v2913
        %v2926 = vpack.c.b16 %v2916, %v2914
        %v2927 = vpack.c.b16 %v2919, %v2917
        %v2928 = vpack.c.b16 %v2920, %v2918
        %vm2937 = vcmask 523264
        %v2939 = vsel %vm2937, %v2890, 0
        %2941 = vmatpush.bf16.msra.mxu0 0
        %2942 = vmatpush.bf16.msra.mxu0 0
        %2943 = vmatpush.bf16.msra.mxu0 0
        %2944 = vmatpush.bf16.msra.mxu0 0
        %2945 = vmatpush.bf16.msra.mxu0 %v2927
        %2946 = vmatpush.bf16.msra.mxu0 %v2925
        %2947 = vmatpush.bf16.msra.mxu0 %v2923
        %2948 = vmatpush.bf16.msra.mxu0 %v2921
        %2949 = vmatmul.bf16.gmra.mxu0 %v2939
        %v2950 = vpop.f32.mrf.mxu0
        %v2951 = vadd.f32 %v2893, %v2950
        %v2952 = vpop.f32.mrf.mxu0
        %2953 = vdwg.mxu0
        %2954 = vmatpush.bf16.msra.mxu0 0
        %2955 = vmatpush.bf16.msra.mxu0 0
        %2956 = vmatpush.bf16.msra.mxu0 0
        %2957 = vmatpush.bf16.msra.mxu0 0
        %2958 = vmatpush.bf16.msra.mxu0 %v2928
        %2959 = vmatpush.bf16.msra.mxu0 %v2926
        %2960 = vmatpush.bf16.msra.mxu0 %v2924
        %2961 = vmatpush.bf16.msra.mxu0 %v2922
        %2962 = vmatmul.bf16.gmra.mxu0 %v2939
        %v2963 = vpop.f32.mrf.mxu0
        %v2964 = vadd.f32 %v2894, %v2963
        %v2965 = vpop.f32.mrf.mxu0
        %2966 = vdwg.mxu0
        %v2967 = vadd.f32 %v2951, %v2853
        %v2968 = vadd.f32 %v2964, %v2879
        %v2969 = vmax.f32 %v2967, 0.0
        %v2970 = vmax.f32 %v2968, 0.0
        %v2971 = vld [vmem:[#allocation15] sm:$0xf]
        %v2972 = vld [vmem:[#allocation15 + $0x4] sm:$0xf]
        %v2973 = vld [vmem:[#allocation15 + $0x8] sm:$0xf]
        %v2974 = vld [vmem:[#allocation15 + $0xc] sm:$0xf]
        %v2975 = vld [vmem:[#allocation15 + $0x10] sm:$0xf]
        %v2976 = vld [vmem:[#allocation15 + $0x14] sm:$0xf]
        %v2977 = vld [vmem:[#allocation15 + $0x18] sm:$0xf]
        %v2978 = vld [vmem:[#allocation15 + $0x1c] sm:$0xf]
        %v2979 = vld [vmem:[#allocation15 + $0x20] sm:$0xf]
        %v2980 = vld [vmem:[#allocation15 + $0x24] sm:$0xf]
        %v2981 = vld [vmem:[#allocation15 + $0x28] sm:$0xf]
        %v2982 = vld [vmem:[#allocation15 + $0x2c] sm:$0xf]
        %v2983 = vld [vmem:[#allocation15 + $0x30] sm:$0xf]
        %v2984 = vld [vmem:[#allocation15 + $0x34] sm:$0xf]
        %v2985 = vld [vmem:[#allocation15 + $0x38] sm:$0xf]
        %v2986 = vld [vmem:[#allocation15 + $0x3c] sm:$0xf]
        %v2987 = vld [vmem:[#allocation15 + $0x40] sm:$0xf]
        %v2988 = vld [vmem:[#allocation15 + $0x44] sm:$0xf]
        %v2989 = vld [vmem:[#allocation15 + $0x48] sm:$0xf]
        %v2990 = vld [vmem:[#allocation15 + $0x4c] sm:$0xf]
        %v2991 = vld [vmem:[#allocation15 + $0x50] sm:$0xf]
        %v2992 = vld [vmem:[#allocation15 + $0x54] sm:$0xf]
        %v2993 = vld [vmem:[#allocation15 + $0x58] sm:$0xf]
        %v2994 = vld [vmem:[#allocation15 + $0x5c] sm:$0xf]
        %v2995 = vld [vmem:[#allocation15 + $0x60] sm:$0xf]
        %v2996 = vld [vmem:[#allocation15 + $0x64] sm:$0xf]
        %v2997 = vld [vmem:[#allocation15 + $0x68] sm:$0xf]
        %v2998 = vld [vmem:[#allocation15 + $0x6c] sm:$0xf]
        %v2999 = vld [vmem:[#allocation15 + $0x70] sm:$0xf]
        %v3000 = vld [vmem:[#allocation15 + $0x74] sm:$0xf]
        %v3001 = vld [vmem:[#allocation15 + $0x78] sm:$0xf]
        %v3002 = vld [vmem:[#allocation15 + $0x7c] sm:$0xf]
        %v3003 = vpack.c.bf16 %v2969, %v2969
        %v3004 = vpack.c.bf16 %v2970, %v2970
        %v3005 = vld [vmem:[%s31] sm:$0x1]
        %v3007 = vperm.slane %v3005, 0
        %v3041 = vunpack.c.l.b16 %v2971
        %v3042 = vunpack.c.l.b16 %v2972
        %v3043 = vunpack.c.l.b16 %v2973
        %v3044 = vunpack.c.l.b16 %v2974
        %v3045 = vunpack.c.l.b16 %v2975
        %v3046 = vunpack.c.l.b16 %v2976
        %v3047 = vunpack.c.l.b16 %v2977
        %v3048 = vunpack.c.l.b16 %v2978
        %v3049 = vunpack.c.l.b16 %v2979
        %v3050 = vunpack.c.l.b16 %v2980
        %v3051 = vunpack.c.l.b16 %v2981
        %v3052 = vunpack.c.l.b16 %v2982
        %v3053 = vunpack.c.l.b16 %v2983
        %v3054 = vunpack.c.l.b16 %v2984
        %v3055 = vunpack.c.l.b16 %v2985
        %v3056 = vunpack.c.l.b16 %v2986
        %v3057 = vunpack.c.l.b16 %v2987
        %v3058 = vunpack.c.l.b16 %v2988
        %v3059 = vunpack.c.l.b16 %v2989
        %v3060 = vunpack.c.l.b16 %v2990
        %v3061 = vunpack.c.l.b16 %v2991
        %v3062 = vunpack.c.l.b16 %v2992
        %v3063 = vunpack.c.l.b16 %v2993
        %v3064 = vunpack.c.l.b16 %v2994
        %v3065 = vunpack.c.l.b16 %v2995
        %v3066 = vunpack.c.l.b16 %v2996
        %v3067 = vunpack.c.l.b16 %v2997
        %v3068 = vunpack.c.l.b16 %v2998
        %v3069 = vunpack.c.l.b16 %v2999
        %v3070 = vunpack.c.l.b16 %v3000
        %v3071 = vunpack.c.l.b16 %v3001
        %v3072 = vunpack.c.l.b16 %v3002
        %v3073 = vpack.c.b16 %v3042, %v3041
        %v3074 = vpack.c.b16 %v3044, %v3043
        %v3075 = vpack.c.b16 %v3046, %v3045
        %v3076 = vpack.c.b16 %v3048, %v3047
        %v3077 = vpack.c.b16 %v3050, %v3049
        %v3078 = vpack.c.b16 %v3052, %v3051
        %v3079 = vpack.c.b16 %v3054, %v3053
        %v3080 = vpack.c.b16 %v3056, %v3055
        %v3081 = vpack.c.b16 %v3058, %v3057
        %v3082 = vpack.c.b16 %v3060, %v3059
        %v3083 = vpack.c.b16 %v3062, %v3061
        %v3084 = vpack.c.b16 %v3064, %v3063
        %v3085 = vpack.c.b16 %v3066, %v3065
        %v3086 = vpack.c.b16 %v3068, %v3067
        %v3087 = vpack.c.b16 %v3070, %v3069
        %v3088 = vpack.c.b16 %v3072, %v3071
        %3105 = vmatpush.bf16.msra.mxu0 %v3080
        %3106 = vmatpush.bf16.msra.mxu0 %v3079
        %3107 = vmatpush.bf16.msra.mxu0 %v3078
        %3108 = vmatpush.bf16.msra.mxu0 %v3077
        %3109 = vmatpush.bf16.msra.mxu0 %v3076
        %3110 = vmatpush.bf16.msra.mxu0 %v3075
        %3111 = vmatpush.bf16.msra.mxu0 %v3074
        %3112 = vmatpush.bf16.msra.mxu0 %v3073
        %3113 = vmatmul.bf16.gmra.mxu0 %v3003
        %v3114 = vpop.f32.mrf.mxu0
        %v3115 = vadd.f32 %v3007, %v3114
        %v3116 = vpop.f32.mrf.mxu0
        %3117 = vdwg.mxu0
        %3118 = vmatpush.bf16.msra.mxu0 %v3088
        %3119 = vmatpush.bf16.msra.mxu0 %v3087
        %3120 = vmatpush.bf16.msra.mxu0 %v3086
        %3121 = vmatpush.bf16.msra.mxu0 %v3085
        %3122 = vmatpush.bf16.msra.mxu0 %v3084
        %3123 = vmatpush.bf16.msra.mxu0 %v3083
        %3124 = vmatpush.bf16.msra.mxu0 %v3082
        %3125 = vmatpush.bf16.msra.mxu0 %v3081
        %3126 = vmatmul.bf16.gmra.mxu0 %v3004
        %v3127 = vpop.f32.mrf.mxu0
        %v3128 = vadd.f32 %v3115, %v3127
        %v3129 = vpop.f32.mrf.mxu0
        %3130 = vdwg.mxu0
        %v3131 = vld [vmem:[#allocation16] sm:$0x1]
        %v3133 = vperm.slane %v3131, 0
        %v3135 = vmul.f32 %v3128, %v3133
        %v3136 = vld [vmem:[#allocation18] sm:$0x1]
        %v3138 = vperm.slane %v3136, 0
        %v3140 = vadd.f32 %v3135, %v3138
        %v3141 = vld [vmem:[#allocation19] sm:$0xff]
        %v3142 = vld [vmem:[#allocation19 + $0x8] sm:$0xff]
        %v3143 = vld [vmem:[#allocation19 + $0x10] sm:$0xff]
        %v3144 = vld [vmem:[#allocation19 + $0x18] sm:$0xff]
        %v3145 = vld [vmem:[#allocation19 + $0x20] sm:$0xff]
        %v3146 = vld [vmem:[#allocation19 + $0x28] sm:$0xff]
        %v3147 = vld [vmem:[#allocation19 + $0x30] sm:$0xff]
        %v3148 = vld [vmem:[#allocation19 + $0x38] sm:$0xff]
        %v3149 = vld [vmem:[#allocation19 + $0x40] sm:$0xff]
        %v3150 = vld [vmem:[#allocation19 + $0x48] sm:$0xff]
        %v3151 = vld [vmem:[#allocation19 + $0x50] sm:$0xff]
        %v3152 = vld [vmem:[#allocation19 + $0x58] sm:$0xff]
        %v3153 = vld [vmem:[#allocation19 + $0x60] sm:$0xff]
        %v3154 = vld [vmem:[#allocation19 + $0x68] sm:$0xff]
        %v3155 = vld [vmem:[#allocation19 + $0x70] sm:$0xff]
        %v3156 = vld [vmem:[#allocation19 + $0x78] sm:$0xff]
        %v3157 = vpack.c.bf16 %v3140, %v3140
        %v3158 = vld [vmem:[%s39] sm:$0x3]
        %v3160 = vperm.slane %v3158, 0
        %v3161 = vperm.slane %v3158, 1
        %v3180 = vunpack.c.l.b16 %v3141
        %v3181 = vunpack.c.h.b16 %v3141
        %v3182 = vunpack.c.l.b16 %v3142
        %v3183 = vunpack.c.h.b16 %v3142
        %v3184 = vunpack.c.l.b16 %v3143
        %v3185 = vunpack.c.h.b16 %v3143
        %v3186 = vunpack.c.l.b16 %v3144
        %v3187 = vunpack.c.h.b16 %v3144
        %v3188 = vunpack.c.l.b16 %v3145
        %v3189 = vunpack.c.h.b16 %v3145
        %v3190 = vunpack.c.l.b16 %v3146
        %v3191 = vunpack.c.h.b16 %v3146
        %v3192 = vunpack.c.l.b16 %v3147
        %v3193 = vunpack.c.h.b16 %v3147
        %v3194 = vunpack.c.l.b16 %v3148
        %v3195 = vunpack.c.h.b16 %v3148
        %v3196 = vunpack.c.l.b16 %v3149
        %v3197 = vunpack.c.h.b16 %v3149
        %v3198 = vunpack.c.l.b16 %v3150
        %v3199 = vunpack.c.h.b16 %v3150
        %v3200 = vunpack.c.l.b16 %v3151
        %v3201 = vunpack.c.h.b16 %v3151
        %v3202 = vunpack.c.l.b16 %v3152
        %v3203 = vunpack.c.h.b16 %v3152
        %v3204 = vunpack.c.l.b16 %v3153
        %v3205 = vunpack.c.h.b16 %v3153
        %v3206 = vunpack.c.l.b16 %v3154
        %v3207 = vunpack.c.h.b16 %v3154
        %v3208 = vunpack.c.l.b16 %v3155
        %v3209 = vunpack.c.h.b16 %v3155
        %v3210 = vunpack.c.l.b16 %v3156
        %v3211 = vunpack.c.h.b16 %v3156
        %v3212 = vpack.c.b16 %v3182, %v3180
        %v3213 = vpack.c.b16 %v3183, %v3181
        %v3214 = vpack.c.b16 %v3186, %v3184
        %v3215 = vpack.c.b16 %v3187, %v3185
        %v3216 = vpack.c.b16 %v3190, %v3188
        %v3217 = vpack.c.b16 %v3191, %v3189
        %v3218 = vpack.c.b16 %v3194, %v3192
        %v3219 = vpack.c.b16 %v3195, %v3193
        %v3220 = vpack.c.b16 %v3198, %v3196
        %v3221 = vpack.c.b16 %v3199, %v3197
        %v3222 = vpack.c.b16 %v3202, %v3200
        %v3223 = vpack.c.b16 %v3203, %v3201
        %v3224 = vpack.c.b16 %v3206, %v3204
        %v3225 = vpack.c.b16 %v3207, %v3205
        %v3226 = vpack.c.b16 %v3210, %v3208
        %v3227 = vpack.c.b16 %v3211, %v3209
        %3244 = vmatpush.bf16.msra.mxu0 %v3226
        %3245 = vmatpush.bf16.msra.mxu0 %v3224
        %3246 = vmatpush.bf16.msra.mxu0 %v3222
        %3247 = vmatpush.bf16.msra.mxu0 %v3220
        %3248 = vmatpush.bf16.msra.mxu0 %v3218
        %3249 = vmatpush.bf16.msra.mxu0 %v3216
        %3250 = vmatpush.bf16.msra.mxu0 %v3214
        %3251 = vmatpush.bf16.msra.mxu0 %v3212
        %3252 = vmatmul.bf16.gmra.mxu0 %v3157
        %v3253 = vpop.f32.mrf.mxu0
        %v3254 = vadd.f32 %v3160, %v3253
        %v3255 = vpop.f32.mrf.mxu0
        %3256 = vdwg.mxu0
        %3257 = vmatpush.bf16.msra.mxu0 %v3227
        %3258 = vmatpush.bf16.msra.mxu0 %v3225
        %3259 = vmatpush.bf16.msra.mxu0 %v3223
        %3260 = vmatpush.bf16.msra.mxu0 %v3221
        %3261 = vmatpush.bf16.msra.mxu0 %v3219
        %3262 = vmatpush.bf16.msra.mxu0 %v3217
        %3263 = vmatpush.bf16.msra.mxu0 %v3215
        %3264 = vmatpush.bf16.msra.mxu0 %v3213
        %3265 = vmatmul.bf16.gmra.mxu0 %v3157
        %v3266 = vpop.f32.mrf.mxu0
        %v3267 = vadd.f32 %v3161, %v3266
        %v3268 = vpop.f32.mrf.mxu0
        %3269 = vdwg.mxu0
        %v3270 = vmax.f32 %v3254, 0.0
        %v3271 = vmax.f32 %v3267, 0.0
        %v3272 = vld [vmem:[#allocation21] sm:$0xf]
        %v3273 = vld [vmem:[#allocation21 + $0x4] sm:$0xf]
        %v3274 = vld [vmem:[#allocation21 + $0x8] sm:$0xf]
        %v3275 = vld [vmem:[#allocation21 + $0xc] sm:$0xf]
        %v3276 = vld [vmem:[#allocation21 + $0x10] sm:$0xf]
        %v3277 = vld [vmem:[#allocation21 + $0x14] sm:$0xf]
        %v3278 = vld [vmem:[#allocation21 + $0x18] sm:$0xf]
        %v3279 = vld [vmem:[#allocation21 + $0x1c] sm:$0xf]
        %v3280 = vld [vmem:[#allocation21 + $0x20] sm:$0xf]
        %v3281 = vld [vmem:[#allocation21 + $0x24] sm:$0xf]
        %v3282 = vld [vmem:[#allocation21 + $0x28] sm:$0xf]
        %v3283 = vld [vmem:[#allocation21 + $0x2c] sm:$0xf]
        %v3284 = vld [vmem:[#allocation21 + $0x30] sm:$0xf]
        %v3285 = vld [vmem:[#allocation21 + $0x34] sm:$0xf]
        %v3286 = vld [vmem:[#allocation21 + $0x38] sm:$0xf]
        %v3287 = vld [vmem:[#allocation21 + $0x3c] sm:$0xf]
        %v3288 = vld [vmem:[#allocation21 + $0x40] sm:$0xf]
        %v3289 = vld [vmem:[#allocation21 + $0x44] sm:$0xf]
        %v3290 = vld [vmem:[#allocation21 + $0x48] sm:$0xf]
        %v3291 = vld [vmem:[#allocation21 + $0x4c] sm:$0xf]
        %v3292 = vld [vmem:[#allocation21 + $0x50] sm:$0xf]
        %v3293 = vld [vmem:[#allocation21 + $0x54] sm:$0xf]
        %v3294 = vld [vmem:[#allocation21 + $0x58] sm:$0xf]
        %v3295 = vld [vmem:[#allocation21 + $0x5c] sm:$0xf]
        %v3296 = vld [vmem:[#allocation21 + $0x60] sm:$0xf]
        %v3297 = vld [vmem:[#allocation21 + $0x64] sm:$0xf]
        %v3298 = vld [vmem:[#allocation21 + $0x68] sm:$0xf]
        %v3299 = vld [vmem:[#allocation21 + $0x6c] sm:$0xf]
        %v3300 = vld [vmem:[#allocation21 + $0x70] sm:$0xf]
        %v3301 = vld [vmem:[#allocation21 + $0x74] sm:$0xf]
        %v3302 = vld [vmem:[#allocation21 + $0x78] sm:$0xf]
        %v3303 = vld [vmem:[#allocation21 + $0x7c] sm:$0xf]
        %v3304 = vpack.c.bf16 %v3270, %v3270
        %v3305 = vpack.c.bf16 %v3271, %v3271
        %v3306 = vld [vmem:[%s43] sm:$0x1]
        %v3308 = vperm.slane %v3306, 0
        %v3342 = vunpack.c.l.b16 %v3272
        %v3343 = vunpack.c.l.b16 %v3273
        %v3344 = vunpack.c.l.b16 %v3274
        %v3345 = vunpack.c.l.b16 %v3275
        %v3346 = vunpack.c.l.b16 %v3276
        %v3347 = vunpack.c.l.b16 %v3277
        %v3348 = vunpack.c.l.b16 %v3278
        %v3349 = vunpack.c.l.b16 %v3279
        %v3350 = vunpack.c.l.b16 %v3280
        %v3351 = vunpack.c.l.b16 %v3281
        %v3352 = vunpack.c.l.b16 %v3282
        %v3353 = vunpack.c.l.b16 %v3283
        %v3354 = vunpack.c.l.b16 %v3284
        %v3355 = vunpack.c.l.b16 %v3285
        %v3356 = vunpack.c.l.b16 %v3286
        %v3357 = vunpack.c.l.b16 %v3287
        %v3358 = vunpack.c.l.b16 %v3288
        %v3359 = vunpack.c.l.b16 %v3289
        %v3360 = vunpack.c.l.b16 %v3290
        %v3361 = vunpack.c.l.b16 %v3291
        %v3362 = vunpack.c.l.b16 %v3292
        %v3363 = vunpack.c.l.b16 %v3293
        %v3364 = vunpack.c.l.b16 %v3294
        %v3365 = vunpack.c.l.b16 %v3295
        %v3366 = vunpack.c.l.b16 %v3296
        %v3367 = vunpack.c.l.b16 %v3297
        %v3368 = vunpack.c.l.b16 %v3298
        %v3369 = vunpack.c.l.b16 %v3299
        %v3370 = vunpack.c.l.b16 %v3300
        %v3371 = vunpack.c.l.b16 %v3301
        %v3372 = vunpack.c.l.b16 %v3302
        %v3373 = vunpack.c.l.b16 %v3303
        %v3374 = vpack.c.b16 %v3343, %v3342
        %v3375 = vpack.c.b16 %v3345, %v3344
        %v3376 = vpack.c.b16 %v3347, %v3346
        %v3377 = vpack.c.b16 %v3349, %v3348
        %v3378 = vpack.c.b16 %v3351, %v3350
        %v3379 = vpack.c.b16 %v3353, %v3352
        %v3380 = vpack.c.b16 %v3355, %v3354
        %v3381 = vpack.c.b16 %v3357, %v3356
        %v3382 = vpack.c.b16 %v3359, %v3358
        %v3383 = vpack.c.b16 %v3361, %v3360
        %v3384 = vpack.c.b16 %v3363, %v3362
        %v3385 = vpack.c.b16 %v3365, %v3364
        %v3386 = vpack.c.b16 %v3367, %v3366
        %v3387 = vpack.c.b16 %v3369, %v3368
        %v3388 = vpack.c.b16 %v3371, %v3370
        %v3389 = vpack.c.b16 %v3373, %v3372
        %3406 = vmatpush.bf16.msra.mxu0 %v3381
        %3407 = vmatpush.bf16.msra.mxu0 %v3380
        %3408 = vmatpush.bf16.msra.mxu0 %v3379
        %3409 = vmatpush.bf16.msra.mxu0 %v3378
        %3410 = vmatpush.bf16.msra.mxu0 %v3377
        %3411 = vmatpush.bf16.msra.mxu0 %v3376
        %3412 = vmatpush.bf16.msra.mxu0 %v3375
        %3413 = vmatpush.bf16.msra.mxu0 %v3374
        %3414 = vmatmul.bf16.gmra.mxu0 %v3304
        %v3415 = vpop.f32.mrf.mxu0
        %v3416 = vadd.f32 %v3308, %v3415
        %v3417 = vpop.f32.mrf.mxu0
        %3418 = vdwg.mxu0
        %3419 = vmatpush.bf16.msra.mxu0 %v3389
        %3420 = vmatpush.bf16.msra.mxu0 %v3388
        %3421 = vmatpush.bf16.msra.mxu0 %v3387
        %3422 = vmatpush.bf16.msra.mxu0 %v3386
        %3423 = vmatpush.bf16.msra.mxu0 %v3385
        %3424 = vmatpush.bf16.msra.mxu0 %v3384
        %3425 = vmatpush.bf16.msra.mxu0 %v3383
        %3426 = vmatpush.bf16.msra.mxu0 %v3382
        %3427 = vmatmul.bf16.gmra.mxu0 %v3305
        %v3428 = vpop.f32.mrf.mxu0
        %v3429 = vadd.f32 %v3416, %v3428
        %v3430 = vpop.f32.mrf.mxu0
        %3431 = vdwg.mxu0
        %v3432 = vadd.f32 %v3429, %v3128
        %v3433 = vpack.c.bf16 %v3432, %v3432
        %v3434 = vld [vmem:[#allocation25] sm:$0x1]
        %v3435 = vld [vmem:[#allocation22] sm:$0x3]
        %vm3436 = vcmask 64512
        %v3438 = vsel %vm3436, %v3435, 0
        %vm3440 = vcmask 1043456
        %v3442 = vsel %vm3440, %v3433, 0
        %3444 = vmatpush.bf16.msra.mxu0 0
        %3445 = vmatpush.bf16.msra.mxu0 0
        %3446 = vmatpush.bf16.msra.mxu0 0
        %3447 = vmatpush.bf16.msra.mxu0 0
        %3448 = vmatpush.bf16.msra.mxu0 0
        %3449 = vmatpush.bf16.msra.mxu0 0
        %3450 = vmatpush.bf16.msra.mxu0 0
        %3451 = vmatpush.bf16.msra.mxu0 %v3442
        %3452 = vmatmul.bf16.gmra.mxu0 %v3438
        %v3453 = vpop.f32.mrf.mxu0
        %v3454 = vadd.f32 0.0, %v3453
        %v3455 = vpop.f32.mrf.mxu0
        %3456 = vdwg.mxu0
        %v3457 = vld [vmem:[#allocation24] sm:$0xf]
        %v3458 = vld [vmem:[#allocation24 + $0x4] sm:$0xf]
        %v3459 = vld [vmem:[#allocation24 + $0x8] sm:$0xf]
        %v3460 = vld [vmem:[#allocation24 + $0xc] sm:$0xf]
        %v3461 = vld [vmem:[#allocation24 + $0x10] sm:$0xf]
        %v3462 = vld [vmem:[#allocation24 + $0x14] sm:$0xf]
        %v3463 = vld [vmem:[#allocation24 + $0x18] sm:$0xf]
        %v3464 = vld [vmem:[#allocation24 + $0x1c] sm:$0xf]
        %v3465 = vld [vmem:[#allocation24 + $0x20] sm:$0xf]
        %v3466 = vld [vmem:[#allocation24 + $0x24] sm:$0xf]
        %v3467 = vld [vmem:[#allocation24 + $0x28] sm:$0xf]
        %v3468 = vld [vmem:[#allocation24 + $0x2c] sm:$0xf]
        %v3469 = vld [vmem:[#allocation24 + $0x30] sm:$0xf]
        %v3470 = vld [vmem:[#allocation24 + $0x34] sm:$0xf]
        %v3471 = vld [vmem:[#allocation24 + $0x38] sm:$0xf]
        %v3472 = vld [vmem:[#allocation24 + $0x3c] sm:$0xf]
        %v3473 = vpack.c.bf16 %v3454, %v3454
        %v3490 = vunpack.c.l.b16 %v3457
        %v3491 = vunpack.c.l.b16 %v3458
        %v3492 = vunpack.c.l.b16 %v3459
        %v3493 = vunpack.c.l.b16 %v3460
        %v3494 = vunpack.c.l.b16 %v3461
        %v3495 = vunpack.c.l.b16 %v3462
        %v3496 = vunpack.c.l.b16 %v3463
        %v3497 = vunpack.c.l.b16 %v3464
        %v3498 = vunpack.c.l.b16 %v3465
        %v3499 = vunpack.c.l.b16 %v3466
        %v3500 = vunpack.c.l.b16 %v3467
        %v3501 = vunpack.c.l.b16 %v3468
        %v3502 = vunpack.c.l.b16 %v3469
        %v3503 = vunpack.c.l.b16 %v3470
        %v3504 = vunpack.c.l.b16 %v3471
        %v3505 = vunpack.c.l.b16 %v3472
        %v3506 = vpack.c.b16 %v3491, %v3490
        %v3507 = vpack.c.b16 %v3493, %v3492
        %v3508 = vpack.c.b16 %v3495, %v3494
        %v3509 = vpack.c.b16 %v3497, %v3496
        %v3510 = vpack.c.b16 %v3499, %v3498
        %v3511 = vpack.c.b16 %v3501, %v3500
        %v3512 = vpack.c.b16 %v3503, %v3502
        %v3513 = vpack.c.b16 %v3505, %v3504
        %3522 = vmatpush.bf16.msra.mxu0 %v3513
        %3523 = vmatpush.bf16.msra.mxu0 %v3512
        %3524 = vmatpush.bf16.msra.mxu0 %v3511
        %3525 = vmatpush.bf16.msra.mxu0 %v3510
        %3526 = vmatpush.bf16.msra.mxu0 %v3509
        %3527 = vmatpush.bf16.msra.mxu0 %v3508
        %3528 = vmatpush.bf16.msra.mxu0 %v3507
        %3529 = vmatpush.bf16.msra.mxu0 %v3506
        %3530 = vmatmul.bf16.gmra.mxu0 %v3473
        %v3531 = vpop.f32.mrf.mxu0
        %v3532 = vadd.f32 0.0, %v3531
        %v3533 = vpop.f32.mrf.mxu0
        %3534 = vdwg.mxu0
        %v3536 = vperm.slane %v3434, 0
        %v3538 = vadd.f32 %v3536, %v3532
        %s3539 = scalar_lea.vmem [#allocation22], 2
        %v3540 = vld [vmem:[%s3539] sm:$0x3]
        %v3542 = vsel %vm3436, %v3540, 0
        %3544 = vmatpush.bf16.msra.mxu0 0
        %3545 = vmatpush.bf16.msra.mxu0 0
        %3546 = vmatpush.bf16.msra.mxu0 0
        %3547 = vmatpush.bf16.msra.mxu0 0
        %3548 = vmatpush.bf16.msra.mxu0 0
        %3549 = vmatpush.bf16.msra.mxu0 0
        %3550 = vmatpush.bf16.msra.mxu0 0
        %3551 = vmatpush.bf16.msra.mxu0 %v3442
        %3552 = vmatmul.bf16.gmra.mxu0 %v3542
        %v3553 = vpop.f32.mrf.mxu0
        %v3554 = vadd.f32 0.0, %v3553
        %v3555 = vpop.f32.mrf.mxu0
        %3556 = vdwg.mxu0
        %s3557 = scalar_lea.vmem [#allocation24], 64
        %v3558 = vld [vmem:[%s3557] sm:$0xf]
        %v3559 = vld [vmem:[%s3557 + $0x4] sm:$0xf]
        %v3560 = vld [vmem:[%s3557 + $0x8] sm:$0xf]
        %v3561 = vld [vmem:[%s3557 + $0xc] sm:$0xf]
        %v3562 = vld [vmem:[%s3557 + $0x10] sm:$0xf]
        %v3563 = vld [vmem:[%s3557 + $0x14] sm:$0xf]
        %v3564 = vld [vmem:[%s3557 + $0x18] sm:$0xf]
        %v3565 = vld [vmem:[%s3557 + $0x1c] sm:$0xf]
        %v3566 = vld [vmem:[%s3557 + $0x20] sm:$0xf]
        %v3567 = vld [vmem:[%s3557 + $0x24] sm:$0xf]
        %v3568 = vld [vmem:[%s3557 + $0x28] sm:$0xf]
        %v3569 = vld [vmem:[%s3557 + $0x2c] sm:$0xf]
        %v3570 = vld [vmem:[%s3557 + $0x30] sm:$0xf]
        %v3571 = vld [vmem:[%s3557 + $0x34] sm:$0xf]
        %v3572 = vld [vmem:[%s3557 + $0x38] sm:$0xf]
        %v3573 = vld [vmem:[%s3557 + $0x3c] sm:$0xf]
        %v3574 = vpack.c.bf16 %v3554, %v3554
        %v3591 = vunpack.c.l.b16 %v3558
        %v3592 = vunpack.c.l.b16 %v3559
        %v3593 = vunpack.c.l.b16 %v3560
        %v3594 = vunpack.c.l.b16 %v3561
        %v3595 = vunpack.c.l.b16 %v3562
        %v3596 = vunpack.c.l.b16 %v3563
        %v3597 = vunpack.c.l.b16 %v3564
        %v3598 = vunpack.c.l.b16 %v3565
        %v3599 = vunpack.c.l.b16 %v3566
        %v3600 = vunpack.c.l.b16 %v3567
        %v3601 = vunpack.c.l.b16 %v3568
        %v3602 = vunpack.c.l.b16 %v3569
        %v3603 = vunpack.c.l.b16 %v3570
        %v3604 = vunpack.c.l.b16 %v3571
        %v3605 = vunpack.c.l.b16 %v3572
        %v3606 = vunpack.c.l.b16 %v3573
        %v3607 = vpack.c.b16 %v3592, %v3591
        %v3608 = vpack.c.b16 %v3594, %v3593
        %v3609 = vpack.c.b16 %v3596, %v3595
        %v3610 = vpack.c.b16 %v3598, %v3597
        %v3611 = vpack.c.b16 %v3600, %v3599
        %v3612 = vpack.c.b16 %v3602, %v3601
        %v3613 = vpack.c.b16 %v3604, %v3603
        %v3614 = vpack.c.b16 %v3606, %v3605
        %3623 = vmatpush.bf16.msra.mxu0 %v3614
        %3624 = vmatpush.bf16.msra.mxu0 %v3613
        %3625 = vmatpush.bf16.msra.mxu0 %v3612
        %3626 = vmatpush.bf16.msra.mxu0 %v3611
        %3627 = vmatpush.bf16.msra.mxu0 %v3610
        %3628 = vmatpush.bf16.msra.mxu0 %v3609
        %3629 = vmatpush.bf16.msra.mxu0 %v3608
        %3630 = vmatpush.bf16.msra.mxu0 %v3607
        %3631 = vmatmul.bf16.gmra.mxu0 %v3574
        %v3632 = vpop.f32.mrf.mxu0
        %v3633 = vadd.f32 0.0, %v3632
        %v3634 = vpop.f32.mrf.mxu0
        %3635 = vdwg.mxu0
        %v3636 = vadd.f32 %v3538, %v3633
        %s3637 = scalar_lea.vmem [#allocation22], 4
        %v3638 = vld [vmem:[%s3637] sm:$0x3]
        %v3640 = vsel %vm3436, %v3638, 0
        %3642 = vmatpush.bf16.msra.mxu0 0
        %3643 = vmatpush.bf16.msra.mxu0 0
        %3644 = vmatpush.bf16.msra.mxu0 0
        %3645 = vmatpush.bf16.msra.mxu0 0
        %3646 = vmatpush.bf16.msra.mxu0 0
        %3647 = vmatpush.bf16.msra.mxu0 0
        %3648 = vmatpush.bf16.msra.mxu0 0
        %3649 = vmatpush.bf16.msra.mxu0 %v3442
        %3650 = vmatmul.bf16.gmra.mxu0 %v3640
        %v3651 = vpop.f32.mrf.mxu0
        %v3652 = vadd.f32 0.0, %v3651
        %v3653 = vpop.f32.mrf.mxu0
        %3654 = vdwg.mxu0
        %s3655 = scalar_lea.vmem [#allocation24], 128
        %v3656 = vld [vmem:[%s3655] sm:$0xf]
        %v3657 = vld [vmem:[%s3655 + $0x4] sm:$0xf]
        %v3658 = vld [vmem:[%s3655 + $0x8] sm:$0xf]
        %v3659 = vld [vmem:[%s3655 + $0xc] sm:$0xf]
        %v3660 = vld [vmem:[%s3655 + $0x10] sm:$0xf]
        %v3661 = vld [vmem:[%s3655 + $0x14] sm:$0xf]
        %v3662 = vld [vmem:[%s3655 + $0x18] sm:$0xf]
        %v3663 = vld [vmem:[%s3655 + $0x1c] sm:$0xf]
        %v3664 = vld [vmem:[%s3655 + $0x20] sm:$0xf]
        %v3665 = vld [vmem:[%s3655 + $0x24] sm:$0xf]
        %v3666 = vld [vmem:[%s3655 + $0x28] sm:$0xf]
        %v3667 = vld [vmem:[%s3655 + $0x2c] sm:$0xf]
        %v3668 = vld [vmem:[%s3655 + $0x30] sm:$0xf]
        %v3669 = vld [vmem:[%s3655 + $0x34] sm:$0xf]
        %v3670 = vld [vmem:[%s3655 + $0x38] sm:$0xf]
        %v3671 = vld [vmem:[%s3655 + $0x3c] sm:$0xf]
        %v3672 = vpack.c.bf16 %v3652, %v3652
        %v3689 = vunpack.c.l.b16 %v3656
        %v3690 = vunpack.c.l.b16 %v3657
        %v3691 = vunpack.c.l.b16 %v3658
        %v3692 = vunpack.c.l.b16 %v3659
        %v3693 = vunpack.c.l.b16 %v3660
        %v3694 = vunpack.c.l.b16 %v3661
        %v3695 = vunpack.c.l.b16 %v3662
        %v3696 = vunpack.c.l.b16 %v3663
        %v3697 = vunpack.c.l.b16 %v3664
        %v3698 = vunpack.c.l.b16 %v3665
        %v3699 = vunpack.c.l.b16 %v3666
        %v3700 = vunpack.c.l.b16 %v3667
        %v3701 = vunpack.c.l.b16 %v3668
        %v3702 = vunpack.c.l.b16 %v3669
        %v3703 = vunpack.c.l.b16 %v3670
        %v3704 = vunpack.c.l.b16 %v3671
        %v3705 = vpack.c.b16 %v3690, %v3689
        %v3706 = vpack.c.b16 %v3692, %v3691
        %v3707 = vpack.c.b16 %v3694, %v3693
        %v3708 = vpack.c.b16 %v3696, %v3695
        %v3709 = vpack.c.b16 %v3698, %v3697
        %v3710 = vpack.c.b16 %v3700, %v3699
        %v3711 = vpack.c.b16 %v3702, %v3701
        %v3712 = vpack.c.b16 %v3704, %v3703
        %3721 = vmatpush.bf16.msra.mxu0 %v3712
        %3722 = vmatpush.bf16.msra.mxu0 %v3711
        %3723 = vmatpush.bf16.msra.mxu0 %v3710
        %3724 = vmatpush.bf16.msra.mxu0 %v3709
        %3725 = vmatpush.bf16.msra.mxu0 %v3708
        %3726 = vmatpush.bf16.msra.mxu0 %v3707
        %3727 = vmatpush.bf16.msra.mxu0 %v3706
        %3728 = vmatpush.bf16.msra.mxu0 %v3705
        %3729 = vmatmul.bf16.gmra.mxu0 %v3672
        %v3730 = vpop.f32.mrf.mxu0
        %v3731 = vadd.f32 0.0, %v3730
        %v3732 = vpop.f32.mrf.mxu0
        %3733 = vdwg.mxu0
        %v3734 = vadd.f32 %v3636, %v3731
        %v3735 = vmax.f32 %v3734, 0.0
        %v3736 = vld [vmem:[#allocation27] sm:$0x1]
        %v3738 = vperm.slane %v3736, 0
        %v3740 = vmul.f32 %v3735, %v3738
        %v3741 = vld [vmem:[#allocation28] sm:$0x1]
        %v3743 = vperm.slane %v3741, 0
        %v3745 = vadd.f32 %v3740, %v3743
        %v3746 = vld [vmem:[#allocation30] sm:$0xff]
        %v3747 = vld [vmem:[#allocation30 + $0x8] sm:$0xff]
        %v3748 = vld [vmem:[#allocation30 + $0x10] sm:$0xff]
        %v3749 = vld [vmem:[#allocation30 + $0x18] sm:$0xff]
        %v3750 = vld [vmem:[#allocation30 + $0x20] sm:$0xff]
        %v3751 = vld [vmem:[#allocation30 + $0x28] sm:$0xff]
        %v3752 = vld [vmem:[#allocation30 + $0x30] sm:$0xff]
        %v3753 = vld [vmem:[#allocation30 + $0x38] sm:$0xff]
        %v3754 = vld [vmem:[#allocation30 + $0x40] sm:$0xff]
        %v3755 = vld [vmem:[#allocation30 + $0x48] sm:$0xff]
        %v3756 = vld [vmem:[#allocation30 + $0x50] sm:$0xff]
        %v3757 = vld [vmem:[#allocation30 + $0x58] sm:$0xff]
        %v3758 = vpack.c.bf16 %v3745, %v3745
        %v3759 = vld [vmem:[%s57] sm:$0x3]
        %v3761 = vperm.slane %v3759, 0
        %v3762 = vperm.slane %v3759, 1
        %v3777 = vunpack.c.l.b16 %v3746
        %v3778 = vunpack.c.h.b16 %v3746
        %v3779 = vunpack.c.l.b16 %v3747
        %v3780 = vunpack.c.h.b16 %v3747
        %v3781 = vunpack.c.l.b16 %v3748
        %v3782 = vunpack.c.h.b16 %v3748
        %v3783 = vunpack.c.l.b16 %v3749
        %v3784 = vunpack.c.h.b16 %v3749
        %v3785 = vunpack.c.l.b16 %v3750
        %v3786 = vunpack.c.h.b16 %v3750
        %v3787 = vunpack.c.l.b16 %v3751
        %v3788 = vunpack.c.h.b16 %v3751
        %v3789 = vunpack.c.l.b16 %v3752
        %v3790 = vunpack.c.h.b16 %v3752
        %v3791 = vunpack.c.l.b16 %v3753
        %v3792 = vunpack.c.h.b16 %v3753
        %v3793 = vunpack.c.l.b16 %v3754
        %v3794 = vunpack.c.h.b16 %v3754
        %v3795 = vunpack.c.l.b16 %v3755
        %v3796 = vunpack.c.h.b16 %v3755
        %v3797 = vunpack.c.l.b16 %v3756
        %v3798 = vunpack.c.h.b16 %v3756
        %v3799 = vunpack.c.l.b16 %v3757
        %v3800 = vunpack.c.h.b16 %v3757
        %v3801 = vpack.c.b16 %v3779, %v3777
        %v3802 = vpack.c.b16 %v3780, %v3778
        %v3803 = vpack.c.b16 %v3783, %v3781
        %v3804 = vpack.c.b16 %v3784, %v3782
        %v3805 = vpack.c.b16 %v3787, %v3785
        %v3806 = vpack.c.b16 %v3788, %v3786
        %v3807 = vpack.c.b16 %v3791, %v3789
        %v3808 = vpack.c.b16 %v3792, %v3790
        %v3809 = vpack.c.b16 %v3795, %v3793
        %v3810 = vpack.c.b16 %v3796, %v3794
        %v3811 = vpack.c.b16 %v3799, %v3797
        %v3812 = vpack.c.b16 %v3800, %v3798
        %v3826 = vsel %vm1824, %v3758, 0
        %3828 = vmatpush.bf16.msra.mxu0 0
        %3829 = vmatpush.bf16.msra.mxu0 0
        %3830 = vmatpush.bf16.msra.mxu0 %v3811
        %3831 = vmatpush.bf16.msra.mxu0 %v3809
        %3832 = vmatpush.bf16.msra.mxu0 %v3807
        %3833 = vmatpush.bf16.msra.mxu0 %v3805
        %3834 = vmatpush.bf16.msra.mxu0 %v3803
        %3835 = vmatpush.bf16.msra.mxu0 %v3801
        %3836 = vmatmul.bf16.gmra.mxu0 %v3826
        %v3837 = vpop.f32.mrf.mxu0
        %v3838 = vadd.f32 %v3761, %v3837
        %v3839 = vpop.f32.mrf.mxu0
        %3840 = vdwg.mxu0
        %3841 = vmatpush.bf16.msra.mxu0 0
        %3842 = vmatpush.bf16.msra.mxu0 0
        %3843 = vmatpush.bf16.msra.mxu0 %v3812
        %3844 = vmatpush.bf16.msra.mxu0 %v3810
        %3845 = vmatpush.bf16.msra.mxu0 %v3808
        %3846 = vmatpush.bf16.msra.mxu0 %v3806
        %3847 = vmatpush.bf16.msra.mxu0 %v3804
        %3848 = vmatpush.bf16.msra.mxu0 %v3802
        %3849 = vmatmul.bf16.gmra.mxu0 %v3826
        %v3850 = vpop.f32.mrf.mxu0
        %v3851 = vadd.f32 %v3762, %v3850
        %v3852 = vpop.f32.mrf.mxu0
        %3853 = vdwg.mxu0
        %v3854 = vmax.f32 %v3838, 0.0
        %v3855 = vmax.f32 %v3851, 0.0
        %v3856 = vld [vmem:[#allocation31] sm:$0xf]
        %v3857 = vld [vmem:[#allocation31 + $0x4] sm:$0xf]
        %v3858 = vld [vmem:[#allocation31 + $0x8] sm:$0xf]
        %v3859 = vld [vmem:[#allocation31 + $0xc] sm:$0xf]
        %v3860 = vld [vmem:[#allocation31 + $0x10] sm:$0xf]
        %v3861 = vld [vmem:[#allocation31 + $0x14] sm:$0xf]
        %v3862 = vld [vmem:[#allocation31 + $0x18] sm:$0xf]
        %v3863 = vld [vmem:[#allocation31 + $0x1c] sm:$0xf]
        %v3864 = vld [vmem:[#allocation31 + $0x20] sm:$0xf]
        %v3865 = vld [vmem:[#allocation31 + $0x24] sm:$0xf]
        %v3866 = vld [vmem:[#allocation31 + $0x28] sm:$0xf]
        %v3867 = vld [vmem:[#allocation31 + $0x2c] sm:$0xf]
        %v3868 = vld [vmem:[#allocation31 + $0x30] sm:$0xf]
        %v3869 = vld [vmem:[#allocation31 + $0x34] sm:$0xf]
        %v3870 = vld [vmem:[#allocation31 + $0x38] sm:$0xf]
        %v3871 = vld [vmem:[#allocation31 + $0x3c] sm:$0xf]
        %v3872 = vld [vmem:[#allocation31 + $0x40] sm:$0xf]
        %v3873 = vld [vmem:[#allocation31 + $0x44] sm:$0xf]
        %v3874 = vld [vmem:[#allocation31 + $0x48] sm:$0xf]
        %v3875 = vld [vmem:[#allocation31 + $0x4c] sm:$0xf]
        %v3876 = vld [vmem:[#allocation31 + $0x50] sm:$0xf]
        %v3877 = vld [vmem:[#allocation31 + $0x54] sm:$0xf]
        %v3878 = vld [vmem:[#allocation31 + $0x58] sm:$0xf]
        %v3879 = vld [vmem:[#allocation31 + $0x5c] sm:$0xf]
        %v3880 = vpack.c.bf16 %v3854, %v3854
        %v3881 = vpack.c.bf16 %v3855, %v3855
        %v3882 = vld [vmem:[%s61] sm:$0x1]
        %v3884 = vperm.slane %v3882, 0
        %v3910 = vunpack.c.l.b16 %v3856
        %v3911 = vunpack.c.l.b16 %v3857
        %v3912 = vunpack.c.l.b16 %v3858
        %v3913 = vunpack.c.l.b16 %v3859
        %v3914 = vunpack.c.l.b16 %v3860
        %v3915 = vunpack.c.l.b16 %v3861
        %v3916 = vunpack.c.l.b16 %v3862
        %v3917 = vunpack.c.l.b16 %v3863
        %v3918 = vunpack.c.l.b16 %v3864
        %v3919 = vunpack.c.l.b16 %v3865
        %v3920 = vunpack.c.l.b16 %v3866
        %v3921 = vunpack.c.l.b16 %v3867
        %v3922 = vunpack.c.l.b16 %v3868
        %v3923 = vunpack.c.l.b16 %v3869
        %v3924 = vunpack.c.l.b16 %v3870
        %v3925 = vunpack.c.l.b16 %v3871
        %v3926 = vunpack.c.l.b16 %v3872
        %v3927 = vunpack.c.l.b16 %v3873
        %v3928 = vunpack.c.l.b16 %v3874
        %v3929 = vunpack.c.l.b16 %v3875
        %v3930 = vunpack.c.l.b16 %v3876
        %v3931 = vunpack.c.l.b16 %v3877
        %v3932 = vunpack.c.l.b16 %v3878
        %v3933 = vunpack.c.l.b16 %v3879
        %v3934 = vpack.c.b16 %v3911, %v3910
        %v3935 = vpack.c.b16 %v3913, %v3912
        %v3936 = vpack.c.b16 %v3915, %v3914
        %v3937 = vpack.c.b16 %v3917, %v3916
        %v3938 = vpack.c.b16 %v3919, %v3918
        %v3939 = vpack.c.b16 %v3921, %v3920
        %v3940 = vpack.c.b16 %v3923, %v3922
        %v3941 = vpack.c.b16 %v3925, %v3924
        %v3942 = vpack.c.b16 %v3927, %v3926
        %v3943 = vpack.c.b16 %v3929, %v3928
        %v3944 = vpack.c.b16 %v3931, %v3930
        %v3945 = vpack.c.b16 %v3933, %v3932
        %v3959 = vsel %vm2937, %v3881, 0
        %3961 = vmatpush.bf16.msra.mxu0 %v3941
        %3962 = vmatpush.bf16.msra.mxu0 %v3940
        %3963 = vmatpush.bf16.msra.mxu0 %v3939
        %3964 = vmatpush.bf16.msra.mxu0 %v3938
        %3965 = vmatpush.bf16.msra.mxu0 %v3937
        %3966 = vmatpush.bf16.msra.mxu0 %v3936
        %3967 = vmatpush.bf16.msra.mxu0 %v3935
        %3968 = vmatpush.bf16.msra.mxu0 %v3934
        %3969 = vmatmul.bf16.gmra.mxu0 %v3880
        %v3970 = vpop.f32.mrf.mxu0
        %v3971 = vadd.f32 %v3884, %v3970
        %v3972 = vpop.f32.mrf.mxu0
        %3973 = vdwg.mxu0
        %3974 = vmatpush.bf16.msra.mxu0 0
        %3975 = vmatpush.bf16.msra.mxu0 0
        %3976 = vmatpush.bf16.msra.mxu0 0
        %3977 = vmatpush.bf16.msra.mxu0 0
        %3978 = vmatpush.bf16.msra.mxu0 %v3945
        %3979 = vmatpush.bf16.msra.mxu0 %v3944
        %3980 = vmatpush.bf16.msra.mxu0 %v3943
        %3981 = vmatpush.bf16.msra.mxu0 %v3942
        %3982 = vmatmul.bf16.gmra.mxu0 %v3959
        %v3983 = vpop.f32.mrf.mxu0
        %v3984 = vadd.f32 %v3971, %v3983
        %v3985 = vpop.f32.mrf.mxu0
        %3986 = vdwg.mxu0
        %v3987 = vadd.f32 %v3984, %v3735
        %v3988 = vpack.c.bf16 %v3987, %v3987
        %v3989 = vld [vmem:[#allocation36] sm:$0x1]
        %v3990 = vld [vmem:[#allocation33] sm:$0x1]
        %vm3991 = vcmask 31744
        %v3993 = vsel %vm3991, %v3990, 0
        %vm3995 = vcmask 1041408
        %v3997 = vsel %vm3995, %v3988, 0
        %3999 = vmatpush.bf16.msra.mxu0 0
        %4000 = vmatpush.bf16.msra.mxu0 0
        %4001 = vmatpush.bf16.msra.mxu0 0
        %4002 = vmatpush.bf16.msra.mxu0 0
        %4003 = vmatpush.bf16.msra.mxu0 0
        %4004 = vmatpush.bf16.msra.mxu0 0
        %4005 = vmatpush.bf16.msra.mxu0 0
        %4006 = vmatpush.bf16.msra.mxu0 %v3997
        %4007 = vmatmul.bf16.gmra.mxu0 %v3993
        %v4008 = vpop.f32.mrf.mxu0
        %v4009 = vadd.f32 0.0, %v4008
        %v4010 = vpop.f32.mrf.mxu0
        %4011 = vdwg.mxu0
        %v4012 = vld [vmem:[#allocation34] sm:$0xf]
        %v4013 = vld [vmem:[#allocation34 + $0x4] sm:$0xf]
        %v4014 = vld [vmem:[#allocation34 + $0x8] sm:$0xf]
        %v4015 = vld [vmem:[#allocation34 + $0xc] sm:$0xf]
        %v4016 = vld [vmem:[#allocation34 + $0x10] sm:$0xf]
        %v4017 = vld [vmem:[#allocation34 + $0x14] sm:$0xf]
        %v4018 = vld [vmem:[#allocation34 + $0x18] sm:$0xf]
        %v4019 = vld [vmem:[#allocation34 + $0x1c] sm:$0xf]
        %v4020 = vld [vmem:[#allocation34 + $0x20] sm:$0xf]
        %v4021 = vld [vmem:[#allocation34 + $0x24] sm:$0xf]
        %v4022 = vld [vmem:[#allocation34 + $0x28] sm:$0xf]
        %v4023 = vld [vmem:[#allocation34 + $0x2c] sm:$0xf]
        %v4024 = vpack.c.bf16 %v4009, %v4009
        %v4037 = vunpack.c.l.b16 %v4012
        %v4038 = vunpack.c.l.b16 %v4013
        %v4039 = vunpack.c.l.b16 %v4014
        %v4040 = vunpack.c.l.b16 %v4015
        %v4041 = vunpack.c.l.b16 %v4016
        %v4042 = vunpack.c.l.b16 %v4017
        %v4043 = vunpack.c.l.b16 %v4018
        %v4044 = vunpack.c.l.b16 %v4019
        %v4045 = vunpack.c.l.b16 %v4020
        %v4046 = vunpack.c.l.b16 %v4021
        %v4047 = vunpack.c.l.b16 %v4022
        %v4048 = vunpack.c.l.b16 %v4023
        %v4049 = vpack.c.b16 %v4038, %v4037
        %v4050 = vpack.c.b16 %v4040, %v4039
        %v4051 = vpack.c.b16 %v4042, %v4041
        %v4052 = vpack.c.b16 %v4044, %v4043
        %v4053 = vpack.c.b16 %v4046, %v4045
        %v4054 = vpack.c.b16 %v4048, %v4047
        %v4062 = vsel %vm1824, %v4024, 0
        %4064 = vmatpush.bf16.msra.mxu0 0
        %4065 = vmatpush.bf16.msra.mxu0 0
        %4066 = vmatpush.bf16.msra.mxu0 %v4054
        %4067 = vmatpush.bf16.msra.mxu0 %v4053
        %4068 = vmatpush.bf16.msra.mxu0 %v4052
        %4069 = vmatpush.bf16.msra.mxu0 %v4051
        %4070 = vmatpush.bf16.msra.mxu0 %v4050
        %4071 = vmatpush.bf16.msra.mxu0 %v4049
        %4072 = vmatmul.bf16.gmra.mxu0 %v4062
        %v4073 = vpop.f32.mrf.mxu0
        %v4074 = vadd.f32 0.0, %v4073
        %v4075 = vpop.f32.mrf.mxu0
        %4076 = vdwg.mxu0
        %v4078 = vperm.slane %v3989, 0
        %v4080 = vadd.f32 %v4078, %v4074
        %s4081 = scalar_lea.vmem [#allocation33], 1
        %v4082 = vld [vmem:[%s4081] sm:$0x1]
        %v4084 = vsel %vm3991, %v4082, 0
        %4086 = vmatpush.bf16.msra.mxu0 0
        %4087 = vmatpush.bf16.msra.mxu0 0
        %4088 = vmatpush.bf16.msra.mxu0 0
        %4089 = vmatpush.bf16.msra.mxu0 0
        %4090 = vmatpush.bf16.msra.mxu0 0
        %4091 = vmatpush.bf16.msra.mxu0 0
        %4092 = vmatpush.bf16.msra.mxu0 0
        %4093 = vmatpush.bf16.msra.mxu0 %v3997
        %4094 = vmatmul.bf16.gmra.mxu0 %v4084
        %v4095 = vpop.f32.mrf.mxu0
        %v4096 = vadd.f32 0.0, %v4095
        %v4097 = vpop.f32.mrf.mxu0
        %4098 = vdwg.mxu0
        %s4099 = scalar_lea.vmem [#allocation34], 48
        %v4100 = vld [vmem:[%s4099] sm:$0xf]
        %v4101 = vld [vmem:[%s4099 + $0x4] sm:$0xf]
        %v4102 = vld [vmem:[%s4099 + $0x8] sm:$0xf]
        %v4103 = vld [vmem:[%s4099 + $0xc] sm:$0xf]
        %v4104 = vld [vmem:[%s4099 + $0x10] sm:$0xf]
        %v4105 = vld [vmem:[%s4099 + $0x14] sm:$0xf]
        %v4106 = vld [vmem:[%s4099 + $0x18] sm:$0xf]
        %v4107 = vld [vmem:[%s4099 + $0x1c] sm:$0xf]
        %v4108 = vld [vmem:[%s4099 + $0x20] sm:$0xf]
        %v4109 = vld [vmem:[%s4099 + $0x24] sm:$0xf]
        %v4110 = vld [vmem:[%s4099 + $0x28] sm:$0xf]
        %v4111 = vld [vmem:[%s4099 + $0x2c] sm:$0xf]
        %v4112 = vpack.c.bf16 %v4096, %v4096
        %v4125 = vunpack.c.l.b16 %v4100
        %v4126 = vunpack.c.l.b16 %v4101
        %v4127 = vunpack.c.l.b16 %v4102
        %v4128 = vunpack.c.l.b16 %v4103
        %v4129 = vunpack.c.l.b16 %v4104
        %v4130 = vunpack.c.l.b16 %v4105
        %v4131 = vunpack.c.l.b16 %v4106
        %v4132 = vunpack.c.l.b16 %v4107
        %v4133 = vunpack.c.l.b16 %v4108
        %v4134 = vunpack.c.l.b16 %v4109
        %v4135 = vunpack.c.l.b16 %v4110
        %v4136 = vunpack.c.l.b16 %v4111
        %v4137 = vpack.c.b16 %v4126, %v4125
        %v4138 = vpack.c.b16 %v4128, %v4127
        %v4139 = vpack.c.b16 %v4130, %v4129
        %v4140 = vpack.c.b16 %v4132, %v4131
        %v4141 = vpack.c.b16 %v4134, %v4133
        %v4142 = vpack.c.b16 %v4136, %v4135
        %v4150 = vsel %vm1824, %v4112, 0
        %4152 = vmatpush.bf16.msra.mxu0 0
        %4153 = vmatpush.bf16.msra.mxu0 0
        %4154 = vmatpush.bf16.msra.mxu0 %v4142
        %4155 = vmatpush.bf16.msra.mxu0 %v4141
        %4156 = vmatpush.bf16.msra.mxu0 %v4140
        %4157 = vmatpush.bf16.msra.mxu0 %v4139
        %4158 = vmatpush.bf16.msra.mxu0 %v4138
        %4159 = vmatpush.bf16.msra.mxu0 %v4137
        %4160 = vmatmul.bf16.gmra.mxu0 %v4150
        %v4161 = vpop.f32.mrf.mxu0
        %v4162 = vadd.f32 0.0, %v4161
        %v4163 = vpop.f32.mrf.mxu0
        %4164 = vdwg.mxu0
        %v4165 = vadd.f32 %v4080, %v4162
        %s4166 = scalar_lea.vmem [#allocation33], 2
        %v4167 = vld [vmem:[%s4166] sm:$0x1]
        %v4169 = vsel %vm3991, %v4167, 0
        %4171 = vmatpush.bf16.msra.mxu0 0
        %4172 = vmatpush.bf16.msra.mxu0 0
        %4173 = vmatpush.bf16.msra.mxu0 0
        %4174 = vmatpush.bf16.msra.mxu0 0
        %4175 = vmatpush.bf16.msra.mxu0 0
        %4176 = vmatpush.bf16.msra.mxu0 0
        %4177 = vmatpush.bf16.msra.mxu0 0
        %4178 = vmatpush.bf16.msra.mxu0 %v3997
        %4179 = vmatmul.bf16.gmra.mxu0 %v4169
        %v4180 = vpop.f32.mrf.mxu0
        %v4181 = vadd.f32 0.0, %v4180
        %v4182 = vpop.f32.mrf.mxu0
        %4183 = vdwg.mxu0
        %s4184 = scalar_lea.vmem [#allocation34], 96
        %v4185 = vld [vmem:[%s4184] sm:$0xf]
        %v4186 = vld [vmem:[%s4184 + $0x4] sm:$0xf]
        %v4187 = vld [vmem:[%s4184 + $0x8] sm:$0xf]
        %v4188 = vld [vmem:[%s4184 + $0xc] sm:$0xf]
        %v4189 = vld [vmem:[%s4184 + $0x10] sm:$0xf]
        %v4190 = vld [vmem:[%s4184 + $0x14] sm:$0xf]
        %v4191 = vld [vmem:[%s4184 + $0x18] sm:$0xf]
        %v4192 = vld [vmem:[%s4184 + $0x1c] sm:$0xf]
        %v4193 = vld [vmem:[%s4184 + $0x20] sm:$0xf]
        %v4194 = vld [vmem:[%s4184 + $0x24] sm:$0xf]
        %v4195 = vld [vmem:[%s4184 + $0x28] sm:$0xf]
        %v4196 = vld [vmem:[%s4184 + $0x2c] sm:$0xf]
        %v4197 = vpack.c.bf16 %v4181, %v4181
        %v4210 = vunpack.c.l.b16 %v4185
        %v4211 = vunpack.c.l.b16 %v4186
        %v4212 = vunpack.c.l.b16 %v4187
        %v4213 = vunpack.c.l.b16 %v4188
        %v4214 = vunpack.c.l.b16 %v4189
        %v4215 = vunpack.c.l.b16 %v4190
        %v4216 = vunpack.c.l.b16 %v4191
        %v4217 = vunpack.c.l.b16 %v4192
        %v4218 = vunpack.c.l.b16 %v4193
        %v4219 = vunpack.c.l.b16 %v4194
        %v4220 = vunpack.c.l.b16 %v4195
        %v4221 = vunpack.c.l.b16 %v4196
        %v4222 = vpack.c.b16 %v4211, %v4210
        %v4223 = vpack.c.b16 %v4213, %v4212
        %v4224 = vpack.c.b16 %v4215, %v4214
        %v4225 = vpack.c.b16 %v4217, %v4216
        %v4226 = vpack.c.b16 %v4219, %v4218
        %v4227 = vpack.c.b16 %v4221, %v4220
        %v4235 = vsel %vm1824, %v4197, 0
        %4237 = vmatpush.bf16.msra.mxu0 0
        %4238 = vmatpush.bf16.msra.mxu0 0
        %4239 = vmatpush.bf16.msra.mxu0 %v4227
        %4240 = vmatpush.bf16.msra.mxu0 %v4226
        %4241 = vmatpush.bf16.msra.mxu0 %v4225
        %4242 = vmatpush.bf16.msra.mxu0 %v4224
        %4243 = vmatpush.bf16.msra.mxu0 %v4223
        %4244 = vmatpush.bf16.msra.mxu0 %v4222
        %4245 = vmatmul.bf16.gmra.mxu0 %v4235
        %v4246 = vpop.f32.mrf.mxu0
        %v4247 = vadd.f32 0.0, %v4246
        %v4248 = vpop.f32.mrf.mxu0
        %4249 = vdwg.mxu0
        %v4250 = vadd.f32 %v4165, %v4247
        %v4251 = vmax.f32 %v4250, 0.0
        %v4252 = vld [vmem:[#allocation37] sm:$0x1]
        %v4254 = vperm.slane %v4252, 0
        %v4256 = vmul.f32 %v4251, %v4254
        %v4257 = vld [vmem:[#allocation39] sm:$0x1]
        %v4259 = vperm.slane %v4257, 0
        %v4261 = vadd.f32 %v4256, %v4259
        %v4262 = vld [vmem:[#allocation40] sm:$0xf]
        %v4263 = vld [vmem:[#allocation40 + $0x4] sm:$0xf]
        %v4264 = vld [vmem:[#allocation40 + $0x8] sm:$0xf]
        %v4265 = vld [vmem:[#allocation40 + $0xc] sm:$0xf]
        %v4266 = vld [vmem:[#allocation40 + $0x10] sm:$0xf]
        %v4267 = vld [vmem:[#allocation40 + $0x14] sm:$0xf]
        %v4268 = vld [vmem:[#allocation40 + $0x18] sm:$0xf]
        %v4269 = vld [vmem:[#allocation40 + $0x1c] sm:$0xf]
        %v4270 = vpack.c.bf16 %v4261, %v4261
        %v4271 = vld [vmem:[%s75] sm:$0x1]
        %v4273 = vperm.slane %v4271, 0
        %v4283 = vunpack.c.l.b16 %v4262
        %v4284 = vunpack.c.l.b16 %v4263
        %v4285 = vunpack.c.l.b16 %v4264
        %v4286 = vunpack.c.l.b16 %v4265
        %v4287 = vunpack.c.l.b16 %v4266
        %v4288 = vunpack.c.l.b16 %v4267
        %v4289 = vunpack.c.l.b16 %v4268
        %v4290 = vunpack.c.l.b16 %v4269
        %v4291 = vpack.c.b16 %v4284, %v4283
        %v4292 = vpack.c.b16 %v4286, %v4285
        %v4293 = vpack.c.b16 %v4288, %v4287
        %v4294 = vpack.c.b16 %v4290, %v4289
        %v4300 = vsel %vm2937, %v4270, 0
        %4302 = vmatpush.bf16.msra.mxu0 0
        %4303 = vmatpush.bf16.msra.mxu0 0
        %4304 = vmatpush.bf16.msra.mxu0 0
        %4305 = vmatpush.bf16.msra.mxu0 0
        %4306 = vmatpush.bf16.msra.mxu0 %v4294
        %4307 = vmatpush.bf16.msra.mxu0 %v4293
        %4308 = vmatpush.bf16.msra.mxu0 %v4292
        %4309 = vmatpush.bf16.msra.mxu0 %v4291
        %4310 = vmatmul.bf16.gmra.mxu0 %v4300
        %v4311 = vpop.f32.mrf.mxu0
        %v4312 = vadd.f32 %v4273, %v4311
        %v4313 = vpop.f32.mrf.mxu0
        %4314 = vdwg.mxu0
        %v4315 = vmax.f32 %v4312, 0.0
        %v4316 = vld [vmem:[#allocation42] sm:$0xf]
        %v4317 = vld [vmem:[#allocation42 + $0x4] sm:$0xf]
        %v4318 = vld [vmem:[#allocation42 + $0x8] sm:$0xf]
        %v4319 = vld [vmem:[#allocation42 + $0xc] sm:$0xf]
        %v4320 = vld [vmem:[#allocation42 + $0x10] sm:$0xf]
        %v4321 = vld [vmem:[#allocation42 + $0x14] sm:$0xf]
        %v4322 = vld [vmem:[#allocation42 + $0x18] sm:$0xf]
        %v4323 = vld [vmem:[#allocation42 + $0x1c] sm:$0xf]
        %v4324 = vld [vmem:[#allocation42 + $0x20] sm:$0xf]
        %v4325 = vld [vmem:[#allocation42 + $0x24] sm:$0xf]
        %v4326 = vld [vmem:[#allocation42 + $0x28] sm:$0xf]
        %v4327 = vld [vmem:[#allocation42 + $0x2c] sm:$0xf]
        %v4328 = vld [vmem:[#allocation42 + $0x30] sm:$0xf]
        %v4329 = vld [vmem:[#allocation42 + $0x34] sm:$0xf]
        %v4330 = vld [vmem:[#allocation42 + $0x38] sm:$0xf]
        %v4331 = vld [vmem:[#allocation42 + $0x3c] sm:$0xf]
        %v4332 = vpack.c.bf16 %v4315, %v4315
        %v4333 = vld [vmem:[%s79] sm:$0x1]
        %v4335 = vperm.slane %v4333, 0
        %v4353 = vunpack.c.l.b16 %v4316
        %v4354 = vunpack.c.l.b16 %v4317
        %v4355 = vunpack.c.l.b16 %v4318
        %v4356 = vunpack.c.l.b16 %v4319
        %v4357 = vunpack.c.l.b16 %v4320
        %v4358 = vunpack.c.l.b16 %v4321
        %v4359 = vunpack.c.l.b16 %v4322
        %v4360 = vunpack.c.l.b16 %v4323
        %v4361 = vunpack.c.l.b16 %v4324
        %v4362 = vunpack.c.l.b16 %v4325
        %v4363 = vunpack.c.l.b16 %v4326
        %v4364 = vunpack.c.l.b16 %v4327
        %v4365 = vunpack.c.l.b16 %v4328
        %v4366 = vunpack.c.l.b16 %v4329
        %v4367 = vunpack.c.l.b16 %v4330
        %v4368 = vunpack.c.l.b16 %v4331
        %v4369 = vpack.c.b16 %v4354, %v4353
        %v4370 = vpack.c.b16 %v4356, %v4355
        %v4371 = vpack.c.b16 %v4358, %v4357
        %v4372 = vpack.c.b16 %v4360, %v4359
        %v4373 = vpack.c.b16 %v4362, %v4361
        %v4374 = vpack.c.b16 %v4364, %v4363
        %v4375 = vpack.c.b16 %v4366, %v4365
        %v4376 = vpack.c.b16 %v4368, %v4367
        %4385 = vmatpush.bf16.msra.mxu0 %v4376
        %4386 = vmatpush.bf16.msra.mxu0 %v4375
        %4387 = vmatpush.bf16.msra.mxu0 %v4374
        %4388 = vmatpush.bf16.msra.mxu0 %v4373
        %4389 = vmatpush.bf16.msra.mxu0 %v4372
        %4390 = vmatpush.bf16.msra.mxu0 %v4371
        %4391 = vmatpush.bf16.msra.mxu0 %v4370
        %4392 = vmatpush.bf16.msra.mxu0 %v4369
        %4393 = vmatmul.bf16.gmra.mxu0 %v4332
        %v4394 = vpop.f32.mrf.mxu0
        %v4395 = vadd.f32 %v4335, %v4394
        %v4396 = vpop.f32.mrf.mxu0
        %4397 = vdwg.mxu0
        %v4398 = vadd.f32 %v4395, %v4251
        %v4399 = vld [vmem:[#allocation43] sm:$0xf]
        %v4400 = vld [vmem:[#allocation43 + $0x4] sm:$0xf]
        %v4401 = vld [vmem:[#allocation43 + $0x8] sm:$0xf]
        %v4402 = vld [vmem:[#allocation43 + $0xc] sm:$0xf]
        %v4403 = vld [vmem:[#allocation43 + $0x10] sm:$0xf]
        %v4404 = vld [vmem:[#allocation43 + $0x14] sm:$0xf]
        %v4405 = vld [vmem:[#allocation43 + $0x18] sm:$0xf]
        %v4406 = vld [vmem:[#allocation43 + $0x1c] sm:$0xf]
        %v4407 = vpack.c.bf16 %v4398, %v4398
        %v4416 = vunpack.c.l.b16 %v4399
        %v4417 = vunpack.c.l.b16 %v4400
        %v4418 = vunpack.c.l.b16 %v4401
        %v4419 = vunpack.c.l.b16 %v4402
        %v4420 = vunpack.c.l.b16 %v4403
        %v4421 = vunpack.c.l.b16 %v4404
        %v4422 = vunpack.c.l.b16 %v4405
        %v4423 = vunpack.c.l.b16 %v4406
        %v4424 = vpack.c.b16 %v4417, %v4416
        %v4425 = vpack.c.b16 %v4419, %v4418
        %v4426 = vpack.c.b16 %v4421, %v4420
        %v4427 = vpack.c.b16 %v4423, %v4422
        %v4433 = vsel %vm2937, %v4407, 0
        %4435 = vmatpush.bf16.msra.mxu0 0
        %4436 = vmatpush.bf16.msra.mxu0 0
        %4437 = vmatpush.bf16.msra.mxu0 0
        %4438 = vmatpush.bf16.msra.mxu0 0
        %4439 = vmatpush.bf16.msra.mxu0 %v4427
        %4440 = vmatpush.bf16.msra.mxu0 %v4426
        %4441 = vmatpush.bf16.msra.mxu0 %v4425
        %4442 = vmatpush.bf16.msra.mxu0 %v4424
        %4443 = vmatmul.bf16.gmra.mxu0 %v4433
        %v4444 = vpop.f32.mrf.mxu0
        %v4445 = vadd.f32 0.0, %v4444
        %v4446 = vpop.f32.mrf.mxu0
        %4447 = vdwg.mxu0
        %v4449 = vrot.slane %v4445, 1
        %v4451 = vadd.f32 %v4445, %v4449
        %v4452 = vld [vmem:[#allocation45] sm:$0x1]
        %v4453 = vadd.f32 %v4451, %v4452
        %v4454 = vperm.slane %v4453, 0
        %v4455 = vadd.f32 %v4454, 0.0
        %4456 = vst [vmem:[%s1717] sm:$0xff] %v4455
        %p4457 = scmp.lt.s32.totalorder %s111, 1
        %s4458 = scalar_select %p4457, %s111, 1
        %s4459 = smul.addr %s4458, 8
        %s4460 = scalar_lea.vmem %s85, %s4459
        // Predicated region
        $region305: #{fused_model_forward.1} parent=187 // pred_check
          %p4461 = pneg %p1016
        $region306: #{fused_model_forward.1} parent=187 // pred_check_branch
          %4463 = sbr.rel (%p4461) target = $region308
        $region307: #{fused_model_forward.1} parent=187 // pred_region
          _
        $region308: #{fused_model_forward.1} parent=187 // pred_fallthru
          _
      $region188: #{fused_model_forward.1} parent=5 // pred_fallthru
        _
      %p4464 = scmp.le.s32.totalorder 2, %s106
      // Predicated region
      $region309: #{fused_model_forward.1} parent=5 // pred_check
        %p4465 = pneg %p4464
      $region310: #{fused_model_forward.1} parent=5 // pred_check_branch
        %4467 = sbr.rel (%p4465) target = $region312
      $region311: #{fused_model_forward.1} parent=5 // pred_region
        %s4468 = ssub.s32 %s106, 2
        // Predicated region
        $region313: #{fused_model_forward.1} parent=311 // pred_check
          %p4469 = pneg %p1022
        $region314: #{fused_model_forward.1} parent=311 // pred_check_branch
          %4471 = sbr.rel (%p4469) target = $region316
        $region315: #{fused_model_forward.1} parent=311 // pred_region
          %p4472 = scmp.lt.s32.totalorder %s112, 1
          %s4473 = scalar_select %p4472, %s112, 1
          %s4474 = smul.addr %s4473, 8
          %s4475 = scalar_lea.vmem %s85, %s4474
        $region316: #{fused_model_forward.1} parent=311 // pred_fallthru
          _
      $region312: #{fused_model_forward.1} parent=5 // pred_fallthru
        _
    $region6: #{fused_model_forward.1} parent=1 // loop_footer
      %s110 = sadd.s32 1, %s106
    $region7: #{fused_model_forward.1} parent=1 // loop_footer_branch
      %105 = sbr.rel target = $region3
    $region8: #{fused_model_forward.1} parent=1 // loop_exit
      _
    %4476 = vsyncpa [#allocation3], 1
    %s4477 = scalar_lea.sflag [#allocation3], 1
    %4478 = vsyncpa %s4477, 1
    %4479 = vsyncpa [#allocation5], 1
    %4480 = vsyncpa [#allocation8], 1
    %4481 = vsyncpa [#allocation11], 1
    %4482 = vsyncpa [#allocation14], 1
    %4483 = vsyncpa [#allocation17], 1
    %4484 = vsyncpa [#allocation20], 1
    %4485 = vsyncpa [#allocation23], 1
    %4486 = vsyncpa [#allocation26], 1
    %4487 = vsyncpa [#allocation29], 1
    %4488 = vsyncpa [#allocation32], 1
    %4489 = vsyncpa [#allocation35], 1
    %4490 = vsyncpa [#allocation38], 1
    %4491 = vsyncpa [#allocation41], 1
    %4492 = vsyncpa [#allocation44], 1

</llo_original>
